<compile_context>
chip_gen: v7x
topology: tpu7x:2x2x1
jax: 0.10.0
libtpu: 0.0.40
codegen_flags: <defaults>
</compile_context>

<pallas_src>
import functools

import jax
import jax.numpy as jnp
from jax import lax
from jax.experimental import pallas as pl
from jax.experimental.pallas import tpu as pltpu


def _residual_block_kernel(x_ref, w1_ref, b1_ref, w2_ref, b2_ref, o_ref,
                           *, H, W, Cp):
    """One batch element per grid step.

    x_ref  : (1, H, W, Cp)  NHWC f32 input tile (channels zero-padded to Cp=128k)
    w1_ref : (9*Cp, Cp)     conv1 weights, flat im2col slab, bf16
    b1_ref : (1, Cp)        conv1 bias, f32
    w2_ref : (9*Cp, Cp)     conv2 weights, flat im2col slab, bf16
    b2_ref : (1, Cp)        conv2 bias, f32
    o_ref  : (1, H, W, Cp)  f32 output tile (lane dense)
    """
    x = x_ref[0]  # (H, W, Cp) f32

    def conv3x3(inp, w_ref):
        # SAME 3x3 conv as three bf16 MXU matmuls with f32 accumulation.
        # Horizontal (kw) taps: zero-column concat on the sublane axis — pure
        # value construction, no scratch stores / border zeroing.
        zcol = jnp.zeros((H, 1, Cp), jnp.float32)
        left = jnp.concatenate([zcol, inp[:, :W - 1, :]], axis=1)   # x[:, w-1]
        right = jnp.concatenate([inp[:, 1:, :], zcol], axis=1)      # x[:, w+1]
        patch = jnp.concatenate(
            [left.astype(jnp.bfloat16),
             inp.astype(jnp.bfloat16),
             right.astype(jnp.bfloat16)],
            axis=-1)                                                # (H, W, 3*Cp)

        w_top = w_ref[0 * Cp:3 * Cp, :]   # kh = 0 taps
        w_mid = w_ref[3 * Cp:6 * Cp, :]   # kh = 1 taps
        w_bot = w_ref[6 * Cp:9 * Cp, :]   # kh = 2 taps

        mid = jnp.einsum("hwk,kd->hwd", patch, w_mid,
                         preferred_element_type=jnp.float32)        # (H, W, Cp)
        # Vertical (kh) shifts: slice patch rows on the aligned H axis and
        # re-align the partial sums with one zero row each.
        top = jnp.einsum("hwk,kd->hwd", patch[:H - 1], w_top,
                         preferred_element_type=jnp.float32)        # rows 1..H-1
        bot = jnp.einsum("hwk,kd->hwd", patch[1:], w_bot,
                         preferred_element_type=jnp.float32)        # rows 0..H-2

        zrow = jnp.zeros((1, W, Cp), jnp.float32)
        return (mid
                + jnp.concatenate([zrow, top], axis=0)
                + jnp.concatenate([bot, zrow], axis=0))

    y = jnp.maximum(conv3x3(x, w1_ref) + b1_ref[0], 0.0)   # conv1 + bias + ReLU
    z = conv3x3(y, w2_ref) + b2_ref[0]                      # conv2 + bias
    o_ref[0] = (z + x).astype(o_ref.dtype)                  # + Identity shortcut


def _pick_vmem_limit_bytes():
    """~3/4 of physical VMEM: ~96 MiB on v5e/v6e (128 MiB), ~48 MiB on v7x (64 MiB)."""
    cap = 128 * 1024 * 1024
    try:
        info = pltpu.get_tpu_info()
        cap = int(getattr(info, "vmem_capacity_bytes", cap))
    except Exception:
        pass
    return max(32 * 1024 * 1024, min((cap * 3) // 4, 100 * 1024 * 1024))


def prepare_residual_block_params(w1, b1, w2, b2, Cp):
    """HWIO (3,3,C,C) weights -> bf16 flat im2col slabs (9*Cp, Cp); f32 bias rows."""
    C = w1.shape[2]

    def weight_slab(w):
        wp = jnp.zeros((3, 3, Cp, Cp), jnp.float32).at[:, :, :C, :C].set(w)
        return wp.reshape(9 * Cp, Cp).astype(jnp.bfloat16)

    def bias_row(b):
        return jnp.zeros((1, Cp), jnp.float32).at[0, :C].set(b)

    return weight_slab(w1), bias_row(b1), weight_slab(w2), bias_row(b2)


def residual_block_forward_nhwc(x_nhwc, w1s, b1r, w2s, b2r):
    """Fused ResidualBlock on lane-padded NHWC activations (preferred for chaining)."""
    N, H, W, Cp = x_nhwc.shape
    kernel = functools.partial(_residual_block_kernel, H=H, W=W, Cp=Cp)

    return pl.pallas_call(
        kernel,
        out_shape=jax.ShapeDtypeStruct((N, H, W, Cp), jnp.float32),
        grid_spec=pltpu.PrefetchScalarGridSpec(
            num_scalar_prefetch=0,
            grid=(N,),
            in_specs=[
                pl.BlockSpec((1, H, W, Cp), lambda n: (n, 0, 0, 0)),
                pl.BlockSpec((9 * Cp, Cp), lambda n: (0, 0)),
                pl.BlockSpec((1, Cp), lambda n: (0, 0)),
                pl.BlockSpec((9 * Cp, Cp), lambda n: (0, 0)),
                pl.BlockSpec((1, Cp), lambda n: (0, 0)),
            ],
            out_specs=pl.BlockSpec((1, H, W, Cp), lambda n: (n, 0, 0, 0)),
        ),
        compiler_params=pltpu.CompilerParams(
            dimension_semantics=("parallel",),          # v7x: shard batch over 2 TCs
            vmem_limit_bytes=_pick_vmem_limit_bytes(),  # per-generation headroom
        ),
    )(x_nhwc, w1s, b1r, w2s, b2r)


def residual_block_forward(x_nchw, w1, b1, w2, b2):
    """PyTorch-layout convenience wrapper.

    x_nchw : (N, C, H, W) float32; returns (N, C, H, W).
    w1, w2 : (3, 3, C, C) HWIO conv weights;  b1, b2 : (C,) biases.
    """
    N, C, H, W = x_nchw.shape
    Cp = ((C + 127) // 128) * 128

    x = jnp.transpose(x_nchw, (0, 2, 3, 1)).astype(jnp.float32)   # NCHW -> NHWC
    if Cp != C:
        x = jnp.pad(x, ((0, 0), (0, 0), (0, 0), (0, Cp - C)))

    w1s, b1r, w2s, b2r = prepare_residual_block_params(w1, b1, w2, b2, Cp)
    out_nhwc = residual_block_forward_nhwc(x, w1s, b1r, w2s, b2r)

    out_nhwc = out_nhwc[..., :C]                      # drop lane padding
    return jnp.transpose(out_nhwc, (0, 3, 1, 2))      # NHWC -> NCHW


def residual_block_reference(x_nchw, w1, b1, w2, b2):
    """Pure-JAX reference (lax.conv) for correctness checking."""
    x = jnp.transpose(x_nchw, (0, 2, 3, 1))
    dn = ("NHWC", "HWIO", "NHWC")
    y = lax.conv_general_dilated(x, w1, (1, 1), "SAME",
                                 dimension_numbers=dn) + b1
    y = jnp.maximum(y, 0.0)
    z = lax.conv_general_dilated(y, w2, (1, 1), "SAME",
                                 dimension_numbers=dn) + b2
    return jnp.transpose(z + x, (0, 3, 1, 2))


if __name__ == "__main__":
    N, C, H, W = 2, 4, 16, 16

    key = jax.random.PRNGKey(0)
    kx, kw1, kb1, kw2, kb2 = jax.random.split(key, 5)

    x = jax.random.normal(kx, (N, C, H, W), dtype=jnp.float32)
    # Deterministic synthetic parameters (HWIO conv weights, per-channel bias).
    w1 = 0.1 * jax.random.normal(kw1, (3, 3, C, C), dtype=jnp.float32)
    b1 = 0.1 * jax.random.normal(kb1, (C,), dtype=jnp.float32)
    w2 = 0.1 * jax.random.normal(kw2, (3, 3, C, C), dtype=jnp.float32)
    b2 = 0.1 * jax.random.normal(kb2, (C,), dtype=jnp.float32)

    out = jax.block_until_ready(residual_block_forward(x, w1, b1, w2, b2))
    ref = jax.block_until_ready(residual_block_reference(x, w1, b1, w2, b2))

    assert out.shape == (N, C, H, W)
    # MXU operands are bf16 (accumulation stays f32), so the tolerance is
    # loosened vs. the pure-f32 reference.
    assert jnp.allclose(out, ref, atol=5e-2, rtol=5e-2), (
        f"max abs err {jnp.max(jnp.abs(out - ref))}")

    print("KERNEL_OK")
</pallas_src>

<mosaic_0001>
module attributes {stable_mosaic.version = 11 : i64} {
  func.func @_residual_block_kernel(%arg0: i32, %arg1: memref<1x16x16x128xf32, #tpu.memory_space<vmem>>, %arg2: memref<1152x128xbf16, #tpu.memory_space<vmem>>, %arg3: memref<1x128xf32, #tpu.memory_space<vmem>>, %arg4: memref<1152x128xbf16, #tpu.memory_space<vmem>>, %arg5: memref<1x128xf32, #tpu.memory_space<vmem>>, %arg6: memref<1x16x16x128xf32, #tpu.memory_space<vmem>>) attributes {dimension_semantics = [#tpu.dimension_semantics<parallel>], iteration_bounds = array<i64: 2>, scalar_prefetch = 0 : i64, scratch_operands = 0 : i64, tpu.core_type = #tpu.core_type<tc>, window_params = [{transform_indices = @transform_0, window_bounds = array<i64: 1, 16, 16, 128>}, {pipeline_mode = #tpu.pipeline_mode<synchronous>, transform_indices = @transform_1, window_bounds = array<i64: 1152, 128>}, {pipeline_mode = #tpu.pipeline_mode<synchronous>, transform_indices = @transform_2, window_bounds = array<i64: 1, 128>}, {pipeline_mode = #tpu.pipeline_mode<synchronous>, transform_indices = @transform_3, window_bounds = array<i64: 1152, 128>}, {pipeline_mode = #tpu.pipeline_mode<synchronous>, transform_indices = @transform_4, window_bounds = array<i64: 1, 128>}, {transform_indices = @transform_5, window_bounds = array<i64: 1, 16, 16, 128>}]} {
    %c0 = arith.constant 0 : index
    %c0_0 = arith.constant 0 : index
    %c0_1 = arith.constant 0 : index
    %c0_2 = arith.constant 0 : index
    %0 = vector.load %arg1[%c0, %c0_0, %c0_1, %c0_2] : memref<1x16x16x128xf32, #tpu.memory_space<vmem>>, vector<1x16x16x128xf32>
    %1 = vector.shape_cast %0 : vector<1x16x16x128xf32> to vector<16x16x128xf32>
    %cst = arith.constant 0.000000e+00 : f32
    %2 = vector.broadcast %cst : f32 to vector<16x1x128xf32>
    %3 = vector.extract_strided_slice %1 {offsets = [0, 0, 0], sizes = [16, 15, 128], strides = [1, 1, 1]} : vector<16x16x128xf32> to vector<16x15x128xf32>
    %4 = tpu.concatenate %2, %3 in 1 : vector<16x1x128xf32>, vector<16x15x128xf32> -> vector<16x16x128xf32>
    %5 = vector.extract_strided_slice %1 {offsets = [0, 1, 0], sizes = [16, 15, 128], strides = [1, 1, 1]} : vector<16x16x128xf32> to vector<16x15x128xf32>
    %6 = tpu.concatenate %5, %2 in 1 : vector<16x15x128xf32>, vector<16x1x128xf32> -> vector<16x16x128xf32>
    %7 = arith.truncf %4 : vector<16x16x128xf32> to vector<16x16x128xbf16>
    %8 = arith.truncf %1 : vector<16x16x128xf32> to vector<16x16x128xbf16>
    %9 = arith.truncf %6 : vector<16x16x128xf32> to vector<16x16x128xbf16>
    %10 = tpu.concatenate %7, %8, %9 in 2 : vector<16x16x128xbf16>, vector<16x16x128xbf16>, vector<16x16x128xbf16> -> vector<16x16x384xbf16>
    %c0_3 = arith.constant 0 : index
    %c0_4 = arith.constant 0 : index
    %11 = vector.load %arg2[%c0_3, %c0_4] : memref<1152x128xbf16, #tpu.memory_space<vmem>>, vector<384x128xbf16>
    %c384 = arith.constant 384 : index
    %c0_5 = arith.constant 0 : index
    %12 = vector.load %arg2[%c384, %c0_5] : memref<1152x128xbf16, #tpu.memory_space<vmem>>, vector<384x128xbf16>
    %c768 = arith.constant 768 : index
    %c0_6 = arith.constant 0 : index
    %13 = vector.load %arg2[%c768, %c0_6] : memref<1152x128xbf16, #tpu.memory_space<vmem>>, vector<384x128xbf16>
    "tpu.trace_start"() <{level = 10 : i32, message = "hwk,kd->hwd"}> : () -> ()
    %cst_7 = arith.constant dense<0.000000e+00> : vector<16x16x128xf32>
    %14 = tpu.matmul %10, %12, %cst_7 {dimension_numbers = #tpu.dot_dimension_numbers<[2], [0], [0, 1], [1], [0, 0, 0, 1, 1, 1], [], []>} : vector<16x16x384xbf16>, vector<384x128xbf16>, vector<16x16x128xf32> -> vector<16x16x128xf32>
    "tpu.trace_stop"() : () -> ()
    %15 = vector.extract_strided_slice %10 {offsets = [0, 0, 0], sizes = [15, 16, 384], strides = [1, 1, 1]} : vector<16x16x384xbf16> to vector<15x16x384xbf16>
    "tpu.trace_start"() <{level = 10 : i32, message = "hwk,kd->hwd"}> : () -> ()
    %cst_8 = arith.constant dense<0.000000e+00> : vector<15x16x128xf32>
    %16 = tpu.matmul %15, %11, %cst_8 {dimension_numbers = #tpu.dot_dimension_numbers<[2], [0], [0, 1], [1], [0, 0, 0, 1, 1, 1], [], []>} : vector<15x16x384xbf16>, vector<384x128xbf16>, vector<15x16x128xf32> -> vector<15x16x128xf32>
    "tpu.trace_stop"() : () -> ()
    %17 = vector.extract_strided_slice %10 {offsets = [1, 0, 0], sizes = [15, 16, 384], strides = [1, 1, 1]} : vector<16x16x384xbf16> to vector<15x16x384xbf16>
    "tpu.trace_start"() <{level = 10 : i32, message = "hwk,kd->hwd"}> : () -> ()
    %cst_9 = arith.constant dense<0.000000e+00> : vector<15x16x128xf32>
    %18 = tpu.matmul %17, %13, %cst_9 {dimension_numbers = #tpu.dot_dimension_numbers<[2], [0], [0, 1], [1], [0, 0, 0, 1, 1, 1], [], []>} : vector<15x16x384xbf16>, vector<384x128xbf16>, vector<15x16x128xf32> -> vector<15x16x128xf32>
    %cst_10 = arith.constant 0.000000e+00 : f32
    "tpu.trace_stop"() : () -> ()
    %19 = vector.broadcast %cst_10 : f32 to vector<1x16x128xf32>
    %20 = tpu.concatenate %19, %16 in 0 : vector<1x16x128xf32>, vector<15x16x128xf32> -> vector<16x16x128xf32>
    %21 = arith.addf %14, %20 : vector<16x16x128xf32>
    %22 = tpu.concatenate %18, %19 in 0 : vector<15x16x128xf32>, vector<1x16x128xf32> -> vector<16x16x128xf32>
    %23 = arith.addf %21, %22 : vector<16x16x128xf32>
    %c0_11 = arith.constant 0 : index
    %c0_12 = arith.constant 0 : index
    %24 = vector.load %arg3[%c0_11, %c0_12] : memref<1x128xf32, #tpu.memory_space<vmem>>, vector<1x128xf32>
    %25 = vector.shape_cast %24 : vector<1x128xf32> to vector<128xf32>
    %26 = vector.shape_cast %25 : vector<128xf32> to vector<1x1x128xf32>
    %27 = vector.broadcast %26 : vector<1x1x128xf32> to vector<16x16x128xf32>
    %28 = arith.addf %23, %27 : vector<16x16x128xf32>
    %cst_13 = arith.constant 0.000000e+00 : f32
    %29 = vector.broadcast %cst_13 : f32 to vector<16x16x128xf32>
    %30 = arith.maximumf %28, %29 : vector<16x16x128xf32>
    %cst_14 = arith.constant 0.000000e+00 : f32
    %31 = vector.broadcast %cst_14 : f32 to vector<16x1x128xf32>
    %32 = vector.extract_strided_slice %30 {offsets = [0, 0, 0], sizes = [16, 15, 128], strides = [1, 1, 1]} : vector<16x16x128xf32> to vector<16x15x128xf32>
    %33 = tpu.concatenate %31, %32 in 1 : vector<16x1x128xf32>, vector<16x15x128xf32> -> vector<16x16x128xf32>
    %34 = vector.extract_strided_slice %30 {offsets = [0, 1, 0], sizes = [16, 15, 128], strides = [1, 1, 1]} : vector<16x16x128xf32> to vector<16x15x128xf32>
    %35 = tpu.concatenate %34, %31 in 1 : vector<16x15x128xf32>, vector<16x1x128xf32> -> vector<16x16x128xf32>
    %36 = arith.truncf %33 : vector<16x16x128xf32> to vector<16x16x128xbf16>
    %37 = arith.truncf %30 : vector<16x16x128xf32> to vector<16x16x128xbf16>
    %38 = arith.truncf %35 : vector<16x16x128xf32> to vector<16x16x128xbf16>
    %39 = tpu.concatenate %36, %37, %38 in 2 : vector<16x16x128xbf16>, vector<16x16x128xbf16>, vector<16x16x128xbf16> -> vector<16x16x384xbf16>
    %c0_15 = arith.constant 0 : index
    %c0_16 = arith.constant 0 : index
    %40 = vector.load %arg4[%c0_15, %c0_16] : memref<1152x128xbf16, #tpu.memory_space<vmem>>, vector<384x128xbf16>
    %c384_17 = arith.constant 384 : index
    %c0_18 = arith.constant 0 : index
    %41 = vector.load %arg4[%c384_17, %c0_18] : memref<1152x128xbf16, #tpu.memory_space<vmem>>, vector<384x128xbf16>
    %c768_19 = arith.constant 768 : index
    %c0_20 = arith.constant 0 : index
    %42 = vector.load %arg4[%c768_19, %c0_20] : memref<1152x128xbf16, #tpu.memory_space<vmem>>, vector<384x128xbf16>
    "tpu.trace_start"() <{level = 10 : i32, message = "hwk,kd->hwd"}> : () -> ()
    %cst_21 = arith.constant dense<0.000000e+00> : vector<16x16x128xf32>
    %43 = tpu.matmul %39, %41, %cst_21 {dimension_numbers = #tpu.dot_dimension_numbers<[2], [0], [0, 1], [1], [0, 0, 0, 1, 1, 1], [], []>} : vector<16x16x384xbf16>, vector<384x128xbf16>, vector<16x16x128xf32> -> vector<16x16x128xf32>
    "tpu.trace_stop"() : () -> ()
    %44 = vector.extract_strided_slice %39 {offsets = [0, 0, 0], sizes = [15, 16, 384], strides = [1, 1, 1]} : vector<16x16x384xbf16> to vector<15x16x384xbf16>
    "tpu.trace_start"() <{level = 10 : i32, message = "hwk,kd->hwd"}> : () -> ()
    %cst_22 = arith.constant dense<0.000000e+00> : vector<15x16x128xf32>
    %45 = tpu.matmul %44, %40, %cst_22 {dimension_numbers = #tpu.dot_dimension_numbers<[2], [0], [0, 1], [1], [0, 0, 0, 1, 1, 1], [], []>} : vector<15x16x384xbf16>, vector<384x128xbf16>, vector<15x16x128xf32> -> vector<15x16x128xf32>
    "tpu.trace_stop"() : () -> ()
    %46 = vector.extract_strided_slice %39 {offsets = [1, 0, 0], sizes = [15, 16, 384], strides = [1, 1, 1]} : vector<16x16x384xbf16> to vector<15x16x384xbf16>
    "tpu.trace_start"() <{level = 10 : i32, message = "hwk,kd->hwd"}> : () -> ()
    %cst_23 = arith.constant dense<0.000000e+00> : vector<15x16x128xf32>
    %47 = tpu.matmul %46, %42, %cst_23 {dimension_numbers = #tpu.dot_dimension_numbers<[2], [0], [0, 1], [1], [0, 0, 0, 1, 1, 1], [], []>} : vector<15x16x384xbf16>, vector<384x128xbf16>, vector<15x16x128xf32> -> vector<15x16x128xf32>
    %cst_24 = arith.constant 0.000000e+00 : f32
    "tpu.trace_stop"() : () -> ()
    %48 = vector.broadcast %cst_24 : f32 to vector<1x16x128xf32>
    %49 = tpu.concatenate %48, %45 in 0 : vector<1x16x128xf32>, vector<15x16x128xf32> -> vector<16x16x128xf32>
    %50 = arith.addf %43, %49 : vector<16x16x128xf32>
    %51 = tpu.concatenate %47, %48 in 0 : vector<15x16x128xf32>, vector<1x16x128xf32> -> vector<16x16x128xf32>
    %52 = arith.addf %50, %51 : vector<16x16x128xf32>
    %c0_25 = arith.constant 0 : index
    %c0_26 = arith.constant 0 : index
    %53 = vector.load %arg5[%c0_25, %c0_26] : memref<1x128xf32, #tpu.memory_space<vmem>>, vector<1x128xf32>
    %54 = vector.shape_cast %53 : vector<1x128xf32> to vector<128xf32>
    %55 = vector.shape_cast %54 : vector<128xf32> to vector<1x1x128xf32>
    %56 = vector.broadcast %55 : vector<1x1x128xf32> to vector<16x16x128xf32>
    %57 = arith.addf %52, %56 : vector<16x16x128xf32>
    %58 = arith.addf %57, %1 : vector<16x16x128xf32>
    %c0_27 = arith.constant 0 : index
    %c0_28 = arith.constant 0 : index
    %c0_29 = arith.constant 0 : index
    %c0_30 = arith.constant 0 : index
    %59 = vector.load %arg6[%c0_27, %c0_28, %c0_29, %c0_30] : memref<1x16x16x128xf32, #tpu.memory_space<vmem>>, vector<1x16x16x128xf32>
    %60 = vector.shape_cast %59 : vector<1x16x16x128xf32> to vector<16x16x128xf32>
    %61 = vector.shape_cast %58 : vector<16x16x128xf32> to vector<1x16x16x128xf32>
    tpu.vector_store %arg6[%c0_27, %c0_28, %c0_29, %c0_30], %61 {strides = array<i32>} : memref<1x16x16x128xf32, #tpu.memory_space<vmem>>, vector<1x16x16x128xf32>,
    return
  }
  func.func @transform_0(%arg0: i32) -> (i32, i32, i32, i32) {
    %c0_i32 = arith.constant 0 : i32
    %c0_i32_0 = arith.constant 0 : i32
    %c0_i32_1 = arith.constant 0 : i32
    %c0_i32_2 = arith.constant 0 : i32
    return %arg0, %c0_i32, %c0_i32_0, %c0_i32_1 : i32, i32, i32, i32
  }
  func.func @transform_1(%arg0: i32) -> (i32, i32) {
    %c0_i32 = arith.constant 0 : i32
    %c0_i32_0 = arith.constant 0 : i32
    %c0_i32_1 = arith.constant 0 : i32
    return %c0_i32, %c0_i32_0 : i32, i32
  }
  func.func @transform_2(%arg0: i32) -> (i32, i32) {
    %c0_i32 = arith.constant 0 : i32
    %c0_i32_0 = arith.constant 0 : i32
    %c0_i32_1 = arith.constant 0 : i32
    return %c0_i32, %c0_i32_0 : i32, i32
  }
  func.func @transform_3(%arg0: i32) -> (i32, i32) {
    %c0_i32 = arith.constant 0 : i32
    %c0_i32_0 = arith.constant 0 : i32
    %c0_i32_1 = arith.constant 0 : i32
    return %c0_i32, %c0_i32_0 : i32, i32
  }
  func.func @transform_4(%arg0: i32) -> (i32, i32) {
    %c0_i32 = arith.constant 0 : i32
    %c0_i32_0 = arith.constant 0 : i32
    %c0_i32_1 = arith.constant 0 : i32
    return %c0_i32, %c0_i32_0 : i32, i32
  }
  func.func @transform_5(%arg0: i32) -> (i32, i32, i32, i32) {
    %c0_i32 = arith.constant 0 : i32
    %c0_i32_0 = arith.constant 0 : i32
    %c0_i32_1 = arith.constant 0 : i32
    %c0_i32_2 = arith.constant 0 : i32
    return %arg0, %c0_i32, %c0_i32_0, %c0_i32_1 : i32, i32, i32, i32
  }
}

</mosaic_0001>

<llo_original>
// kernel: tpu_custom_call.1
$region0: #{tpu_custom_call.1}
  #allocation0 [shape = 'u32[]', space=smem, size = 0x4, offset = 0x4, fixed_abs, tag = 'smem constant byte address 0x4 - core index']
  #allocation1 [shape = 'u32[144,128]{1,0:T(1,128)}', space=vmem, size = 0x12000, scoped, tag = 'internal scratch']
  %s0 = inlined_call_operand.hbm [shape: f32[2,16,16,128], index: 0, kind: input, shape index: {}]
  %s1 = inlined_call_operand.hbm [shape: bf16[1152,128], index: 1, kind: input, shape index: {}]
  %s2 = inlined_call_operand.hbm [shape: f32[1,128], index: 2, kind: input, shape index: {}]
  %s3 = inlined_call_operand.hbm [shape: bf16[1152,128], index: 3, kind: input, shape index: {}]
  %s4 = inlined_call_operand.hbm [shape: f32[1,128], index: 4, kind: input, shape index: {}]
  %s5 = inlined_call_operand.hbm [shape: f32[2,16,16,128], index: 5, kind: output, shape index: {}]
  %s6 = sld [smem:[#allocation0]]
  $region73: #{tpu_custom_call.1} parent=0
    _
  %s8 = ssub.s32 1, %s6
  %s9 = scalar_select 0, %s8, %s6
  $region1: #{tpu_custom_call.1} parent=0
    #allocation2 [shape = 'u8[262144]{0}', space=vmem, size = 0x40000, scoped, tag = 'input window, operand 0']
    #allocation3 [shape = 's32[2]{0}', space=sflag, size = 0x8, scoped, tag = 'scoped memory for tpu_custom_call.1']
    #allocation4 [shape = 's32[2]{0}', space=sflag, size = 0x8, scoped, tag = 'scoped memory for tpu_custom_call.1']
    #allocation5 [shape = 'u8[294912]{0}', space=vmem, size = 0x48000, scoped, tag = 'input window, operand 1, single buffered']
    #allocation6 [shape = 's32[1]{0}', space=sflag, size = 0x4, scoped, tag = 'scoped memory for tpu_custom_call.1']
    #allocation7 [shape = 'u8[512]{0}', space=vmem, size = 0x400, scoped, tag = 'input window, operand 2, single buffered']
    #allocation8 [shape = 'u8[294912]{0}', space=vmem, size = 0x48000, scoped, tag = 'input window, operand 3, single buffered']
    #allocation9 [shape = 's32[1]{0}', space=sflag, size = 0x4, scoped, tag = 'scoped memory for tpu_custom_call.1']
    #allocation10 [shape = 'u8[512]{0}', space=vmem, size = 0x400, scoped, tag = 'input window, operand 4, single buffered']
    #allocation11 [shape = 'u8[262144]{0}', space=vmem, size = 0x40000, scoped, tag = 'output window, operand 0']
    %10 = vsyncpa [#allocation3], 0
    %s11 = scalar_lea.sflag [#allocation3], 1
    %12 = vsyncpa %s11, 0
    %13 = vsyncpa [#allocation6], 0
    %14 = vsyncpa [#allocation9], 0
    %15 = vsyncpa [#allocation4], 0
    %s16 = scalar_lea.sflag [#allocation4], 1
    %17 = vsyncpa %s16, 0
    loop: start=0, step=1, limit=4
    $region2: #{tpu_custom_call.1} parent=1 // loop_pre_header
      _
    $region3: #{tpu_custom_call.1} parent=1 // loop_header
      %s19 = sphi 0, %s23
      %p20 = scmp.ge.s32.totalorder %s19, 4
      %s29 = sphi 0, %s31
      %s32 = sphi 0, %s29
      %s33 = sphi 0, %s32
      %s49 = sphi 0, %s33
      %s53 = sphi 0, %s53
      %s55 = sphi 0, %s53
      %s56 = sphi 0, %s55
      %s70 = sphi 0, %s56
      %s74 = sphi 0, %s74
      %s76 = sphi 0, %s74
      %s77 = sphi 0, %s76
      %s91 = sphi 0, %s77
      %s95 = sphi 0, %s95
      %s97 = sphi 0, %s95
      %s98 = sphi 0, %s97
      %s112 = sphi 0, %s98
      %s116 = sphi 0, %s116
      %s118 = sphi 0, %s116
      %s119 = sphi 0, %s118
      %s133 = sphi 0, %s119
      %s139 = sphi 0, %s141
      %s142 = sphi 0, %s139
      %s143 = sphi 0, %s142
      %s159 = sphi 0, %s143
    $region4: #{tpu_custom_call.1} parent=1 // loop_header_branch
      %22 = sbr.rel (%p20) target = $region8
    $region5: #{tpu_custom_call.1} parent=1 // loop_body
      %s24 = ssub.s32 %s19, 1
      %s25 = ssub.s32 %s19, 2
      %s26 = sadd.s32 %s19, 1
      %s27 = ssub.s32 %s19, %s26
      %p28 = scmp.eq.s32.totalorder %s27, 0
      %s30 = sadd.s32 %s29, 1
      %s31 = scalar_select %p28, %s29, %s30
      %p34 = pneg %p28
      %p35 = scmp.eq.s32.totalorder %s19, 1
      %p36 = por %p34, %p35
      %p37 = scmp.ne.s32.totalorder %s29, %s32
      %p38 = scmp.eq.s32.totalorder %s19, 0
      %p39 = por %p37, %p38
      %p40 = scmp.ne.s32.totalorder %s29, %s32
      %p41 = scmp.eq.s32.totalorder %s24, 1
      %p42 = por %p40, %p41
      %p43 = scmp.ne.s32.totalorder %s32, %s33
      %p44 = scmp.eq.s32.totalorder %s24, 0
      %p45 = por %p43, %p44
      %p46 = scmp.ne.s32.totalorder %s32, %s33
      %p47 = scmp.eq.s32.totalorder %s25, 1
      %p48 = por %p46, %p47
      %p50 = scmp.ne.s32.totalorder %s33, %s49
      %p51 = scmp.eq.s32.totalorder %s25, 0
      %p52 = por %p50, %p51
      %s54 = sadd.s32 %s53, 1
      %p57 = scmp.eq.s32.totalorder %s19, 1
      %p58 = scmp.ne.s32.totalorder %s53, %s55
      %p59 = scmp.eq.s32.totalorder %s19, 0
      %p60 = por %p58, %p59
      %p61 = scmp.ne.s32.totalorder %s53, %s55
      %p62 = scmp.eq.s32.totalorder %s24, 1
      %p63 = por %p61, %p62
      %p64 = scmp.ne.s32.totalorder %s55, %s56
      %p65 = scmp.eq.s32.totalorder %s24, 0
      %p66 = por %p64, %p65
      %p67 = scmp.ne.s32.totalorder %s55, %s56
      %p68 = scmp.eq.s32.totalorder %s25, 1
      %p69 = por %p67, %p68
      %p71 = scmp.ne.s32.totalorder %s56, %s70
      %p72 = scmp.eq.s32.totalorder %s25, 0
      %p73 = por %p71, %p72
      %s75 = sadd.s32 %s74, 1
      %p78 = scmp.eq.s32.totalorder %s19, 1
      %p79 = scmp.ne.s32.totalorder %s74, %s76
      %p80 = scmp.eq.s32.totalorder %s19, 0
      %p81 = por %p79, %p80
      %p82 = scmp.ne.s32.totalorder %s74, %s76
      %p83 = scmp.eq.s32.totalorder %s24, 1
      %p84 = por %p82, %p83
      %p85 = scmp.ne.s32.totalorder %s76, %s77
      %p86 = scmp.eq.s32.totalorder %s24, 0
      %p87 = por %p85, %p86
      %p88 = scmp.ne.s32.totalorder %s76, %s77
      %p89 = scmp.eq.s32.totalorder %s25, 1
      %p90 = por %p88, %p89
      %p92 = scmp.ne.s32.totalorder %s77, %s91
      %p93 = scmp.eq.s32.totalorder %s25, 0
      %p94 = por %p92, %p93
      %s96 = sadd.s32 %s95, 1
      %p99 = scmp.eq.s32.totalorder %s19, 1
      %p100 = scmp.ne.s32.totalorder %s95, %s97
      %p101 = scmp.eq.s32.totalorder %s19, 0
      %p102 = por %p100, %p101
      %p103 = scmp.ne.s32.totalorder %s95, %s97
      %p104 = scmp.eq.s32.totalorder %s24, 1
      %p105 = por %p103, %p104
      %p106 = scmp.ne.s32.totalorder %s97, %s98
      %p107 = scmp.eq.s32.totalorder %s24, 0
      %p108 = por %p106, %p107
      %p109 = scmp.ne.s32.totalorder %s97, %s98
      %p110 = scmp.eq.s32.totalorder %s25, 1
      %p111 = por %p109, %p110
      %p113 = scmp.ne.s32.totalorder %s98, %s112
      %p114 = scmp.eq.s32.totalorder %s25, 0
      %p115 = por %p113, %p114
      %s117 = sadd.s32 %s116, 1
      %p120 = scmp.eq.s32.totalorder %s19, 1
      %p121 = scmp.ne.s32.totalorder %s116, %s118
      %p122 = scmp.eq.s32.totalorder %s19, 0
      %p123 = por %p121, %p122
      %p124 = scmp.ne.s32.totalorder %s116, %s118
      %p125 = scmp.eq.s32.totalorder %s24, 1
      %p126 = por %p124, %p125
      %p127 = scmp.ne.s32.totalorder %s118, %s119
      %p128 = scmp.eq.s32.totalorder %s24, 0
      %p129 = por %p127, %p128
      %p130 = scmp.ne.s32.totalorder %s118, %s119
      %p131 = scmp.eq.s32.totalorder %s25, 1
      %p132 = por %p130, %p131
      %p134 = scmp.ne.s32.totalorder %s119, %s133
      %p135 = scmp.eq.s32.totalorder %s25, 0
      %p136 = por %p134, %p135
      %s137 = ssub.s32 %s19, %s26
      %p138 = scmp.eq.s32.totalorder %s137, 0
      %s140 = sadd.s32 %s139, 1
      %s141 = scalar_select %p138, %s139, %s140
      %p144 = pneg %p138
      %p145 = scmp.eq.s32.totalorder %s19, 1
      %p146 = por %p144, %p145
      %p147 = scmp.ne.s32.totalorder %s139, %s142
      %p148 = scmp.eq.s32.totalorder %s19, 0
      %p149 = por %p147, %p148
      %p150 = scmp.ne.s32.totalorder %s139, %s142
      %p151 = scmp.eq.s32.totalorder %s24, 1
      %p152 = por %p150, %p151
      %p153 = scmp.ne.s32.totalorder %s142, %s143
      %p154 = scmp.eq.s32.totalorder %s24, 0
      %p155 = por %p153, %p154
      %p156 = scmp.ne.s32.totalorder %s142, %s143
      %p157 = scmp.eq.s32.totalorder %s25, 1
      %p158 = por %p156, %p157
      %p160 = scmp.ne.s32.totalorder %s143, %s159
      %p161 = scmp.eq.s32.totalorder %s25, 0
      %p162 = por %p160, %p161
      %p163 = scmp.le.s32.totalorder 1, %s19
      %p164 = scmp.lt.s32.totalorder %s19, 3
      %p165 = pnand %p163, %p164
      %p166 = pneg %p165
      // Predicated region
      $region9: #{tpu_custom_call.1} parent=5 // pred_check
        _
      $region10: #{tpu_custom_call.1} parent=5 // pred_check_branch
        %168 = sbr.rel (%p165) target = $region12
      $region11: #{tpu_custom_call.1} parent=5 // pred_region
        %s169 = ssub.s32 %s19, 1
        // Predicated region
        $region13: #{tpu_custom_call.1} parent=11 // pred_check
          %p170 = pneg %p66
        $region14: #{tpu_custom_call.1} parent=11 // pred_check_branch
          %172 = sbr.rel (%p170) target = $region16
        $region15: #{tpu_custom_call.1} parent=11 // pred_region
          %s174 = ssub.s32 9216, 9216
          %175 = vsyncadd [#allocation6], %s174
          %s176 = sshll.u32 [#allocation5], 4
          %s177 = int_to_ptr.vmem [resolvable:$true] %s176
          %182 = dma.hbm_to_vmem [thread:$0]  %s1, 9216, %s177, [#allocation6], 64, 64, 4
        $region16: #{tpu_custom_call.1} parent=11 // pred_fallthru
          _
        // Predicated region
        $region17: #{tpu_custom_call.1} parent=11 // pred_check
          %p183 = pneg %p87
        $region18: #{tpu_custom_call.1} parent=11 // pred_check_branch
          %185 = sbr.rel (%p183) target = $region20
        $region19: #{tpu_custom_call.1} parent=11 // pred_region
          %s187 = ssub.s32 16, 16
          %188 = vsyncadd [#allocation6], %s187
          %s190 = sshll.u32 [#allocation7], 4
          %s191 = int_to_ptr.vmem [resolvable:$true] %s190
          %193 = dma.hbm_to_vmem [thread:$0]  %s2, 16, %s191, [#allocation6]
        $region20: #{tpu_custom_call.1} parent=11 // pred_fallthru
          _
        // Predicated region
        $region21: #{tpu_custom_call.1} parent=11 // pred_check
          %p194 = pneg %p108
        $region22: #{tpu_custom_call.1} parent=11 // pred_check_branch
          %196 = sbr.rel (%p194) target = $region24
        $region23: #{tpu_custom_call.1} parent=11 // pred_region
          %s198 = ssub.s32 9216, 9216
          %199 = vsyncadd [#allocation9], %s198
          %s200 = sshll.u32 [#allocation8], 4
          %s201 = int_to_ptr.vmem [resolvable:$true] %s200
          %206 = dma.hbm_to_vmem [thread:$0]  %s3, 9216, %s201, [#allocation9], 64, 64, 4
        $region24: #{tpu_custom_call.1} parent=11 // pred_fallthru
          _
        // Predicated region
        $region25: #{tpu_custom_call.1} parent=11 // pred_check
          %p207 = pneg %p129
        $region26: #{tpu_custom_call.1} parent=11 // pred_check_branch
          %209 = sbr.rel (%p207) target = $region28
        $region27: #{tpu_custom_call.1} parent=11 // pred_region
          %s211 = ssub.s32 16, 16
          %212 = vsyncadd [#allocation9], %s211
          %s214 = sshll.u32 [#allocation10], 4
          %s215 = int_to_ptr.vmem [resolvable:$true] %s214
          %217 = dma.hbm_to_vmem [thread:$0]  %s4, 16, %s215, [#allocation9]
        $region28: #{tpu_custom_call.1} parent=11 // pred_fallthru
          _
      $region12: #{tpu_custom_call.1} parent=5 // pred_fallthru
        _
      %p218 = scmp.lt.s32.totalorder %s19, 2
      // Predicated region
      $region29: #{tpu_custom_call.1} parent=5 // pred_check
        %p219 = pneg %p218
      $region30: #{tpu_custom_call.1} parent=5 // pred_check_branch
        %221 = sbr.rel (%p219) target = $region32
      $region31: #{tpu_custom_call.1} parent=5 // pred_region
        // Predicated region
        $region33: #{tpu_custom_call.1} parent=31 // pred_check
          %p222 = pneg %p39
        $region34: #{tpu_custom_call.1} parent=31 // pred_check_branch
          %224 = sbr.rel (%p222) target = $region36
        $region35: #{tpu_custom_call.1} parent=31 // pred_region
          %s225 = sand.u32 %s29, 1
          %s226 = scalar_lea.sflag [#allocation3], %s225
          %s227 = sand.u32 %s29, 1
          %s228 = smul.addr %s227, 256
          %s229 = scalar_lea.vmem [#allocation2], %s228
          %s231 = ssub.s32 4096, 4096
          %232 = vsyncadd %s226, %s231
          %s233 = smul.addr %s19, 32
          %s234 = smul.addr %s233, 128
          %s235 = scalar_lea.hbm %s0, %s234
          %s236 = sshll.u32 %s229, 4
          %s237 = int_to_ptr.vmem [resolvable:$true] %s236
          %242 = dma.hbm_to_vmem [thread:$0]  %s235, 4096, %s237, %s226, 128, 128, 8
        $region36: #{tpu_custom_call.1} parent=31 // pred_fallthru
          _
      $region32: #{tpu_custom_call.1} parent=5 // pred_fallthru
        _
      %p243 = scmp.le.s32.totalorder 1, %s19
      %p244 = scmp.lt.s32.totalorder %s19, 3
      %p245 = pnand %p243, %p244
      %p246 = pneg %p245
      // Predicated region
      $region37: #{tpu_custom_call.1} parent=5 // pred_check
        _
      $region38: #{tpu_custom_call.1} parent=5 // pred_check_branch
        %248 = sbr.rel (%p245) target = $region40
      $region39: #{tpu_custom_call.1} parent=5 // pred_region
        %s249 = ssub.s32 %s19, 1
        %s250 = sand.u32 %s32, 1
        %s251 = scalar_lea.sflag [#allocation3], %s250
        %s252 = sand.u32 %s32, 1
        %s253 = smul.addr %s252, 256
        %s254 = scalar_lea.vmem [#allocation2], %s253
        // Predicated region
        $region41: #{tpu_custom_call.1} parent=39 // pred_check
          %p255 = pneg %p45
        $region42: #{tpu_custom_call.1} parent=39 // pred_check_branch
          %257 = sbr.rel (%p255) target = $region44
        $region43: #{tpu_custom_call.1} parent=39 // pred_region
          %258 = dma.done %s251, 4096
        $region44: #{tpu_custom_call.1} parent=39 // pred_fallthru
          _
        // Predicated region
        $region45: #{tpu_custom_call.1} parent=39 // pred_check
          %p259 = pneg %p66
        $region46: #{tpu_custom_call.1} parent=39 // pred_check_branch
          %261 = sbr.rel (%p259) target = $region48
        $region47: #{tpu_custom_call.1} parent=39 // pred_region
          %262 = dma.done [#allocation6], 9216
        $region48: #{tpu_custom_call.1} parent=39 // pred_fallthru
          _
        // Predicated region
        $region49: #{tpu_custom_call.1} parent=39 // pred_check
          %p263 = pneg %p87
        $region50: #{tpu_custom_call.1} parent=39 // pred_check_branch
          %265 = sbr.rel (%p263) target = $region52
        $region51: #{tpu_custom_call.1} parent=39 // pred_region
          %266 = dma.done [#allocation6], 16
        $region52: #{tpu_custom_call.1} parent=39 // pred_fallthru
          _
        // Predicated region
        $region53: #{tpu_custom_call.1} parent=39 // pred_check
          %p267 = pneg %p108
        $region54: #{tpu_custom_call.1} parent=39 // pred_check_branch
          %269 = sbr.rel (%p267) target = $region56
        $region55: #{tpu_custom_call.1} parent=39 // pred_region
          %270 = dma.done [#allocation9], 9216
        $region56: #{tpu_custom_call.1} parent=39 // pred_fallthru
          _
        // Predicated region
        $region57: #{tpu_custom_call.1} parent=39 // pred_check
          %p271 = pneg %p129
        $region58: #{tpu_custom_call.1} parent=39 // pred_check_branch
          %273 = sbr.rel (%p271) target = $region60
        $region59: #{tpu_custom_call.1} parent=39 // pred_region
          %274 = dma.done [#allocation9], 16
        $region60: #{tpu_custom_call.1} parent=39 // pred_fallthru
          _
        %s275 = sand.u32 %s32, 1
        %s276 = scalar_lea.sflag [#allocation3], %s275
        %s277 = sand.u32 %s32, 1
        %s278 = smul.addr %s277, 256
        %s279 = scalar_lea.vmem [#allocation2], %s278
        %p280 = pneg %p45
        %p281 = pneg %p42
        %p282 = pneg %p66
        %p283 = pneg %p63
        %p284 = pneg %p87
        %p285 = pneg %p84
        %p286 = pneg %p108
        %p287 = pneg %p105
        %p288 = pneg %p129
        %p289 = pneg %p126
        %p290 = pneg %p155
        %p291 = pneg %p152
        %s292 = sand.u32 %s142, 1
        %s293 = scalar_lea.sflag [#allocation4], %s292
        %s294 = sand.u32 %s142, 1
        %s295 = smul.addr %s294, 256
        %s296 = scalar_lea.vmem [#allocation11], %s295
        %v298 = vld [vmem:[%s254] sm:$0xff]
        %v299 = vld [vmem:[%s254 + $0x8] sm:$0xff]
        %v300 = vld [vmem:[%s254 + $0x10] sm:$0xff]
        %v301 = vld [vmem:[%s254 + $0x18] sm:$0xff]
        %v302 = vld [vmem:[%s254 + $0x20] sm:$0xff]
        %v303 = vld [vmem:[%s254 + $0x28] sm:$0xff]
        %v304 = vld [vmem:[%s254 + $0x30] sm:$0xff]
        %v305 = vld [vmem:[%s254 + $0x38] sm:$0xff]
        %v306 = vld [vmem:[%s254 + $0x40] sm:$0xff]
        %v307 = vld [vmem:[%s254 + $0x48] sm:$0xff]
        %v308 = vld [vmem:[%s254 + $0x50] sm:$0xff]
        %v309 = vld [vmem:[%s254 + $0x58] sm:$0xff]
        %v310 = vld [vmem:[%s254 + $0x60] sm:$0xff]
        %v311 = vld [vmem:[%s254 + $0x68] sm:$0xff]
        %v312 = vld [vmem:[%s254 + $0x70] sm:$0xff]
        %v313 = vld [vmem:[%s254 + $0x78] sm:$0xff]
        %v314 = vld [vmem:[%s254 + $0x80] sm:$0xff]
        %v315 = vld [vmem:[%s254 + $0x88] sm:$0xff]
        %v316 = vld [vmem:[%s254 + $0x90] sm:$0xff]
        %v317 = vld [vmem:[%s254 + $0x98] sm:$0xff]
        %v318 = vld [vmem:[%s254 + $0xa0] sm:$0xff]
        %v319 = vld [vmem:[%s254 + $0xa8] sm:$0xff]
        %v320 = vld [vmem:[%s254 + $0xb0] sm:$0xff]
        %v321 = vld [vmem:[%s254 + $0xb8] sm:$0xff]
        %v322 = vld [vmem:[%s254 + $0xc0] sm:$0xff]
        %v323 = vld [vmem:[%s254 + $0xc8] sm:$0xff]
        %v324 = vld [vmem:[%s254 + $0xd0] sm:$0xff]
        %v325 = vld [vmem:[%s254 + $0xd8] sm:$0xff]
        %v326 = vld [vmem:[%s254 + $0xe0] sm:$0xff]
        %v327 = vld [vmem:[%s254 + $0xe8] sm:$0xff]
        %v328 = vld [vmem:[%s254 + $0xf0] sm:$0xff]
        %v329 = vld [vmem:[%s254 + $0xf8] sm:$0xff]
        %vm362 = vcmask 1040384
        %v363 = vrot.slane %v298, 7
        %v364 = vrot.slane %v299, 7
        %v365 = vsel %vm362, %v363, %v364
        %v366 = vrot.slane %v300, 7
        %v367 = vrot.slane %v301, 7
        %v368 = vsel %vm362, %v366, %v367
        %v369 = vrot.slane %v302, 7
        %v370 = vrot.slane %v303, 7
        %v371 = vsel %vm362, %v369, %v370
        %v372 = vrot.slane %v304, 7
        %v373 = vrot.slane %v305, 7
        %v374 = vsel %vm362, %v372, %v373
        %v375 = vrot.slane %v306, 7
        %v376 = vrot.slane %v307, 7
        %v377 = vsel %vm362, %v375, %v376
        %v378 = vrot.slane %v308, 7
        %v379 = vrot.slane %v309, 7
        %v380 = vsel %vm362, %v378, %v379
        %v381 = vrot.slane %v310, 7
        %v382 = vrot.slane %v311, 7
        %v383 = vsel %vm362, %v381, %v382
        %v384 = vrot.slane %v312, 7
        %v385 = vrot.slane %v313, 7
        %v386 = vsel %vm362, %v384, %v385
        %v387 = vrot.slane %v314, 7
        %v388 = vrot.slane %v315, 7
        %v389 = vsel %vm362, %v387, %v388
        %v390 = vrot.slane %v316, 7
        %v391 = vrot.slane %v317, 7
        %v392 = vsel %vm362, %v390, %v391
        %v393 = vrot.slane %v318, 7
        %v394 = vrot.slane %v319, 7
        %v395 = vsel %vm362, %v393, %v394
        %v396 = vrot.slane %v320, 7
        %v397 = vrot.slane %v321, 7
        %v398 = vsel %vm362, %v396, %v397
        %v399 = vrot.slane %v322, 7
        %v400 = vrot.slane %v323, 7
        %v401 = vsel %vm362, %v399, %v400
        %v402 = vrot.slane %v324, 7
        %v403 = vrot.slane %v325, 7
        %v404 = vsel %vm362, %v402, %v403
        %v405 = vrot.slane %v326, 7
        %v406 = vrot.slane %v327, 7
        %v407 = vsel %vm362, %v405, %v406
        %v408 = vrot.slane %v328, 7
        %v409 = vrot.slane %v329, 7
        %v410 = vsel %vm362, %v408, %v409
        %v443 = vsel %vm362, 0.0, %v363
        %v444 = vsel %vm362, 0.0, %v366
        %v445 = vsel %vm362, 0.0, %v369
        %v446 = vsel %vm362, 0.0, %v372
        %v447 = vsel %vm362, 0.0, %v375
        %v448 = vsel %vm362, 0.0, %v378
        %v449 = vsel %vm362, 0.0, %v381
        %v450 = vsel %vm362, 0.0, %v384
        %v451 = vsel %vm362, 0.0, %v387
        %v452 = vsel %vm362, 0.0, %v390
        %v453 = vsel %vm362, 0.0, %v393
        %v454 = vsel %vm362, 0.0, %v396
        %v455 = vsel %vm362, 0.0, %v399
        %v456 = vsel %vm362, 0.0, %v402
        %v457 = vsel %vm362, 0.0, %v405
        %v458 = vsel %vm362, 0.0, %v408
        %vm459 = vcmask 1046528
        %v460 = vrot.slane %v298, 1
        %v461 = vrot.slane %v299, 1
        %v462 = vsel %vm459, %v460, %v461
        %v463 = vrot.slane %v300, 1
        %v464 = vrot.slane %v301, 1
        %v465 = vsel %vm459, %v463, %v464
        %v466 = vrot.slane %v302, 1
        %v467 = vrot.slane %v303, 1
        %v468 = vsel %vm459, %v466, %v467
        %v469 = vrot.slane %v304, 1
        %v470 = vrot.slane %v305, 1
        %v471 = vsel %vm459, %v469, %v470
        %v472 = vrot.slane %v306, 1
        %v473 = vrot.slane %v307, 1
        %v474 = vsel %vm459, %v472, %v473
        %v475 = vrot.slane %v308, 1
        %v476 = vrot.slane %v309, 1
        %v477 = vsel %vm459, %v475, %v476
        %v478 = vrot.slane %v310, 1
        %v479 = vrot.slane %v311, 1
        %v480 = vsel %vm459, %v478, %v479
        %v481 = vrot.slane %v312, 1
        %v482 = vrot.slane %v313, 1
        %v483 = vsel %vm459, %v481, %v482
        %v484 = vrot.slane %v314, 1
        %v485 = vrot.slane %v315, 1
        %v486 = vsel %vm459, %v484, %v485
        %v487 = vrot.slane %v316, 1
        %v488 = vrot.slane %v317, 1
        %v489 = vsel %vm459, %v487, %v488
        %v490 = vrot.slane %v318, 1
        %v491 = vrot.slane %v319, 1
        %v492 = vsel %vm459, %v490, %v491
        %v493 = vrot.slane %v320, 1
        %v494 = vrot.slane %v321, 1
        %v495 = vsel %vm459, %v493, %v494
        %v496 = vrot.slane %v322, 1
        %v497 = vrot.slane %v323, 1
        %v498 = vsel %vm459, %v496, %v497
        %v499 = vrot.slane %v324, 1
        %v500 = vrot.slane %v325, 1
        %v501 = vsel %vm459, %v499, %v500
        %v502 = vrot.slane %v326, 1
        %v503 = vrot.slane %v327, 1
        %v504 = vsel %vm459, %v502, %v503
        %v505 = vrot.slane %v328, 1
        %v506 = vrot.slane %v329, 1
        %v507 = vsel %vm459, %v505, %v506
        %v540 = vsel %vm459, %v461, 0.0
        %v541 = vsel %vm459, %v464, 0.0
        %v542 = vsel %vm459, %v467, 0.0
        %v543 = vsel %vm459, %v470, 0.0
        %v544 = vsel %vm459, %v473, 0.0
        %v545 = vsel %vm459, %v476, 0.0
        %v546 = vsel %vm459, %v479, 0.0
        %v547 = vsel %vm459, %v482, 0.0
        %v548 = vsel %vm459, %v485, 0.0
        %v549 = vsel %vm459, %v488, 0.0
        %v550 = vsel %vm459, %v491, 0.0
        %v551 = vsel %vm459, %v494, 0.0
        %v552 = vsel %vm459, %v497, 0.0
        %v553 = vsel %vm459, %v500, 0.0
        %v554 = vsel %vm459, %v503, 0.0
        %v555 = vsel %vm459, %v506, 0.0
        %v556 = vpack.c.bf16 %v365, %v443
        %v557 = vpack.c.bf16 %v368, %v444
        %v558 = vpack.c.bf16 %v371, %v445
        %v559 = vpack.c.bf16 %v374, %v446
        %v560 = vpack.c.bf16 %v377, %v447
        %v561 = vpack.c.bf16 %v380, %v448
        %v562 = vpack.c.bf16 %v383, %v449
        %v563 = vpack.c.bf16 %v386, %v450
        %v564 = vpack.c.bf16 %v389, %v451
        %v565 = vpack.c.bf16 %v392, %v452
        %v566 = vpack.c.bf16 %v395, %v453
        %v567 = vpack.c.bf16 %v398, %v454
        %v568 = vpack.c.bf16 %v401, %v455
        %v569 = vpack.c.bf16 %v404, %v456
        %v570 = vpack.c.bf16 %v407, %v457
        %v571 = vpack.c.bf16 %v410, %v458
        %v572 = vpack.c.bf16 %v299, %v298
        %v573 = vpack.c.bf16 %v301, %v300
        %v574 = vpack.c.bf16 %v303, %v302
        %v575 = vpack.c.bf16 %v305, %v304
        %v576 = vpack.c.bf16 %v307, %v306
        %v577 = vpack.c.bf16 %v309, %v308
        %v578 = vpack.c.bf16 %v311, %v310
        %v579 = vpack.c.bf16 %v313, %v312
        %v580 = vpack.c.bf16 %v315, %v314
        %v581 = vpack.c.bf16 %v317, %v316
        %v582 = vpack.c.bf16 %v319, %v318
        %v583 = vpack.c.bf16 %v321, %v320
        %v584 = vpack.c.bf16 %v323, %v322
        %v585 = vpack.c.bf16 %v325, %v324
        %v586 = vpack.c.bf16 %v327, %v326
        %v587 = vpack.c.bf16 %v329, %v328
        %v588 = vpack.c.bf16 %v540, %v462
        %v589 = vpack.c.bf16 %v541, %v465
        %v590 = vpack.c.bf16 %v542, %v468
        %v591 = vpack.c.bf16 %v543, %v471
        %v592 = vpack.c.bf16 %v544, %v474
        %v593 = vpack.c.bf16 %v545, %v477
        %v594 = vpack.c.bf16 %v546, %v480
        %v595 = vpack.c.bf16 %v547, %v483
        %v596 = vpack.c.bf16 %v548, %v486
        %v597 = vpack.c.bf16 %v549, %v489
        %v598 = vpack.c.bf16 %v550, %v492
        %v599 = vpack.c.bf16 %v551, %v495
        %v600 = vpack.c.bf16 %v552, %v498
        %v601 = vpack.c.bf16 %v553, %v501
        %v602 = vpack.c.bf16 %v554, %v504
        %v603 = vpack.c.bf16 %v555, %v507
        %v604 = vld [vmem:[#allocation5] sm:$0xf]
        %v605 = vld [vmem:[#allocation5 + $0x4] sm:$0xf]
        %v606 = vld [vmem:[#allocation5 + $0x8] sm:$0xf]
        %v607 = vld [vmem:[#allocation5 + $0xc] sm:$0xf]
        %v608 = vld [vmem:[#allocation5 + $0x10] sm:$0xf]
        %v609 = vld [vmem:[#allocation5 + $0x14] sm:$0xf]
        %v610 = vld [vmem:[#allocation5 + $0x18] sm:$0xf]
        %v611 = vld [vmem:[#allocation5 + $0x1c] sm:$0xf]
        %v612 = vld [vmem:[#allocation5 + $0x20] sm:$0xf]
        %v613 = vld [vmem:[#allocation5 + $0x24] sm:$0xf]
        %v614 = vld [vmem:[#allocation5 + $0x28] sm:$0xf]
        %v615 = vld [vmem:[#allocation5 + $0x2c] sm:$0xf]
        %v616 = vld [vmem:[#allocation5 + $0x30] sm:$0xf]
        %v617 = vld [vmem:[#allocation5 + $0x34] sm:$0xf]
        %v618 = vld [vmem:[#allocation5 + $0x38] sm:$0xf]
        %v619 = vld [vmem:[#allocation5 + $0x3c] sm:$0xf]
        %v620 = vld [vmem:[#allocation5 + $0x40] sm:$0xf]
        %v621 = vld [vmem:[#allocation5 + $0x44] sm:$0xf]
        %v622 = vld [vmem:[#allocation5 + $0x48] sm:$0xf]
        %v623 = vld [vmem:[#allocation5 + $0x4c] sm:$0xf]
        %v624 = vld [vmem:[#allocation5 + $0x50] sm:$0xf]
        %v625 = vld [vmem:[#allocation5 + $0x54] sm:$0xf]
        %v626 = vld [vmem:[#allocation5 + $0x58] sm:$0xf]
        %v627 = vld [vmem:[#allocation5 + $0x5c] sm:$0xf]
        %v628 = vld [vmem:[#allocation5 + $0x60] sm:$0xf]
        %v629 = vld [vmem:[#allocation5 + $0x64] sm:$0xf]
        %v630 = vld [vmem:[#allocation5 + $0x68] sm:$0xf]
        %v631 = vld [vmem:[#allocation5 + $0x6c] sm:$0xf]
        %v632 = vld [vmem:[#allocation5 + $0x70] sm:$0xf]
        %v633 = vld [vmem:[#allocation5 + $0x74] sm:$0xf]
        %v634 = vld [vmem:[#allocation5 + $0x78] sm:$0xf]
        %v635 = vld [vmem:[#allocation5 + $0x7c] sm:$0xf]
        %v636 = vld [vmem:[#allocation5 + $0x80] sm:$0xf]
        %v637 = vld [vmem:[#allocation5 + $0x84] sm:$0xf]
        %v638 = vld [vmem:[#allocation5 + $0x88] sm:$0xf]
        %v639 = vld [vmem:[#allocation5 + $0x8c] sm:$0xf]
        %v640 = vld [vmem:[#allocation5 + $0x90] sm:$0xf]
        %v641 = vld [vmem:[#allocation5 + $0x94] sm:$0xf]
        %v642 = vld [vmem:[#allocation5 + $0x98] sm:$0xf]
        %v643 = vld [vmem:[#allocation5 + $0x9c] sm:$0xf]
        %v644 = vld [vmem:[#allocation5 + $0xa0] sm:$0xf]
        %v645 = vld [vmem:[#allocation5 + $0xa4] sm:$0xf]
        %v646 = vld [vmem:[#allocation5 + $0xa8] sm:$0xf]
        %v647 = vld [vmem:[#allocation5 + $0xac] sm:$0xf]
        %v648 = vld [vmem:[#allocation5 + $0xb0] sm:$0xf]
        %v649 = vld [vmem:[#allocation5 + $0xb4] sm:$0xf]
        %v650 = vld [vmem:[#allocation5 + $0xb8] sm:$0xf]
        %v651 = vld [vmem:[#allocation5 + $0xbc] sm:$0xf]
        %v652 = vld [vmem:[#allocation5 + $0xc0] sm:$0xf]
        %v653 = vld [vmem:[#allocation5 + $0xc4] sm:$0xf]
        %v654 = vld [vmem:[#allocation5 + $0xc8] sm:$0xf]
        %v655 = vld [vmem:[#allocation5 + $0xcc] sm:$0xf]
        %v656 = vld [vmem:[#allocation5 + $0xd0] sm:$0xf]
        %v657 = vld [vmem:[#allocation5 + $0xd4] sm:$0xf]
        %v658 = vld [vmem:[#allocation5 + $0xd8] sm:$0xf]
        %v659 = vld [vmem:[#allocation5 + $0xdc] sm:$0xf]
        %v660 = vld [vmem:[#allocation5 + $0xe0] sm:$0xf]
        %v661 = vld [vmem:[#allocation5 + $0xe4] sm:$0xf]
        %v662 = vld [vmem:[#allocation5 + $0xe8] sm:$0xf]
        %v663 = vld [vmem:[#allocation5 + $0xec] sm:$0xf]
        %v664 = vld [vmem:[#allocation5 + $0xf0] sm:$0xf]
        %v665 = vld [vmem:[#allocation5 + $0xf4] sm:$0xf]
        %v666 = vld [vmem:[#allocation5 + $0xf8] sm:$0xf]
        %v667 = vld [vmem:[#allocation5 + $0xfc] sm:$0xf]
        %v668 = vld [vmem:[#allocation5 + $0x100] sm:$0xf]
        %v669 = vld [vmem:[#allocation5 + $0x104] sm:$0xf]
        %v670 = vld [vmem:[#allocation5 + $0x108] sm:$0xf]
        %v671 = vld [vmem:[#allocation5 + $0x10c] sm:$0xf]
        %v672 = vld [vmem:[#allocation5 + $0x110] sm:$0xf]
        %v673 = vld [vmem:[#allocation5 + $0x114] sm:$0xf]
        %v674 = vld [vmem:[#allocation5 + $0x118] sm:$0xf]
        %v675 = vld [vmem:[#allocation5 + $0x11c] sm:$0xf]
        %v676 = vld [vmem:[#allocation5 + $0x120] sm:$0xf]
        %v677 = vld [vmem:[#allocation5 + $0x124] sm:$0xf]
        %v678 = vld [vmem:[#allocation5 + $0x128] sm:$0xf]
        %v679 = vld [vmem:[#allocation5 + $0x12c] sm:$0xf]
        %v680 = vld [vmem:[#allocation5 + $0x130] sm:$0xf]
        %v681 = vld [vmem:[#allocation5 + $0x134] sm:$0xf]
        %v682 = vld [vmem:[#allocation5 + $0x138] sm:$0xf]
        %v683 = vld [vmem:[#allocation5 + $0x13c] sm:$0xf]
        %v684 = vld [vmem:[#allocation5 + $0x140] sm:$0xf]
        %v685 = vld [vmem:[#allocation5 + $0x144] sm:$0xf]
        %v686 = vld [vmem:[#allocation5 + $0x148] sm:$0xf]
        %v687 = vld [vmem:[#allocation5 + $0x14c] sm:$0xf]
        %v688 = vld [vmem:[#allocation5 + $0x150] sm:$0xf]
        %v689 = vld [vmem:[#allocation5 + $0x154] sm:$0xf]
        %v690 = vld [vmem:[#allocation5 + $0x158] sm:$0xf]
        %v691 = vld [vmem:[#allocation5 + $0x15c] sm:$0xf]
        %v692 = vld [vmem:[#allocation5 + $0x160] sm:$0xf]
        %v693 = vld [vmem:[#allocation5 + $0x164] sm:$0xf]
        %v694 = vld [vmem:[#allocation5 + $0x168] sm:$0xf]
        %v695 = vld [vmem:[#allocation5 + $0x16c] sm:$0xf]
        %v696 = vld [vmem:[#allocation5 + $0x170] sm:$0xf]
        %v697 = vld [vmem:[#allocation5 + $0x174] sm:$0xf]
        %v698 = vld [vmem:[#allocation5 + $0x178] sm:$0xf]
        %v699 = vld [vmem:[#allocation5 + $0x17c] sm:$0xf]
        %v700 = vld [vmem:[#allocation5 + $0x180] sm:$0xf]
        %v701 = vld [vmem:[#allocation5 + $0x184] sm:$0xf]
        %v702 = vld [vmem:[#allocation5 + $0x188] sm:$0xf]
        %v703 = vld [vmem:[#allocation5 + $0x18c] sm:$0xf]
        %v704 = vld [vmem:[#allocation5 + $0x190] sm:$0xf]
        %v705 = vld [vmem:[#allocation5 + $0x194] sm:$0xf]
        %v706 = vld [vmem:[#allocation5 + $0x198] sm:$0xf]
        %v707 = vld [vmem:[#allocation5 + $0x19c] sm:$0xf]
        %v708 = vld [vmem:[#allocation5 + $0x1a0] sm:$0xf]
        %v709 = vld [vmem:[#allocation5 + $0x1a4] sm:$0xf]
        %v710 = vld [vmem:[#allocation5 + $0x1a8] sm:$0xf]
        %v711 = vld [vmem:[#allocation5 + $0x1ac] sm:$0xf]
        %v712 = vld [vmem:[#allocation5 + $0x1b0] sm:$0xf]
        %v713 = vld [vmem:[#allocation5 + $0x1b4] sm:$0xf]
        %v714 = vld [vmem:[#allocation5 + $0x1b8] sm:$0xf]
        %v715 = vld [vmem:[#allocation5 + $0x1bc] sm:$0xf]
        %v716 = vld [vmem:[#allocation5 + $0x1c0] sm:$0xf]
        %v717 = vld [vmem:[#allocation5 + $0x1c4] sm:$0xf]
        %v718 = vld [vmem:[#allocation5 + $0x1c8] sm:$0xf]
        %v719 = vld [vmem:[#allocation5 + $0x1cc] sm:$0xf]
        %v720 = vld [vmem:[#allocation5 + $0x1d0] sm:$0xf]
        %v721 = vld [vmem:[#allocation5 + $0x1d4] sm:$0xf]
        %v722 = vld [vmem:[#allocation5 + $0x1d8] sm:$0xf]
        %v723 = vld [vmem:[#allocation5 + $0x1dc] sm:$0xf]
        %v724 = vld [vmem:[#allocation5 + $0x1e0] sm:$0xf]
        %v725 = vld [vmem:[#allocation5 + $0x1e4] sm:$0xf]
        %v726 = vld [vmem:[#allocation5 + $0x1e8] sm:$0xf]
        %v727 = vld [vmem:[#allocation5 + $0x1ec] sm:$0xf]
        %v728 = vld [vmem:[#allocation5 + $0x1f0] sm:$0xf]
        %v729 = vld [vmem:[#allocation5 + $0x1f4] sm:$0xf]
        %v730 = vld [vmem:[#allocation5 + $0x1f8] sm:$0xf]
        %v731 = vld [vmem:[#allocation5 + $0x1fc] sm:$0xf]
        %v732 = vld [vmem:[#allocation5 + $0x200] sm:$0xf]
        %v733 = vld [vmem:[#allocation5 + $0x204] sm:$0xf]
        %v734 = vld [vmem:[#allocation5 + $0x208] sm:$0xf]
        %v735 = vld [vmem:[#allocation5 + $0x20c] sm:$0xf]
        %v736 = vld [vmem:[#allocation5 + $0x210] sm:$0xf]
        %v737 = vld [vmem:[#allocation5 + $0x214] sm:$0xf]
        %v738 = vld [vmem:[#allocation5 + $0x218] sm:$0xf]
        %v739 = vld [vmem:[#allocation5 + $0x21c] sm:$0xf]
        %v740 = vld [vmem:[#allocation5 + $0x220] sm:$0xf]
        %v741 = vld [vmem:[#allocation5 + $0x224] sm:$0xf]
        %v742 = vld [vmem:[#allocation5 + $0x228] sm:$0xf]
        %v743 = vld [vmem:[#allocation5 + $0x22c] sm:$0xf]
        %v744 = vld [vmem:[#allocation5 + $0x230] sm:$0xf]
        %v745 = vld [vmem:[#allocation5 + $0x234] sm:$0xf]
        %v746 = vld [vmem:[#allocation5 + $0x238] sm:$0xf]
        %v747 = vld [vmem:[#allocation5 + $0x23c] sm:$0xf]
        %v796 = vunpack.c.l.b16 %v604
        %v797 = vunpack.c.l.b16 %v605
        %v798 = vunpack.c.l.b16 %v606
        %v799 = vunpack.c.l.b16 %v607
        %v800 = vunpack.c.l.b16 %v608
        %v801 = vunpack.c.l.b16 %v609
        %v802 = vunpack.c.l.b16 %v610
        %v803 = vunpack.c.l.b16 %v611
        %v804 = vunpack.c.l.b16 %v612
        %v805 = vunpack.c.l.b16 %v613
        %v806 = vunpack.c.l.b16 %v614
        %v807 = vunpack.c.l.b16 %v615
        %v808 = vunpack.c.l.b16 %v616
        %v809 = vunpack.c.l.b16 %v617
        %v810 = vunpack.c.l.b16 %v618
        %v811 = vunpack.c.l.b16 %v619
        %v812 = vunpack.c.l.b16 %v620
        %v813 = vunpack.c.l.b16 %v621
        %v814 = vunpack.c.l.b16 %v622
        %v815 = vunpack.c.l.b16 %v623
        %v816 = vunpack.c.l.b16 %v624
        %v817 = vunpack.c.l.b16 %v625
        %v818 = vunpack.c.l.b16 %v626
        %v819 = vunpack.c.l.b16 %v627
        %v820 = vunpack.c.l.b16 %v628
        %v821 = vunpack.c.l.b16 %v629
        %v822 = vunpack.c.l.b16 %v630
        %v823 = vunpack.c.l.b16 %v631
        %v824 = vunpack.c.l.b16 %v632
        %v825 = vunpack.c.l.b16 %v633
        %v826 = vunpack.c.l.b16 %v634
        %v827 = vunpack.c.l.b16 %v635
        %v828 = vunpack.c.l.b16 %v636
        %v829 = vunpack.c.l.b16 %v637
        %v830 = vunpack.c.l.b16 %v638
        %v831 = vunpack.c.l.b16 %v639
        %v832 = vunpack.c.l.b16 %v640
        %v833 = vunpack.c.l.b16 %v641
        %v834 = vunpack.c.l.b16 %v642
        %v835 = vunpack.c.l.b16 %v643
        %v836 = vunpack.c.l.b16 %v644
        %v837 = vunpack.c.l.b16 %v645
        %v838 = vunpack.c.l.b16 %v646
        %v839 = vunpack.c.l.b16 %v647
        %v840 = vunpack.c.l.b16 %v648
        %v841 = vunpack.c.l.b16 %v649
        %v842 = vunpack.c.l.b16 %v650
        %v843 = vunpack.c.l.b16 %v651
        %v844 = vpack.c.b16 %v797, %v796
        %v845 = vpack.c.b16 %v799, %v798
        %v846 = vpack.c.b16 %v801, %v800
        %v847 = vpack.c.b16 %v803, %v802
        %v848 = vpack.c.b16 %v805, %v804
        %v849 = vpack.c.b16 %v807, %v806
        %v850 = vpack.c.b16 %v809, %v808
        %v851 = vpack.c.b16 %v811, %v810
        %v852 = vpack.c.b16 %v813, %v812
        %v853 = vpack.c.b16 %v815, %v814
        %v854 = vpack.c.b16 %v817, %v816
        %v855 = vpack.c.b16 %v819, %v818
        %v856 = vpack.c.b16 %v821, %v820
        %v857 = vpack.c.b16 %v823, %v822
        %v858 = vpack.c.b16 %v825, %v824
        %v859 = vpack.c.b16 %v827, %v826
        %v860 = vpack.c.b16 %v829, %v828
        %v861 = vpack.c.b16 %v831, %v830
        %v862 = vpack.c.b16 %v833, %v832
        %v863 = vpack.c.b16 %v835, %v834
        %v864 = vpack.c.b16 %v837, %v836
        %v865 = vpack.c.b16 %v839, %v838
        %v866 = vpack.c.b16 %v841, %v840
        %v867 = vpack.c.b16 %v843, %v842
        %892 = vmatprep.subr.bf16.mxu0 0
        %893 = vmatpush1.bf16.msra.mxu0 %v844
        %894 = vmatprep.subr.bf16.mxu0 0
        %895 = vmatpush1.bf16.msra.mxu0 %v845
        %896 = vmatprep.subr.bf16.mxu0 0
        %897 = vmatpush1.bf16.msra.mxu0 %v846
        %898 = vmatprep.subr.bf16.mxu0 0
        %899 = vmatpush1.bf16.msra.mxu0 %v847
        %900 = vmatprep.subr.bf16.mxu0 0
        %901 = vmatpush1.bf16.msra.mxu0 %v848
        %902 = vmatprep.subr.bf16.mxu0 0
        %903 = vmatpush1.bf16.msra.mxu0 %v849
        %904 = vmatprep.subr.bf16.mxu0 0
        %905 = vmatpush1.bf16.msra.mxu0 %v850
        %906 = vmatprep.subr.bf16.mxu0 0
        %907 = vmatpush1.bf16.msra.mxu0 %v851
        %908 = vmatprep.subr.bf16.mxu0 0
        %909 = vmatpush1.bf16.msra.mxu0 %v852
        %910 = vmatprep.subr.bf16.mxu0 0
        %911 = vmatpush1.bf16.msra.mxu0 %v853
        %912 = vmatprep.subr.bf16.mxu0 0
        %913 = vmatpush1.bf16.msra.mxu0 %v854
        %914 = vmatprep.subr.bf16.mxu0 0
        %915 = vmatpush1.bf16.msra.mxu0 %v855
        %916 = vmatprep.subr.bf16.mxu0 0
        %917 = vmatpush1.bf16.msra.mxu0 %v856
        %918 = vmatprep.subr.bf16.mxu0 0
        %919 = vmatpush1.bf16.msra.mxu0 %v857
        %920 = vmatprep.subr.bf16.mxu0 0
        %921 = vmatpush1.bf16.msra.mxu0 %v858
        %922 = vmatprep.subr.bf16.mxu0 0
        %923 = vmatpush1.bf16.msra.mxu0 %v859
        %924 = vmatprep.mubr.bf16.mxu0 %v572
        %925 = vmatmul.mubr.bf16.gmra.mrb[0].mxu0 %v556
        %v926 = vpop.f32.mrb[0].mxu0
        %v927 = vadd.f32 0.0, %v926
        %v928 = vpop.f32.mrb[0].mxu0
        %v929 = vpop.f32.mrb[0].mxu0
        %v930 = vadd.f32 0.0, %v929
        %v931 = vpop.f32.mrb[0].mxu0
        %932 = vmatprep.mubr.bf16.mxu0 %v573
        %933 = vmatmul.mubr.bf16.gmra.mrb[0].mxu0 %v557
        %v934 = vpop.f32.mrb[0].mxu0
        %v935 = vadd.f32 0.0, %v934
        %v936 = vpop.f32.mrb[0].mxu0
        %v937 = vpop.f32.mrb[0].mxu0
        %v938 = vadd.f32 0.0, %v937
        %v939 = vpop.f32.mrb[0].mxu0
        %940 = vmatprep.mubr.bf16.mxu0 %v574
        %941 = vmatmul.mubr.bf16.gmra.mrb[0].mxu0 %v558
        %v942 = vpop.f32.mrb[0].mxu0
        %v943 = vadd.f32 0.0, %v942
        %v944 = vpop.f32.mrb[0].mxu0
        %v945 = vpop.f32.mrb[0].mxu0
        %v946 = vadd.f32 0.0, %v945
        %v947 = vpop.f32.mrb[0].mxu0
        %948 = vmatprep.mubr.bf16.mxu0 %v575
        %949 = vmatmul.mubr.bf16.gmra.mrb[0].mxu0 %v559
        %v950 = vpop.f32.mrb[0].mxu0
        %v951 = vadd.f32 0.0, %v950
        %v952 = vpop.f32.mrb[0].mxu0
        %v953 = vpop.f32.mrb[0].mxu0
        %v954 = vadd.f32 0.0, %v953
        %v955 = vpop.f32.mrb[0].mxu0
        %956 = vmatprep.mubr.bf16.mxu0 %v576
        %957 = vmatmul.mubr.bf16.gmra.mrb[0].mxu0 %v560
        %v958 = vpop.f32.mrb[0].mxu0
        %v959 = vadd.f32 0.0, %v958
        %v960 = vpop.f32.mrb[0].mxu0
        %v961 = vpop.f32.mrb[0].mxu0
        %v962 = vadd.f32 0.0, %v961
        %v963 = vpop.f32.mrb[0].mxu0
        %964 = vmatprep.mubr.bf16.mxu0 %v577
        %965 = vmatmul.mubr.bf16.gmra.mrb[0].mxu0 %v561
        %v966 = vpop.f32.mrb[0].mxu0
        %v967 = vadd.f32 0.0, %v966
        %v968 = vpop.f32.mrb[0].mxu0
        %v969 = vpop.f32.mrb[0].mxu0
        %v970 = vadd.f32 0.0, %v969
        %v971 = vpop.f32.mrb[0].mxu0
        %972 = vmatprep.mubr.bf16.mxu0 %v578
        %973 = vmatmul.mubr.bf16.gmra.mrb[0].mxu0 %v562
        %v974 = vpop.f32.mrb[0].mxu0
        %v975 = vadd.f32 0.0, %v974
        %v976 = vpop.f32.mrb[0].mxu0
        %v977 = vpop.f32.mrb[0].mxu0
        %v978 = vadd.f32 0.0, %v977
        %v979 = vpop.f32.mrb[0].mxu0
        %980 = vmatprep.mubr.bf16.mxu0 %v579
        %981 = vmatmul.mubr.bf16.gmra.mrb[0].mxu0 %v563
        %v982 = vpop.f32.mrb[0].mxu0
        %v983 = vadd.f32 0.0, %v982
        %v984 = vpop.f32.mrb[0].mxu0
        %v985 = vpop.f32.mrb[0].mxu0
        %v986 = vadd.f32 0.0, %v985
        %v987 = vpop.f32.mrb[0].mxu0
        %988 = vmatprep.mubr.bf16.mxu0 %v580
        %989 = vmatmul.mubr.bf16.gmra.mrb[0].mxu0 %v564
        %v990 = vpop.f32.mrb[0].mxu0
        %v991 = vadd.f32 0.0, %v990
        %v992 = vpop.f32.mrb[0].mxu0
        %v993 = vpop.f32.mrb[0].mxu0
        %v994 = vadd.f32 0.0, %v993
        %v995 = vpop.f32.mrb[0].mxu0
        %996 = vmatprep.mubr.bf16.mxu0 %v581
        %997 = vmatmul.mubr.bf16.gmra.mrb[0].mxu0 %v565
        %v998 = vpop.f32.mrb[0].mxu0
        %v999 = vadd.f32 0.0, %v998
        %v1000 = vpop.f32.mrb[0].mxu0
        %v1001 = vpop.f32.mrb[0].mxu0
        %v1002 = vadd.f32 0.0, %v1001
        %v1003 = vpop.f32.mrb[0].mxu0
        %1004 = vmatprep.mubr.bf16.mxu0 %v582
        %1005 = vmatmul.mubr.bf16.gmra.mrb[0].mxu0 %v566
        %v1006 = vpop.f32.mrb[0].mxu0
        %v1007 = vadd.f32 0.0, %v1006
        %v1008 = vpop.f32.mrb[0].mxu0
        %v1009 = vpop.f32.mrb[0].mxu0
        %v1010 = vadd.f32 0.0, %v1009
        %v1011 = vpop.f32.mrb[0].mxu0
        %1012 = vmatprep.mubr.bf16.mxu0 %v583
        %1013 = vmatmul.mubr.bf16.gmra.mrb[0].mxu0 %v567
        %v1014 = vpop.f32.mrb[0].mxu0
        %v1015 = vadd.f32 0.0, %v1014
        %v1016 = vpop.f32.mrb[0].mxu0
        %v1017 = vpop.f32.mrb[0].mxu0
        %v1018 = vadd.f32 0.0, %v1017
        %v1019 = vpop.f32.mrb[0].mxu0
        %1020 = vmatprep.mubr.bf16.mxu0 %v584
        %1021 = vmatmul.mubr.bf16.gmra.mrb[0].mxu0 %v568
        %v1022 = vpop.f32.mrb[0].mxu0
        %v1023 = vadd.f32 0.0, %v1022
        %v1024 = vpop.f32.mrb[0].mxu0
        %v1025 = vpop.f32.mrb[0].mxu0
        %v1026 = vadd.f32 0.0, %v1025
        %v1027 = vpop.f32.mrb[0].mxu0
        %1028 = vmatprep.mubr.bf16.mxu0 %v585
        %1029 = vmatmul.mubr.bf16.gmra.mrb[0].mxu0 %v569
        %v1030 = vpop.f32.mrb[0].mxu0
        %v1031 = vadd.f32 0.0, %v1030
        %v1032 = vpop.f32.mrb[0].mxu0
        %v1033 = vpop.f32.mrb[0].mxu0
        %v1034 = vadd.f32 0.0, %v1033
        %v1035 = vpop.f32.mrb[0].mxu0
        %1036 = vmatprep.mubr.bf16.mxu0 %v586
        %1037 = vmatmul.mubr.bf16.gmra.mrb[0].mxu0 %v570
        %v1038 = vpop.f32.mrb[0].mxu0
        %v1039 = vadd.f32 0.0, %v1038
        %v1040 = vpop.f32.mrb[0].mxu0
        %v1041 = vpop.f32.mrb[0].mxu0
        %v1042 = vadd.f32 0.0, %v1041
        %v1043 = vpop.f32.mrb[0].mxu0
        %1044 = vdwg.mxu0
        %1045 = vmatprep.subr.bf16.mxu0 0
        %1046 = vmatpush1.bf16.msra.mxu0 %v860
        %1047 = vmatprep.subr.bf16.mxu0 0
        %1048 = vmatpush1.bf16.msra.mxu0 %v861
        %1049 = vmatprep.subr.bf16.mxu0 0
        %1050 = vmatpush1.bf16.msra.mxu0 %v862
        %1051 = vmatprep.subr.bf16.mxu0 0
        %1052 = vmatpush1.bf16.msra.mxu0 %v863
        %1053 = vmatprep.subr.bf16.mxu0 0
        %1054 = vmatpush1.bf16.msra.mxu0 %v864
        %1055 = vmatprep.subr.bf16.mxu0 0
        %1056 = vmatpush1.bf16.msra.mxu0 %v865
        %1057 = vmatprep.subr.bf16.mxu0 0
        %1058 = vmatpush1.bf16.msra.mxu0 %v866
        %1059 = vmatprep.subr.bf16.mxu0 0
        %1060 = vmatpush1.bf16.msra.mxu0 %v867
        %1061 = vmatprep.subr.bf16.mxu0 0
        %1062 = vmatpush1.bf16.msra.mxu0 0
        %1063 = vmatprep.subr.bf16.mxu0 0
        %1064 = vmatpush1.bf16.msra.mxu0 0
        %1065 = vmatprep.subr.bf16.mxu0 0
        %1066 = vmatpush1.bf16.msra.mxu0 0
        %1067 = vmatprep.subr.bf16.mxu0 0
        %1068 = vmatpush1.bf16.msra.mxu0 0
        %1069 = vmatprep.subr.bf16.mxu0 0
        %1070 = vmatpush1.bf16.msra.mxu0 0
        %1071 = vmatprep.subr.bf16.mxu0 0
        %1072 = vmatpush1.bf16.msra.mxu0 0
        %1073 = vmatprep.subr.bf16.mxu0 0
        %1074 = vmatpush1.bf16.msra.mxu0 0
        %1075 = vmatprep.subr.bf16.mxu0 0
        %1076 = vmatpush1.bf16.msra.mxu0 0
        %1077 = vmatprep.mubr.bf16.mxu0 0
        %1078 = vmatmul.mubr.bf16.gmra.mrb[0].mxu0 %v588
        %v1079 = vpop.f32.mrb[0].mxu0
        %v1080 = vadd.f32 %v927, %v1079
        %v1081 = vpop.f32.mrb[0].mxu0
        %v1082 = vpop.f32.mrb[0].mxu0
        %v1083 = vadd.f32 %v930, %v1082
        %v1084 = vpop.f32.mrb[0].mxu0
        %1085 = vmatprep.mubr.bf16.mxu0 0
        %1086 = vmatmul.mubr.bf16.gmra.mrb[0].mxu0 %v589
        %v1087 = vpop.f32.mrb[0].mxu0
        %v1088 = vadd.f32 %v935, %v1087
        %v1089 = vpop.f32.mrb[0].mxu0
        %v1090 = vpop.f32.mrb[0].mxu0
        %v1091 = vadd.f32 %v938, %v1090
        %v1092 = vpop.f32.mrb[0].mxu0
        %1093 = vmatprep.mubr.bf16.mxu0 0
        %1094 = vmatmul.mubr.bf16.gmra.mrb[0].mxu0 %v590
        %v1095 = vpop.f32.mrb[0].mxu0
        %v1096 = vadd.f32 %v943, %v1095
        %v1097 = vpop.f32.mrb[0].mxu0
        %v1098 = vpop.f32.mrb[0].mxu0
        %v1099 = vadd.f32 %v946, %v1098
        %v1100 = vpop.f32.mrb[0].mxu0
        %1101 = vmatprep.mubr.bf16.mxu0 0
        %1102 = vmatmul.mubr.bf16.gmra.mrb[0].mxu0 %v591
        %v1103 = vpop.f32.mrb[0].mxu0
        %v1104 = vadd.f32 %v951, %v1103
        %v1105 = vpop.f32.mrb[0].mxu0
        %v1106 = vpop.f32.mrb[0].mxu0
        %v1107 = vadd.f32 %v954, %v1106
        %v1108 = vpop.f32.mrb[0].mxu0
        %1109 = vmatprep.mubr.bf16.mxu0 0
        %1110 = vmatmul.mubr.bf16.gmra.mrb[0].mxu0 %v592
        %v1111 = vpop.f32.mrb[0].mxu0
        %v1112 = vadd.f32 %v959, %v1111
        %v1113 = vpop.f32.mrb[0].mxu0
        %v1114 = vpop.f32.mrb[0].mxu0
        %v1115 = vadd.f32 %v962, %v1114
        %v1116 = vpop.f32.mrb[0].mxu0
        %1117 = vmatprep.mubr.bf16.mxu0 0
        %1118 = vmatmul.mubr.bf16.gmra.mrb[0].mxu0 %v593
        %v1119 = vpop.f32.mrb[0].mxu0
        %v1120 = vadd.f32 %v967, %v1119
        %v1121 = vpop.f32.mrb[0].mxu0
        %v1122 = vpop.f32.mrb[0].mxu0
        %v1123 = vadd.f32 %v970, %v1122
        %v1124 = vpop.f32.mrb[0].mxu0
        %1125 = vmatprep.mubr.bf16.mxu0 0
        %1126 = vmatmul.mubr.bf16.gmra.mrb[0].mxu0 %v594
        %v1127 = vpop.f32.mrb[0].mxu0
        %v1128 = vadd.f32 %v975, %v1127
        %v1129 = vpop.f32.mrb[0].mxu0
        %v1130 = vpop.f32.mrb[0].mxu0
        %v1131 = vadd.f32 %v978, %v1130
        %v1132 = vpop.f32.mrb[0].mxu0
        %1133 = vmatprep.mubr.bf16.mxu0 0
        %1134 = vmatmul.mubr.bf16.gmra.mrb[0].mxu0 %v595
        %v1135 = vpop.f32.mrb[0].mxu0
        %v1136 = vadd.f32 %v983, %v1135
        %v1137 = vpop.f32.mrb[0].mxu0
        %v1138 = vpop.f32.mrb[0].mxu0
        %v1139 = vadd.f32 %v986, %v1138
        %v1140 = vpop.f32.mrb[0].mxu0
        %1141 = vmatprep.mubr.bf16.mxu0 0
        %1142 = vmatmul.mubr.bf16.gmra.mrb[0].mxu0 %v596
        %v1143 = vpop.f32.mrb[0].mxu0
        %v1144 = vadd.f32 %v991, %v1143
        %v1145 = vpop.f32.mrb[0].mxu0
        %v1146 = vpop.f32.mrb[0].mxu0
        %v1147 = vadd.f32 %v994, %v1146
        %v1148 = vpop.f32.mrb[0].mxu0
        %1149 = vmatprep.mubr.bf16.mxu0 0
        %1150 = vmatmul.mubr.bf16.gmra.mrb[0].mxu0 %v597
        %v1151 = vpop.f32.mrb[0].mxu0
        %v1152 = vadd.f32 %v999, %v1151
        %v1153 = vpop.f32.mrb[0].mxu0
        %v1154 = vpop.f32.mrb[0].mxu0
        %v1155 = vadd.f32 %v1002, %v1154
        %v1156 = vpop.f32.mrb[0].mxu0
        %1157 = vmatprep.mubr.bf16.mxu0 0
        %1158 = vmatmul.mubr.bf16.gmra.mrb[0].mxu0 %v598
        %v1159 = vpop.f32.mrb[0].mxu0
        %v1160 = vadd.f32 %v1007, %v1159
        %v1161 = vpop.f32.mrb[0].mxu0
        %v1162 = vpop.f32.mrb[0].mxu0
        %v1163 = vadd.f32 %v1010, %v1162
        %v1164 = vpop.f32.mrb[0].mxu0
        %1165 = vmatprep.mubr.bf16.mxu0 0
        %1166 = vmatmul.mubr.bf16.gmra.mrb[0].mxu0 %v599
        %v1167 = vpop.f32.mrb[0].mxu0
        %v1168 = vadd.f32 %v1015, %v1167
        %v1169 = vpop.f32.mrb[0].mxu0
        %v1170 = vpop.f32.mrb[0].mxu0
        %v1171 = vadd.f32 %v1018, %v1170
        %v1172 = vpop.f32.mrb[0].mxu0
        %1173 = vmatprep.mubr.bf16.mxu0 0
        %1174 = vmatmul.mubr.bf16.gmra.mrb[0].mxu0 %v600
        %v1175 = vpop.f32.mrb[0].mxu0
        %v1176 = vadd.f32 %v1023, %v1175
        %v1177 = vpop.f32.mrb[0].mxu0
        %v1178 = vpop.f32.mrb[0].mxu0
        %v1179 = vadd.f32 %v1026, %v1178
        %v1180 = vpop.f32.mrb[0].mxu0
        %1181 = vmatprep.mubr.bf16.mxu0 0
        %1182 = vmatmul.mubr.bf16.gmra.mrb[0].mxu0 %v601
        %v1183 = vpop.f32.mrb[0].mxu0
        %v1184 = vadd.f32 %v1031, %v1183
        %v1185 = vpop.f32.mrb[0].mxu0
        %v1186 = vpop.f32.mrb[0].mxu0
        %v1187 = vadd.f32 %v1034, %v1186
        %v1188 = vpop.f32.mrb[0].mxu0
        %1189 = vmatprep.mubr.bf16.mxu0 0
        %1190 = vmatmul.mubr.bf16.gmra.mrb[0].mxu0 %v602
        %v1191 = vpop.f32.mrb[0].mxu0
        %v1192 = vadd.f32 %v1039, %v1191
        %v1193 = vpop.f32.mrb[0].mxu0
        %v1194 = vpop.f32.mrb[0].mxu0
        %v1195 = vadd.f32 %v1042, %v1194
        %v1196 = vpop.f32.mrb[0].mxu0
        %1197 = vdwg.mxu0
        %v1246 = vunpack.c.l.b16 %v700
        %v1247 = vunpack.c.l.b16 %v701
        %v1248 = vunpack.c.l.b16 %v702
        %v1249 = vunpack.c.l.b16 %v703
        %v1250 = vunpack.c.l.b16 %v704
        %v1251 = vunpack.c.l.b16 %v705
        %v1252 = vunpack.c.l.b16 %v706
        %v1253 = vunpack.c.l.b16 %v707
        %v1254 = vunpack.c.l.b16 %v708
        %v1255 = vunpack.c.l.b16 %v709
        %v1256 = vunpack.c.l.b16 %v710
        %v1257 = vunpack.c.l.b16 %v711
        %v1258 = vunpack.c.l.b16 %v712
        %v1259 = vunpack.c.l.b16 %v713
        %v1260 = vunpack.c.l.b16 %v714
        %v1261 = vunpack.c.l.b16 %v715
        %v1262 = vunpack.c.l.b16 %v716
        %v1263 = vunpack.c.l.b16 %v717
        %v1264 = vunpack.c.l.b16 %v718
        %v1265 = vunpack.c.l.b16 %v719
        %v1266 = vunpack.c.l.b16 %v720
        %v1267 = vunpack.c.l.b16 %v721
        %v1268 = vunpack.c.l.b16 %v722
        %v1269 = vunpack.c.l.b16 %v723
        %v1270 = vunpack.c.l.b16 %v724
        %v1271 = vunpack.c.l.b16 %v725
        %v1272 = vunpack.c.l.b16 %v726
        %v1273 = vunpack.c.l.b16 %v727
        %v1274 = vunpack.c.l.b16 %v728
        %v1275 = vunpack.c.l.b16 %v729
        %v1276 = vunpack.c.l.b16 %v730
        %v1277 = vunpack.c.l.b16 %v731
        %v1278 = vunpack.c.l.b16 %v732
        %v1279 = vunpack.c.l.b16 %v733
        %v1280 = vunpack.c.l.b16 %v734
        %v1281 = vunpack.c.l.b16 %v735
        %v1282 = vunpack.c.l.b16 %v736
        %v1283 = vunpack.c.l.b16 %v737
        %v1284 = vunpack.c.l.b16 %v738
        %v1285 = vunpack.c.l.b16 %v739
        %v1286 = vunpack.c.l.b16 %v740
        %v1287 = vunpack.c.l.b16 %v741
        %v1288 = vunpack.c.l.b16 %v742
        %v1289 = vunpack.c.l.b16 %v743
        %v1290 = vunpack.c.l.b16 %v744
        %v1291 = vunpack.c.l.b16 %v745
        %v1292 = vunpack.c.l.b16 %v746
        %v1293 = vunpack.c.l.b16 %v747
        %v1294 = vpack.c.b16 %v1247, %v1246
        %v1295 = vpack.c.b16 %v1249, %v1248
        %v1296 = vpack.c.b16 %v1251, %v1250
        %v1297 = vpack.c.b16 %v1253, %v1252
        %v1298 = vpack.c.b16 %v1255, %v1254
        %v1299 = vpack.c.b16 %v1257, %v1256
        %v1300 = vpack.c.b16 %v1259, %v1258
        %v1301 = vpack.c.b16 %v1261, %v1260
        %v1302 = vpack.c.b16 %v1263, %v1262
        %v1303 = vpack.c.b16 %v1265, %v1264
        %v1304 = vpack.c.b16 %v1267, %v1266
        %v1305 = vpack.c.b16 %v1269, %v1268
        %v1306 = vpack.c.b16 %v1271, %v1270
        %v1307 = vpack.c.b16 %v1273, %v1272
        %v1308 = vpack.c.b16 %v1275, %v1274
        %v1309 = vpack.c.b16 %v1277, %v1276
        %v1310 = vpack.c.b16 %v1279, %v1278
        %v1311 = vpack.c.b16 %v1281, %v1280
        %v1312 = vpack.c.b16 %v1283, %v1282
        %v1313 = vpack.c.b16 %v1285, %v1284
        %v1314 = vpack.c.b16 %v1287, %v1286
        %v1315 = vpack.c.b16 %v1289, %v1288
        %v1316 = vpack.c.b16 %v1291, %v1290
        %v1317 = vpack.c.b16 %v1293, %v1292
        %1342 = vmatprep.subr.bf16.mxu0 0
        %1343 = vmatpush1.bf16.msra.mxu0 %v1294
        %1344 = vmatprep.subr.bf16.mxu0 0
        %1345 = vmatpush1.bf16.msra.mxu0 %v1295
        %1346 = vmatprep.subr.bf16.mxu0 0
        %1347 = vmatpush1.bf16.msra.mxu0 %v1296
        %1348 = vmatprep.subr.bf16.mxu0 0
        %1349 = vmatpush1.bf16.msra.mxu0 %v1297
        %1350 = vmatprep.subr.bf16.mxu0 0
        %1351 = vmatpush1.bf16.msra.mxu0 %v1298
        %1352 = vmatprep.subr.bf16.mxu0 0
        %1353 = vmatpush1.bf16.msra.mxu0 %v1299
        %1354 = vmatprep.subr.bf16.mxu0 0
        %1355 = vmatpush1.bf16.msra.mxu0 %v1300
        %1356 = vmatprep.subr.bf16.mxu0 0
        %1357 = vmatpush1.bf16.msra.mxu0 %v1301
        %1358 = vmatprep.subr.bf16.mxu0 0
        %1359 = vmatpush1.bf16.msra.mxu0 %v1302
        %1360 = vmatprep.subr.bf16.mxu0 0
        %1361 = vmatpush1.bf16.msra.mxu0 %v1303
        %1362 = vmatprep.subr.bf16.mxu0 0
        %1363 = vmatpush1.bf16.msra.mxu0 %v1304
        %1364 = vmatprep.subr.bf16.mxu0 0
        %1365 = vmatpush1.bf16.msra.mxu0 %v1305
        %1366 = vmatprep.subr.bf16.mxu0 0
        %1367 = vmatpush1.bf16.msra.mxu0 %v1306
        %1368 = vmatprep.subr.bf16.mxu0 0
        %1369 = vmatpush1.bf16.msra.mxu0 %v1307
        %1370 = vmatprep.subr.bf16.mxu0 0
        %1371 = vmatpush1.bf16.msra.mxu0 %v1308
        %1372 = vmatprep.subr.bf16.mxu0 0
        %1373 = vmatpush1.bf16.msra.mxu0 %v1309
        %1374 = vmatprep.mubr.bf16.mxu0 %v573
        %1375 = vmatmul.mubr.bf16.gmra.mrb[0].mxu0 %v557
        %v1376 = vpop.f32.mrb[0].mxu0
        %v1377 = vadd.f32 0.0, %v1376
        %v1378 = vpop.f32.mrb[0].mxu0
        %v1379 = vpop.f32.mrb[0].mxu0
        %v1380 = vadd.f32 0.0, %v1379
        %v1381 = vpop.f32.mrb[0].mxu0
        %1382 = vmatprep.mubr.bf16.mxu0 %v574
        %1383 = vmatmul.mubr.bf16.gmra.mrb[0].mxu0 %v558
        %v1384 = vpop.f32.mrb[0].mxu0
        %v1385 = vadd.f32 0.0, %v1384
        %v1386 = vpop.f32.mrb[0].mxu0
        %v1387 = vpop.f32.mrb[0].mxu0
        %v1388 = vadd.f32 0.0, %v1387
        %v1389 = vpop.f32.mrb[0].mxu0
        %1390 = vmatprep.mubr.bf16.mxu0 %v575
        %1391 = vmatmul.mubr.bf16.gmra.mrb[0].mxu0 %v559
        %v1392 = vpop.f32.mrb[0].mxu0
        %v1393 = vadd.f32 0.0, %v1392
        %v1394 = vpop.f32.mrb[0].mxu0
        %v1395 = vpop.f32.mrb[0].mxu0
        %v1396 = vadd.f32 0.0, %v1395
        %v1397 = vpop.f32.mrb[0].mxu0
        %1398 = vmatprep.mubr.bf16.mxu0 %v576
        %1399 = vmatmul.mubr.bf16.gmra.mrb[0].mxu0 %v560
        %v1400 = vpop.f32.mrb[0].mxu0
        %v1401 = vadd.f32 0.0, %v1400
        %v1402 = vpop.f32.mrb[0].mxu0
        %v1403 = vpop.f32.mrb[0].mxu0
        %v1404 = vadd.f32 0.0, %v1403
        %v1405 = vpop.f32.mrb[0].mxu0
        %1406 = vmatprep.mubr.bf16.mxu0 %v577
        %1407 = vmatmul.mubr.bf16.gmra.mrb[0].mxu0 %v561
        %v1408 = vpop.f32.mrb[0].mxu0
        %v1409 = vadd.f32 0.0, %v1408
        %v1410 = vpop.f32.mrb[0].mxu0
        %v1411 = vpop.f32.mrb[0].mxu0
        %v1412 = vadd.f32 0.0, %v1411
        %v1413 = vpop.f32.mrb[0].mxu0
        %1414 = vmatprep.mubr.bf16.mxu0 %v578
        %1415 = vmatmul.mubr.bf16.gmra.mrb[0].mxu0 %v562
        %v1416 = vpop.f32.mrb[0].mxu0
        %v1417 = vadd.f32 0.0, %v1416
        %v1418 = vpop.f32.mrb[0].mxu0
        %v1419 = vpop.f32.mrb[0].mxu0
        %v1420 = vadd.f32 0.0, %v1419
        %v1421 = vpop.f32.mrb[0].mxu0
        %1422 = vmatprep.mubr.bf16.mxu0 %v579
        %1423 = vmatmul.mubr.bf16.gmra.mrb[0].mxu0 %v563
        %v1424 = vpop.f32.mrb[0].mxu0
        %v1425 = vadd.f32 0.0, %v1424
        %v1426 = vpop.f32.mrb[0].mxu0
        %v1427 = vpop.f32.mrb[0].mxu0
        %v1428 = vadd.f32 0.0, %v1427
        %v1429 = vpop.f32.mrb[0].mxu0
        %1430 = vmatprep.mubr.bf16.mxu0 %v580
        %1431 = vmatmul.mubr.bf16.gmra.mrb[0].mxu0 %v564
        %v1432 = vpop.f32.mrb[0].mxu0
        %v1433 = vadd.f32 0.0, %v1432
        %v1434 = vpop.f32.mrb[0].mxu0
        %v1435 = vpop.f32.mrb[0].mxu0
        %v1436 = vadd.f32 0.0, %v1435
        %v1437 = vpop.f32.mrb[0].mxu0
        %1438 = vmatprep.mubr.bf16.mxu0 %v581
        %1439 = vmatmul.mubr.bf16.gmra.mrb[0].mxu0 %v565
        %v1440 = vpop.f32.mrb[0].mxu0
        %v1441 = vadd.f32 0.0, %v1440
        %v1442 = vpop.f32.mrb[0].mxu0
        %v1443 = vpop.f32.mrb[0].mxu0
        %v1444 = vadd.f32 0.0, %v1443
        %v1445 = vpop.f32.mrb[0].mxu0
        %1446 = vmatprep.mubr.bf16.mxu0 %v582
        %1447 = vmatmul.mubr.bf16.gmra.mrb[0].mxu0 %v566
        %v1448 = vpop.f32.mrb[0].mxu0
        %v1449 = vadd.f32 0.0, %v1448
        %v1450 = vpop.f32.mrb[0].mxu0
        %v1451 = vpop.f32.mrb[0].mxu0
        %v1452 = vadd.f32 0.0, %v1451
        %v1453 = vpop.f32.mrb[0].mxu0
        %1454 = vmatprep.mubr.bf16.mxu0 %v583
        %1455 = vmatmul.mubr.bf16.gmra.mrb[0].mxu0 %v567
        %v1456 = vpop.f32.mrb[0].mxu0
        %v1457 = vadd.f32 0.0, %v1456
        %v1458 = vpop.f32.mrb[0].mxu0
        %v1459 = vpop.f32.mrb[0].mxu0
        %v1460 = vadd.f32 0.0, %v1459
        %v1461 = vpop.f32.mrb[0].mxu0
        %1462 = vmatprep.mubr.bf16.mxu0 %v584
        %1463 = vmatmul.mubr.bf16.gmra.mrb[0].mxu0 %v568
        %v1464 = vpop.f32.mrb[0].mxu0
        %v1465 = vadd.f32 0.0, %v1464
        %v1466 = vpop.f32.mrb[0].mxu0
        %v1467 = vpop.f32.mrb[0].mxu0
        %v1468 = vadd.f32 0.0, %v1467
        %v1469 = vpop.f32.mrb[0].mxu0
        %1470 = vmatprep.mubr.bf16.mxu0 %v585
        %1471 = vmatmul.mubr.bf16.gmra.mrb[0].mxu0 %v569
        %v1472 = vpop.f32.mrb[0].mxu0
        %v1473 = vadd.f32 0.0, %v1472
        %v1474 = vpop.f32.mrb[0].mxu0
        %v1475 = vpop.f32.mrb[0].mxu0
        %v1476 = vadd.f32 0.0, %v1475
        %v1477 = vpop.f32.mrb[0].mxu0
        %1478 = vmatprep.mubr.bf16.mxu0 %v586
        %1479 = vmatmul.mubr.bf16.gmra.mrb[0].mxu0 %v570
        %v1480 = vpop.f32.mrb[0].mxu0
        %v1481 = vadd.f32 0.0, %v1480
        %v1482 = vpop.f32.mrb[0].mxu0
        %v1483 = vpop.f32.mrb[0].mxu0
        %v1484 = vadd.f32 0.0, %v1483
        %v1485 = vpop.f32.mrb[0].mxu0
        %1486 = vmatprep.mubr.bf16.mxu0 %v587
        %1487 = vmatmul.mubr.bf16.gmra.mrb[0].mxu0 %v571
        %v1488 = vpop.f32.mrb[0].mxu0
        %v1489 = vadd.f32 0.0, %v1488
        %v1490 = vpop.f32.mrb[0].mxu0
        %v1491 = vpop.f32.mrb[0].mxu0
        %v1492 = vadd.f32 0.0, %v1491
        %v1493 = vpop.f32.mrb[0].mxu0
        %1494 = vdwg.mxu0
        %1495 = vmatprep.subr.bf16.mxu0 0
        %1496 = vmatpush1.bf16.msra.mxu0 %v1310
        %1497 = vmatprep.subr.bf16.mxu0 0
        %1498 = vmatpush1.bf16.msra.mxu0 %v1311
        %1499 = vmatprep.subr.bf16.mxu0 0
        %1500 = vmatpush1.bf16.msra.mxu0 %v1312
        %1501 = vmatprep.subr.bf16.mxu0 0
        %1502 = vmatpush1.bf16.msra.mxu0 %v1313
        %1503 = vmatprep.subr.bf16.mxu0 0
        %1504 = vmatpush1.bf16.msra.mxu0 %v1314
        %1505 = vmatprep.subr.bf16.mxu0 0
        %1506 = vmatpush1.bf16.msra.mxu0 %v1315
        %1507 = vmatprep.subr.bf16.mxu0 0
        %1508 = vmatpush1.bf16.msra.mxu0 %v1316
        %1509 = vmatprep.subr.bf16.mxu0 0
        %1510 = vmatpush1.bf16.msra.mxu0 %v1317
        %1511 = vmatprep.subr.bf16.mxu0 0
        %1512 = vmatpush1.bf16.msra.mxu0 0
        %1513 = vmatprep.subr.bf16.mxu0 0
        %1514 = vmatpush1.bf16.msra.mxu0 0
        %1515 = vmatprep.subr.bf16.mxu0 0
        %1516 = vmatpush1.bf16.msra.mxu0 0
        %1517 = vmatprep.subr.bf16.mxu0 0
        %1518 = vmatpush1.bf16.msra.mxu0 0
        %1519 = vmatprep.subr.bf16.mxu0 0
        %1520 = vmatpush1.bf16.msra.mxu0 0
        %1521 = vmatprep.subr.bf16.mxu0 0
        %1522 = vmatpush1.bf16.msra.mxu0 0
        %1523 = vmatprep.subr.bf16.mxu0 0
        %1524 = vmatpush1.bf16.msra.mxu0 0
        %1525 = vmatprep.subr.bf16.mxu0 0
        %1526 = vmatpush1.bf16.msra.mxu0 0
        %1527 = vmatprep.mubr.bf16.mxu0 0
        %1528 = vmatmul.mubr.bf16.gmra.mrb[0].mxu0 %v589
        %v1529 = vpop.f32.mrb[0].mxu0
        %v1530 = vadd.f32 %v1377, %v1529
        %v1531 = vpop.f32.mrb[0].mxu0
        %v1532 = vpop.f32.mrb[0].mxu0
        %v1533 = vadd.f32 %v1380, %v1532
        %v1534 = vpop.f32.mrb[0].mxu0
        %1535 = vmatprep.mubr.bf16.mxu0 0
        %1536 = vmatmul.mubr.bf16.gmra.mrb[0].mxu0 %v590
        %v1537 = vpop.f32.mrb[0].mxu0
        %v1538 = vadd.f32 %v1385, %v1537
        %v1539 = vpop.f32.mrb[0].mxu0
        %v1540 = vpop.f32.mrb[0].mxu0
        %v1541 = vadd.f32 %v1388, %v1540
        %v1542 = vpop.f32.mrb[0].mxu0
        %1543 = vmatprep.mubr.bf16.mxu0 0
        %1544 = vmatmul.mubr.bf16.gmra.mrb[0].mxu0 %v591
        %v1545 = vpop.f32.mrb[0].mxu0
        %v1546 = vadd.f32 %v1393, %v1545
        %v1547 = vpop.f32.mrb[0].mxu0
        %v1548 = vpop.f32.mrb[0].mxu0
        %v1549 = vadd.f32 %v1396, %v1548
        %v1550 = vpop.f32.mrb[0].mxu0
        %1551 = vmatprep.mubr.bf16.mxu0 0
        %1552 = vmatmul.mubr.bf16.gmra.mrb[0].mxu0 %v592
        %v1553 = vpop.f32.mrb[0].mxu0
        %v1554 = vadd.f32 %v1401, %v1553
        %v1555 = vpop.f32.mrb[0].mxu0
        %v1556 = vpop.f32.mrb[0].mxu0
        %v1557 = vadd.f32 %v1404, %v1556
        %v1558 = vpop.f32.mrb[0].mxu0
        %1559 = vmatprep.mubr.bf16.mxu0 0
        %1560 = vmatmul.mubr.bf16.gmra.mrb[0].mxu0 %v593
        %v1561 = vpop.f32.mrb[0].mxu0
        %v1562 = vadd.f32 %v1409, %v1561
        %v1563 = vpop.f32.mrb[0].mxu0
        %v1564 = vpop.f32.mrb[0].mxu0
        %v1565 = vadd.f32 %v1412, %v1564
        %v1566 = vpop.f32.mrb[0].mxu0
        %1567 = vmatprep.mubr.bf16.mxu0 0
        %1568 = vmatmul.mubr.bf16.gmra.mrb[0].mxu0 %v594
        %v1569 = vpop.f32.mrb[0].mxu0
        %v1570 = vadd.f32 %v1417, %v1569
        %v1571 = vpop.f32.mrb[0].mxu0
        %v1572 = vpop.f32.mrb[0].mxu0
        %v1573 = vadd.f32 %v1420, %v1572
        %v1574 = vpop.f32.mrb[0].mxu0
        %1575 = vmatprep.mubr.bf16.mxu0 0
        %1576 = vmatmul.mubr.bf16.gmra.mrb[0].mxu0 %v595
        %v1577 = vpop.f32.mrb[0].mxu0
        %v1578 = vadd.f32 %v1425, %v1577
        %v1579 = vpop.f32.mrb[0].mxu0
        %v1580 = vpop.f32.mrb[0].mxu0
        %v1581 = vadd.f32 %v1428, %v1580
        %v1582 = vpop.f32.mrb[0].mxu0
        %1583 = vmatprep.mubr.bf16.mxu0 0
        %1584 = vmatmul.mubr.bf16.gmra.mrb[0].mxu0 %v596
        %v1585 = vpop.f32.mrb[0].mxu0
        %v1586 = vadd.f32 %v1433, %v1585
        %v1587 = vpop.f32.mrb[0].mxu0
        %v1588 = vpop.f32.mrb[0].mxu0
        %v1589 = vadd.f32 %v1436, %v1588
        %v1590 = vpop.f32.mrb[0].mxu0
        %1591 = vmatprep.mubr.bf16.mxu0 0
        %1592 = vmatmul.mubr.bf16.gmra.mrb[0].mxu0 %v597
        %v1593 = vpop.f32.mrb[0].mxu0
        %v1594 = vadd.f32 %v1441, %v1593
        %v1595 = vpop.f32.mrb[0].mxu0
        %v1596 = vpop.f32.mrb[0].mxu0
        %v1597 = vadd.f32 %v1444, %v1596
        %v1598 = vpop.f32.mrb[0].mxu0
        %1599 = vmatprep.mubr.bf16.mxu0 0
        %1600 = vmatmul.mubr.bf16.gmra.mrb[0].mxu0 %v598
        %v1601 = vpop.f32.mrb[0].mxu0
        %v1602 = vadd.f32 %v1449, %v1601
        %v1603 = vpop.f32.mrb[0].mxu0
        %v1604 = vpop.f32.mrb[0].mxu0
        %v1605 = vadd.f32 %v1452, %v1604
        %v1606 = vpop.f32.mrb[0].mxu0
        %1607 = vmatprep.mubr.bf16.mxu0 0
        %1608 = vmatmul.mubr.bf16.gmra.mrb[0].mxu0 %v599
        %v1609 = vpop.f32.mrb[0].mxu0
        %v1610 = vadd.f32 %v1457, %v1609
        %v1611 = vpop.f32.mrb[0].mxu0
        %v1612 = vpop.f32.mrb[0].mxu0
        %v1613 = vadd.f32 %v1460, %v1612
        %v1614 = vpop.f32.mrb[0].mxu0
        %1615 = vmatprep.mubr.bf16.mxu0 0
        %1616 = vmatmul.mubr.bf16.gmra.mrb[0].mxu0 %v600
        %v1617 = vpop.f32.mrb[0].mxu0
        %v1618 = vadd.f32 %v1465, %v1617
        %v1619 = vpop.f32.mrb[0].mxu0
        %v1620 = vpop.f32.mrb[0].mxu0
        %v1621 = vadd.f32 %v1468, %v1620
        %v1622 = vpop.f32.mrb[0].mxu0
        %1623 = vmatprep.mubr.bf16.mxu0 0
        %1624 = vmatmul.mubr.bf16.gmra.mrb[0].mxu0 %v601
        %v1625 = vpop.f32.mrb[0].mxu0
        %v1626 = vadd.f32 %v1473, %v1625
        %v1627 = vpop.f32.mrb[0].mxu0
        %v1628 = vpop.f32.mrb[0].mxu0
        %v1629 = vadd.f32 %v1476, %v1628
        %v1630 = vpop.f32.mrb[0].mxu0
        %1631 = vmatprep.mubr.bf16.mxu0 0
        %1632 = vmatmul.mubr.bf16.gmra.mrb[0].mxu0 %v602
        %v1633 = vpop.f32.mrb[0].mxu0
        %v1634 = vadd.f32 %v1481, %v1633
        %v1635 = vpop.f32.mrb[0].mxu0
        %v1636 = vpop.f32.mrb[0].mxu0
        %v1637 = vadd.f32 %v1484, %v1636
        %v1638 = vpop.f32.mrb[0].mxu0
        %1639 = vmatprep.mubr.bf16.mxu0 0
        %1640 = vmatmul.mubr.bf16.gmra.mrb[0].mxu0 %v603
        %v1641 = vpop.f32.mrb[0].mxu0
        %v1642 = vadd.f32 %v1489, %v1641
        %v1643 = vpop.f32.mrb[0].mxu0
        %v1644 = vpop.f32.mrb[0].mxu0
        %v1645 = vadd.f32 %v1492, %v1644
        %v1646 = vpop.f32.mrb[0].mxu0
        %1647 = vdwg.mxu0
        %v1696 = vunpack.c.l.b16 %v652
        %v1697 = vunpack.c.l.b16 %v653
        %v1698 = vunpack.c.l.b16 %v654
        %v1699 = vunpack.c.l.b16 %v655
        %v1700 = vunpack.c.l.b16 %v656
        %v1701 = vunpack.c.l.b16 %v657
        %v1702 = vunpack.c.l.b16 %v658
        %v1703 = vunpack.c.l.b16 %v659
        %v1704 = vunpack.c.l.b16 %v660
        %v1705 = vunpack.c.l.b16 %v661
        %v1706 = vunpack.c.l.b16 %v662
        %v1707 = vunpack.c.l.b16 %v663
        %v1708 = vunpack.c.l.b16 %v664
        %v1709 = vunpack.c.l.b16 %v665
        %v1710 = vunpack.c.l.b16 %v666
        %v1711 = vunpack.c.l.b16 %v667
        %v1712 = vunpack.c.l.b16 %v668
        %v1713 = vunpack.c.l.b16 %v669
        %v1714 = vunpack.c.l.b16 %v670
        %v1715 = vunpack.c.l.b16 %v671
        %v1716 = vunpack.c.l.b16 %v672
        %v1717 = vunpack.c.l.b16 %v673
        %v1718 = vunpack.c.l.b16 %v674
        %v1719 = vunpack.c.l.b16 %v675
        %v1720 = vunpack.c.l.b16 %v676
        %v1721 = vunpack.c.l.b16 %v677
        %v1722 = vunpack.c.l.b16 %v678
        %v1723 = vunpack.c.l.b16 %v679
        %v1724 = vunpack.c.l.b16 %v680
        %v1725 = vunpack.c.l.b16 %v681
        %v1726 = vunpack.c.l.b16 %v682
        %v1727 = vunpack.c.l.b16 %v683
        %v1728 = vunpack.c.l.b16 %v684
        %v1729 = vunpack.c.l.b16 %v685
        %v1730 = vunpack.c.l.b16 %v686
        %v1731 = vunpack.c.l.b16 %v687
        %v1732 = vunpack.c.l.b16 %v688
        %v1733 = vunpack.c.l.b16 %v689
        %v1734 = vunpack.c.l.b16 %v690
        %v1735 = vunpack.c.l.b16 %v691
        %v1736 = vunpack.c.l.b16 %v692
        %v1737 = vunpack.c.l.b16 %v693
        %v1738 = vunpack.c.l.b16 %v694
        %v1739 = vunpack.c.l.b16 %v695
        %v1740 = vunpack.c.l.b16 %v696
        %v1741 = vunpack.c.l.b16 %v697
        %v1742 = vunpack.c.l.b16 %v698
        %v1743 = vunpack.c.l.b16 %v699
        %v1744 = vpack.c.b16 %v1697, %v1696
        %v1745 = vpack.c.b16 %v1699, %v1698
        %v1746 = vpack.c.b16 %v1701, %v1700
        %v1747 = vpack.c.b16 %v1703, %v1702
        %v1748 = vpack.c.b16 %v1705, %v1704
        %v1749 = vpack.c.b16 %v1707, %v1706
        %v1750 = vpack.c.b16 %v1709, %v1708
        %v1751 = vpack.c.b16 %v1711, %v1710
        %v1752 = vpack.c.b16 %v1713, %v1712
        %v1753 = vpack.c.b16 %v1715, %v1714
        %v1754 = vpack.c.b16 %v1717, %v1716
        %v1755 = vpack.c.b16 %v1719, %v1718
        %v1756 = vpack.c.b16 %v1721, %v1720
        %v1757 = vpack.c.b16 %v1723, %v1722
        %v1758 = vpack.c.b16 %v1725, %v1724
        %v1759 = vpack.c.b16 %v1727, %v1726
        %v1760 = vpack.c.b16 %v1729, %v1728
        %v1761 = vpack.c.b16 %v1731, %v1730
        %v1762 = vpack.c.b16 %v1733, %v1732
        %v1763 = vpack.c.b16 %v1735, %v1734
        %v1764 = vpack.c.b16 %v1737, %v1736
        %v1765 = vpack.c.b16 %v1739, %v1738
        %v1766 = vpack.c.b16 %v1741, %v1740
        %v1767 = vpack.c.b16 %v1743, %v1742
        %1792 = vmatprep.subr.bf16.mxu0 0
        %1793 = vmatpush1.bf16.msra.mxu0 %v1744
        %1794 = vmatprep.subr.bf16.mxu0 0
        %1795 = vmatpush1.bf16.msra.mxu0 %v1745
        %1796 = vmatprep.subr.bf16.mxu0 0
        %1797 = vmatpush1.bf16.msra.mxu0 %v1746
        %1798 = vmatprep.subr.bf16.mxu0 0
        %1799 = vmatpush1.bf16.msra.mxu0 %v1747
        %1800 = vmatprep.subr.bf16.mxu0 0
        %1801 = vmatpush1.bf16.msra.mxu0 %v1748
        %1802 = vmatprep.subr.bf16.mxu0 0
        %1803 = vmatpush1.bf16.msra.mxu0 %v1749
        %1804 = vmatprep.subr.bf16.mxu0 0
        %1805 = vmatpush1.bf16.msra.mxu0 %v1750
        %1806 = vmatprep.subr.bf16.mxu0 0
        %1807 = vmatpush1.bf16.msra.mxu0 %v1751
        %1808 = vmatprep.subr.bf16.mxu0 0
        %1809 = vmatpush1.bf16.msra.mxu0 %v1752
        %1810 = vmatprep.subr.bf16.mxu0 0
        %1811 = vmatpush1.bf16.msra.mxu0 %v1753
        %1812 = vmatprep.subr.bf16.mxu0 0
        %1813 = vmatpush1.bf16.msra.mxu0 %v1754
        %1814 = vmatprep.subr.bf16.mxu0 0
        %1815 = vmatpush1.bf16.msra.mxu0 %v1755
        %1816 = vmatprep.subr.bf16.mxu0 0
        %1817 = vmatpush1.bf16.msra.mxu0 %v1756
        %1818 = vmatprep.subr.bf16.mxu0 0
        %1819 = vmatpush1.bf16.msra.mxu0 %v1757
        %1820 = vmatprep.subr.bf16.mxu0 0
        %1821 = vmatpush1.bf16.msra.mxu0 %v1758
        %1822 = vmatprep.subr.bf16.mxu0 0
        %1823 = vmatpush1.bf16.msra.mxu0 %v1759
        %1824 = vmatprep.mubr.bf16.mxu0 %v572
        %1825 = vmatmul.mubr.bf16.gmra.mrb[0].mxu0 %v556
        %v1826 = vpop.f32.mrb[0].mxu0
        %v1827 = vadd.f32 0.0, %v1826
        %v1828 = vpop.f32.mrb[0].mxu0
        %v1829 = vpop.f32.mrb[0].mxu0
        %v1830 = vadd.f32 0.0, %v1829
        %v1831 = vpop.f32.mrb[0].mxu0
        %1832 = vmatprep.mubr.bf16.mxu0 %v573
        %1833 = vmatmul.mubr.bf16.gmra.mrb[0].mxu0 %v557
        %v1834 = vpop.f32.mrb[0].mxu0
        %v1835 = vadd.f32 %v1080, %v1834
        %v1836 = vpop.f32.mrb[0].mxu0
        %v1837 = vpop.f32.mrb[0].mxu0
        %v1838 = vadd.f32 %v1083, %v1837
        %v1839 = vpop.f32.mrb[0].mxu0
        %1840 = vmatprep.mubr.bf16.mxu0 %v574
        %1841 = vmatmul.mubr.bf16.gmra.mrb[0].mxu0 %v558
        %v1842 = vpop.f32.mrb[0].mxu0
        %v1843 = vadd.f32 %v1088, %v1842
        %v1844 = vpop.f32.mrb[0].mxu0
        %v1845 = vpop.f32.mrb[0].mxu0
        %v1846 = vadd.f32 %v1091, %v1845
        %v1847 = vpop.f32.mrb[0].mxu0
        %1848 = vmatprep.mubr.bf16.mxu0 %v575
        %1849 = vmatmul.mubr.bf16.gmra.mrb[0].mxu0 %v559
        %v1850 = vpop.f32.mrb[0].mxu0
        %v1851 = vadd.f32 %v1096, %v1850
        %v1852 = vpop.f32.mrb[0].mxu0
        %v1853 = vpop.f32.mrb[0].mxu0
        %v1854 = vadd.f32 %v1099, %v1853
        %v1855 = vpop.f32.mrb[0].mxu0
        %1856 = vmatprep.mubr.bf16.mxu0 %v576
        %1857 = vmatmul.mubr.bf16.gmra.mrb[0].mxu0 %v560
        %v1858 = vpop.f32.mrb[0].mxu0
        %v1859 = vadd.f32 %v1104, %v1858
        %v1860 = vpop.f32.mrb[0].mxu0
        %v1861 = vpop.f32.mrb[0].mxu0
        %v1862 = vadd.f32 %v1107, %v1861
        %v1863 = vpop.f32.mrb[0].mxu0
        %1864 = vmatprep.mubr.bf16.mxu0 %v577
        %1865 = vmatmul.mubr.bf16.gmra.mrb[0].mxu0 %v561
        %v1866 = vpop.f32.mrb[0].mxu0
        %v1867 = vadd.f32 %v1112, %v1866
        %v1868 = vpop.f32.mrb[0].mxu0
        %v1869 = vpop.f32.mrb[0].mxu0
        %v1870 = vadd.f32 %v1115, %v1869
        %v1871 = vpop.f32.mrb[0].mxu0
        %1872 = vmatprep.mubr.bf16.mxu0 %v578
        %1873 = vmatmul.mubr.bf16.gmra.mrb[0].mxu0 %v562
        %v1874 = vpop.f32.mrb[0].mxu0
        %v1875 = vadd.f32 %v1120, %v1874
        %v1876 = vpop.f32.mrb[0].mxu0
        %v1877 = vpop.f32.mrb[0].mxu0
        %v1878 = vadd.f32 %v1123, %v1877
        %v1879 = vpop.f32.mrb[0].mxu0
        %1880 = vmatprep.mubr.bf16.mxu0 %v579
        %1881 = vmatmul.mubr.bf16.gmra.mrb[0].mxu0 %v563
        %v1882 = vpop.f32.mrb[0].mxu0
        %v1883 = vadd.f32 %v1128, %v1882
        %v1884 = vpop.f32.mrb[0].mxu0
        %v1885 = vpop.f32.mrb[0].mxu0
        %v1886 = vadd.f32 %v1131, %v1885
        %v1887 = vpop.f32.mrb[0].mxu0
        %1888 = vmatprep.mubr.bf16.mxu0 %v580
        %1889 = vmatmul.mubr.bf16.gmra.mrb[0].mxu0 %v564
        %v1890 = vpop.f32.mrb[0].mxu0
        %v1891 = vadd.f32 %v1136, %v1890
        %v1892 = vpop.f32.mrb[0].mxu0
        %v1893 = vpop.f32.mrb[0].mxu0
        %v1894 = vadd.f32 %v1139, %v1893
        %v1895 = vpop.f32.mrb[0].mxu0
        %1896 = vmatprep.mubr.bf16.mxu0 %v581
        %1897 = vmatmul.mubr.bf16.gmra.mrb[0].mxu0 %v565
        %v1898 = vpop.f32.mrb[0].mxu0
        %v1899 = vadd.f32 %v1144, %v1898
        %v1900 = vpop.f32.mrb[0].mxu0
        %v1901 = vpop.f32.mrb[0].mxu0
        %v1902 = vadd.f32 %v1147, %v1901
        %v1903 = vpop.f32.mrb[0].mxu0
        %1904 = vmatprep.mubr.bf16.mxu0 %v582
        %1905 = vmatmul.mubr.bf16.gmra.mrb[0].mxu0 %v566
        %v1906 = vpop.f32.mrb[0].mxu0
        %v1907 = vadd.f32 %v1152, %v1906
        %v1908 = vpop.f32.mrb[0].mxu0
        %v1909 = vpop.f32.mrb[0].mxu0
        %v1910 = vadd.f32 %v1155, %v1909
        %v1911 = vpop.f32.mrb[0].mxu0
        %1912 = vmatprep.mubr.bf16.mxu0 %v583
        %1913 = vmatmul.mubr.bf16.gmra.mrb[0].mxu0 %v567
        %v1914 = vpop.f32.mrb[0].mxu0
        %v1915 = vadd.f32 %v1160, %v1914
        %v1916 = vpop.f32.mrb[0].mxu0
        %v1917 = vpop.f32.mrb[0].mxu0
        %v1918 = vadd.f32 %v1163, %v1917
        %v1919 = vpop.f32.mrb[0].mxu0
        %1920 = vmatprep.mubr.bf16.mxu0 %v584
        %1921 = vmatmul.mubr.bf16.gmra.mrb[0].mxu0 %v568
        %v1922 = vpop.f32.mrb[0].mxu0
        %v1923 = vadd.f32 %v1168, %v1922
        %v1924 = vpop.f32.mrb[0].mxu0
        %v1925 = vpop.f32.mrb[0].mxu0
        %v1926 = vadd.f32 %v1171, %v1925
        %v1927 = vpop.f32.mrb[0].mxu0
        %1928 = vmatprep.mubr.bf16.mxu0 %v585
        %1929 = vmatmul.mubr.bf16.gmra.mrb[0].mxu0 %v569
        %v1930 = vpop.f32.mrb[0].mxu0
        %v1931 = vadd.f32 %v1176, %v1930
        %v1932 = vpop.f32.mrb[0].mxu0
        %v1933 = vpop.f32.mrb[0].mxu0
        %v1934 = vadd.f32 %v1179, %v1933
        %v1935 = vpop.f32.mrb[0].mxu0
        %1936 = vmatprep.mubr.bf16.mxu0 %v586
        %1937 = vmatmul.mubr.bf16.gmra.mrb[0].mxu0 %v570
        %v1938 = vpop.f32.mrb[0].mxu0
        %v1939 = vadd.f32 %v1184, %v1938
        %v1940 = vpop.f32.mrb[0].mxu0
        %v1941 = vpop.f32.mrb[0].mxu0
        %v1942 = vadd.f32 %v1187, %v1941
        %v1943 = vpop.f32.mrb[0].mxu0
        %1944 = vmatprep.mubr.bf16.mxu0 %v587
        %1945 = vmatmul.mubr.bf16.gmra.mrb[0].mxu0 %v571
        %v1946 = vpop.f32.mrb[0].mxu0
        %v1947 = vadd.f32 %v1192, %v1946
        %v1948 = vpop.f32.mrb[0].mxu0
        %v1949 = vpop.f32.mrb[0].mxu0
        %v1950 = vadd.f32 %v1195, %v1949
        %v1951 = vpop.f32.mrb[0].mxu0
        %1952 = vdwg.mxu0
        %1953 = vmatprep.subr.bf16.mxu0 0
        %1954 = vmatpush1.bf16.msra.mxu0 %v1760
        %1955 = vmatprep.subr.bf16.mxu0 0
        %1956 = vmatpush1.bf16.msra.mxu0 %v1761
        %1957 = vmatprep.subr.bf16.mxu0 0
        %1958 = vmatpush1.bf16.msra.mxu0 %v1762
        %1959 = vmatprep.subr.bf16.mxu0 0
        %1960 = vmatpush1.bf16.msra.mxu0 %v1763
        %1961 = vmatprep.subr.bf16.mxu0 0
        %1962 = vmatpush1.bf16.msra.mxu0 %v1764
        %1963 = vmatprep.subr.bf16.mxu0 0
        %1964 = vmatpush1.bf16.msra.mxu0 %v1765
        %1965 = vmatprep.subr.bf16.mxu0 0
        %1966 = vmatpush1.bf16.msra.mxu0 %v1766
        %1967 = vmatprep.subr.bf16.mxu0 0
        %1968 = vmatpush1.bf16.msra.mxu0 %v1767
        %1969 = vmatprep.subr.bf16.mxu0 0
        %1970 = vmatpush1.bf16.msra.mxu0 0
        %1971 = vmatprep.subr.bf16.mxu0 0
        %1972 = vmatpush1.bf16.msra.mxu0 0
        %1973 = vmatprep.subr.bf16.mxu0 0
        %1974 = vmatpush1.bf16.msra.mxu0 0
        %1975 = vmatprep.subr.bf16.mxu0 0
        %1976 = vmatpush1.bf16.msra.mxu0 0
        %1977 = vmatprep.subr.bf16.mxu0 0
        %1978 = vmatpush1.bf16.msra.mxu0 0
        %1979 = vmatprep.subr.bf16.mxu0 0
        %1980 = vmatpush1.bf16.msra.mxu0 0
        %1981 = vmatprep.subr.bf16.mxu0 0
        %1982 = vmatpush1.bf16.msra.mxu0 0
        %1983 = vmatprep.subr.bf16.mxu0 0
        %1984 = vmatpush1.bf16.msra.mxu0 0
        %1985 = vmatprep.mubr.bf16.mxu0 0
        %1986 = vmatmul.mubr.bf16.gmra.mrb[0].mxu0 %v588
        %v1987 = vpop.f32.mrb[0].mxu0
        %v1988 = vadd.f32 %v1827, %v1987
        %v1989 = vpop.f32.mrb[0].mxu0
        %v1990 = vpop.f32.mrb[0].mxu0
        %v1991 = vadd.f32 %v1830, %v1990
        %v1992 = vpop.f32.mrb[0].mxu0
        %1993 = vmatprep.mubr.bf16.mxu0 0
        %1994 = vmatmul.mubr.bf16.gmra.mrb[0].mxu0 %v589
        %v1995 = vpop.f32.mrb[0].mxu0
        %v1996 = vadd.f32 %v1835, %v1995
        %v1997 = vpop.f32.mrb[0].mxu0
        %v1998 = vpop.f32.mrb[0].mxu0
        %v1999 = vadd.f32 %v1838, %v1998
        %v2000 = vpop.f32.mrb[0].mxu0
        %2001 = vmatprep.mubr.bf16.mxu0 0
        %2002 = vmatmul.mubr.bf16.gmra.mrb[0].mxu0 %v590
        %v2003 = vpop.f32.mrb[0].mxu0
        %v2004 = vadd.f32 %v1843, %v2003
        %v2005 = vpop.f32.mrb[0].mxu0
        %v2006 = vpop.f32.mrb[0].mxu0
        %v2007 = vadd.f32 %v1846, %v2006
        %v2008 = vpop.f32.mrb[0].mxu0
        %2009 = vmatprep.mubr.bf16.mxu0 0
        %2010 = vmatmul.mubr.bf16.gmra.mrb[0].mxu0 %v591
        %v2011 = vpop.f32.mrb[0].mxu0
        %v2012 = vadd.f32 %v1851, %v2011
        %v2013 = vpop.f32.mrb[0].mxu0
        %v2014 = vpop.f32.mrb[0].mxu0
        %v2015 = vadd.f32 %v1854, %v2014
        %v2016 = vpop.f32.mrb[0].mxu0
        %2017 = vmatprep.mubr.bf16.mxu0 0
        %2018 = vmatmul.mubr.bf16.gmra.mrb[0].mxu0 %v592
        %v2019 = vpop.f32.mrb[0].mxu0
        %v2020 = vadd.f32 %v1859, %v2019
        %v2021 = vpop.f32.mrb[0].mxu0
        %v2022 = vpop.f32.mrb[0].mxu0
        %v2023 = vadd.f32 %v1862, %v2022
        %v2024 = vpop.f32.mrb[0].mxu0
        %2025 = vmatprep.mubr.bf16.mxu0 0
        %2026 = vmatmul.mubr.bf16.gmra.mrb[0].mxu0 %v593
        %v2027 = vpop.f32.mrb[0].mxu0
        %v2028 = vadd.f32 %v1867, %v2027
        %v2029 = vpop.f32.mrb[0].mxu0
        %v2030 = vpop.f32.mrb[0].mxu0
        %v2031 = vadd.f32 %v1870, %v2030
        %v2032 = vpop.f32.mrb[0].mxu0
        %2033 = vmatprep.mubr.bf16.mxu0 0
        %2034 = vmatmul.mubr.bf16.gmra.mrb[0].mxu0 %v594
        %v2035 = vpop.f32.mrb[0].mxu0
        %v2036 = vadd.f32 %v1875, %v2035
        %v2037 = vpop.f32.mrb[0].mxu0
        %v2038 = vpop.f32.mrb[0].mxu0
        %v2039 = vadd.f32 %v1878, %v2038
        %v2040 = vpop.f32.mrb[0].mxu0
        %2041 = vmatprep.mubr.bf16.mxu0 0
        %2042 = vmatmul.mubr.bf16.gmra.mrb[0].mxu0 %v595
        %v2043 = vpop.f32.mrb[0].mxu0
        %v2044 = vadd.f32 %v1883, %v2043
        %v2045 = vpop.f32.mrb[0].mxu0
        %v2046 = vpop.f32.mrb[0].mxu0
        %v2047 = vadd.f32 %v1886, %v2046
        %v2048 = vpop.f32.mrb[0].mxu0
        %2049 = vmatprep.mubr.bf16.mxu0 0
        %2050 = vmatmul.mubr.bf16.gmra.mrb[0].mxu0 %v596
        %v2051 = vpop.f32.mrb[0].mxu0
        %v2052 = vadd.f32 %v1891, %v2051
        %v2053 = vpop.f32.mrb[0].mxu0
        %v2054 = vpop.f32.mrb[0].mxu0
        %v2055 = vadd.f32 %v1894, %v2054
        %v2056 = vpop.f32.mrb[0].mxu0
        %2057 = vmatprep.mubr.bf16.mxu0 0
        %2058 = vmatmul.mubr.bf16.gmra.mrb[0].mxu0 %v597
        %v2059 = vpop.f32.mrb[0].mxu0
        %v2060 = vadd.f32 %v1899, %v2059
        %v2061 = vpop.f32.mrb[0].mxu0
        %v2062 = vpop.f32.mrb[0].mxu0
        %v2063 = vadd.f32 %v1902, %v2062
        %v2064 = vpop.f32.mrb[0].mxu0
        %2065 = vmatprep.mubr.bf16.mxu0 0
        %2066 = vmatmul.mubr.bf16.gmra.mrb[0].mxu0 %v598
        %v2067 = vpop.f32.mrb[0].mxu0
        %v2068 = vadd.f32 %v1907, %v2067
        %v2069 = vpop.f32.mrb[0].mxu0
        %v2070 = vpop.f32.mrb[0].mxu0
        %v2071 = vadd.f32 %v1910, %v2070
        %v2072 = vpop.f32.mrb[0].mxu0
        %2073 = vmatprep.mubr.bf16.mxu0 0
        %2074 = vmatmul.mubr.bf16.gmra.mrb[0].mxu0 %v599
        %v2075 = vpop.f32.mrb[0].mxu0
        %v2076 = vadd.f32 %v1915, %v2075
        %v2077 = vpop.f32.mrb[0].mxu0
        %v2078 = vpop.f32.mrb[0].mxu0
        %v2079 = vadd.f32 %v1918, %v2078
        %v2080 = vpop.f32.mrb[0].mxu0
        %2081 = vmatprep.mubr.bf16.mxu0 0
        %2082 = vmatmul.mubr.bf16.gmra.mrb[0].mxu0 %v600
        %v2083 = vpop.f32.mrb[0].mxu0
        %v2084 = vadd.f32 %v1923, %v2083
        %v2085 = vpop.f32.mrb[0].mxu0
        %v2086 = vpop.f32.mrb[0].mxu0
        %v2087 = vadd.f32 %v1926, %v2086
        %v2088 = vpop.f32.mrb[0].mxu0
        %2089 = vmatprep.mubr.bf16.mxu0 0
        %2090 = vmatmul.mubr.bf16.gmra.mrb[0].mxu0 %v601
        %v2091 = vpop.f32.mrb[0].mxu0
        %v2092 = vadd.f32 %v1931, %v2091
        %v2093 = vpop.f32.mrb[0].mxu0
        %v2094 = vpop.f32.mrb[0].mxu0
        %v2095 = vadd.f32 %v1934, %v2094
        %v2096 = vpop.f32.mrb[0].mxu0
        %2097 = vmatprep.mubr.bf16.mxu0 0
        %2098 = vmatmul.mubr.bf16.gmra.mrb[0].mxu0 %v602
        %v2099 = vpop.f32.mrb[0].mxu0
        %v2100 = vadd.f32 %v1939, %v2099
        %v2101 = vpop.f32.mrb[0].mxu0
        %v2102 = vpop.f32.mrb[0].mxu0
        %v2103 = vadd.f32 %v1942, %v2102
        %v2104 = vpop.f32.mrb[0].mxu0
        %2105 = vmatprep.mubr.bf16.mxu0 0
        %2106 = vmatmul.mubr.bf16.gmra.mrb[0].mxu0 %v603
        %v2107 = vpop.f32.mrb[0].mxu0
        %v2108 = vadd.f32 %v1947, %v2107
        %v2109 = vpop.f32.mrb[0].mxu0
        %v2110 = vpop.f32.mrb[0].mxu0
        %v2111 = vadd.f32 %v1950, %v2110
        %v2112 = vpop.f32.mrb[0].mxu0
        %2113 = vdwg.mxu0
        %v2114 = vadd.f32 %v1988, %v1530
        %v2115 = vadd.f32 %v1991, %v1533
        %v2116 = vadd.f32 %v1996, %v1538
        %v2117 = vadd.f32 %v1999, %v1541
        %v2118 = vadd.f32 %v2004, %v1546
        %v2119 = vadd.f32 %v2007, %v1549
        %v2120 = vadd.f32 %v2012, %v1554
        %v2121 = vadd.f32 %v2015, %v1557
        %v2122 = vadd.f32 %v2020, %v1562
        %v2123 = vadd.f32 %v2023, %v1565
        %v2124 = vadd.f32 %v2028, %v1570
        %v2125 = vadd.f32 %v2031, %v1573
        %v2126 = vadd.f32 %v2036, %v1578
        %v2127 = vadd.f32 %v2039, %v1581
        %v2128 = vadd.f32 %v2044, %v1586
        %v2129 = vadd.f32 %v2047, %v1589
        %v2130 = vadd.f32 %v2052, %v1594
        %v2131 = vadd.f32 %v2055, %v1597
        %v2132 = vadd.f32 %v2060, %v1602
        %v2133 = vadd.f32 %v2063, %v1605
        %v2134 = vadd.f32 %v2068, %v1610
        %v2135 = vadd.f32 %v2071, %v1613
        %v2136 = vadd.f32 %v2076, %v1618
        %v2137 = vadd.f32 %v2079, %v1621
        %v2138 = vadd.f32 %v2084, %v1626
        %v2139 = vadd.f32 %v2087, %v1629
        %v2140 = vadd.f32 %v2092, %v1634
        %v2141 = vadd.f32 %v2095, %v1637
        %v2142 = vadd.f32 %v2100, %v1642
        %v2143 = vadd.f32 %v2103, %v1645
        %v2144 = vadd.f32 %v2108, 0.0
        %v2145 = vadd.f32 %v2111, 0.0
        %v2146 = vld [vmem:[#allocation7] sm:$0x1]
        %v2148 = vlaneseq
        %v2149 = vshrl.u32 %v2148, 7
        %v2150 = vsub.s32 0, %v2149
        %v2151 = vrot.slane %v2146, %v2150
        %v2153 = vadd.f32 %v2114, %v2151
        %v2154 = vadd.f32 %v2115, %v2151
        %v2155 = vadd.f32 %v2116, %v2151
        %v2156 = vadd.f32 %v2117, %v2151
        %v2157 = vadd.f32 %v2118, %v2151
        %v2158 = vadd.f32 %v2119, %v2151
        %v2159 = vadd.f32 %v2120, %v2151
        %v2160 = vadd.f32 %v2121, %v2151
        %v2161 = vadd.f32 %v2122, %v2151
        %v2162 = vadd.f32 %v2123, %v2151
        %v2163 = vadd.f32 %v2124, %v2151
        %v2164 = vadd.f32 %v2125, %v2151
        %v2165 = vadd.f32 %v2126, %v2151
        %v2166 = vadd.f32 %v2127, %v2151
        %v2167 = vadd.f32 %v2128, %v2151
        %v2168 = vadd.f32 %v2129, %v2151
        %v2169 = vadd.f32 %v2130, %v2151
        %v2170 = vadd.f32 %v2131, %v2151
        %v2171 = vadd.f32 %v2132, %v2151
        %v2172 = vadd.f32 %v2133, %v2151
        %v2173 = vadd.f32 %v2134, %v2151
        %v2174 = vadd.f32 %v2135, %v2151
        %v2175 = vadd.f32 %v2136, %v2151
        %v2176 = vadd.f32 %v2137, %v2151
        %v2177 = vadd.f32 %v2138, %v2151
        %v2178 = vadd.f32 %v2139, %v2151
        %v2179 = vadd.f32 %v2140, %v2151
        %v2180 = vadd.f32 %v2141, %v2151
        %v2181 = vadd.f32 %v2142, %v2151
        %v2182 = vadd.f32 %v2143, %v2151
        %v2183 = vadd.f32 %v2144, %v2151
        %v2184 = vadd.f32 %v2145, %v2151
        %v2185 = vmax.f32 %v2153, 0.0
        %v2186 = vmax.f32 %v2154, 0.0
        %v2187 = vmax.f32 %v2155, 0.0
        %v2188 = vmax.f32 %v2156, 0.0
        %v2189 = vmax.f32 %v2157, 0.0
        %v2190 = vmax.f32 %v2158, 0.0
        %v2191 = vmax.f32 %v2159, 0.0
        %v2192 = vmax.f32 %v2160, 0.0
        %v2193 = vmax.f32 %v2161, 0.0
        %v2194 = vmax.f32 %v2162, 0.0
        %v2195 = vmax.f32 %v2163, 0.0
        %v2196 = vmax.f32 %v2164, 0.0
        %v2197 = vmax.f32 %v2165, 0.0
        %v2198 = vmax.f32 %v2166, 0.0
        %v2199 = vmax.f32 %v2167, 0.0
        %v2200 = vmax.f32 %v2168, 0.0
        %v2201 = vmax.f32 %v2169, 0.0
        %v2202 = vmax.f32 %v2170, 0.0
        %v2203 = vmax.f32 %v2171, 0.0
        %v2204 = vmax.f32 %v2172, 0.0
        %v2205 = vmax.f32 %v2173, 0.0
        %v2206 = vmax.f32 %v2174, 0.0
        %v2207 = vmax.f32 %v2175, 0.0
        %v2208 = vmax.f32 %v2176, 0.0
        %v2209 = vmax.f32 %v2177, 0.0
        %v2210 = vmax.f32 %v2178, 0.0
        %v2211 = vmax.f32 %v2179, 0.0
        %v2212 = vmax.f32 %v2180, 0.0
        %v2213 = vmax.f32 %v2181, 0.0
        %v2214 = vmax.f32 %v2182, 0.0
        %v2215 = vmax.f32 %v2183, 0.0
        %v2216 = vmax.f32 %v2184, 0.0
        %v2249 = vrot.slane %v2185, 7
        %v2250 = vrot.slane %v2186, 7
        %v2251 = vsel %vm362, %v2249, %v2250
        %v2252 = vrot.slane %v2187, 7
        %v2253 = vrot.slane %v2188, 7
        %v2254 = vsel %vm362, %v2252, %v2253
        %v2255 = vrot.slane %v2189, 7
        %v2256 = vrot.slane %v2190, 7
        %v2257 = vsel %vm362, %v2255, %v2256
        %v2258 = vrot.slane %v2191, 7
        %v2259 = vrot.slane %v2192, 7
        %v2260 = vsel %vm362, %v2258, %v2259
        %v2261 = vrot.slane %v2193, 7
        %v2262 = vrot.slane %v2194, 7
        %v2263 = vsel %vm362, %v2261, %v2262
        %v2264 = vrot.slane %v2195, 7
        %v2265 = vrot.slane %v2196, 7
        %v2266 = vsel %vm362, %v2264, %v2265
        %v2267 = vrot.slane %v2197, 7
        %v2268 = vrot.slane %v2198, 7
        %v2269 = vsel %vm362, %v2267, %v2268
        %v2270 = vrot.slane %v2199, 7
        %v2271 = vrot.slane %v2200, 7
        %v2272 = vsel %vm362, %v2270, %v2271
        %v2273 = vrot.slane %v2201, 7
        %v2274 = vrot.slane %v2202, 7
        %v2275 = vsel %vm362, %v2273, %v2274
        %v2276 = vrot.slane %v2203, 7
        %v2277 = vrot.slane %v2204, 7
        %v2278 = vsel %vm362, %v2276, %v2277
        %v2279 = vrot.slane %v2205, 7
        %v2280 = vrot.slane %v2206, 7
        %v2281 = vsel %vm362, %v2279, %v2280
        %v2282 = vrot.slane %v2207, 7
        %v2283 = vrot.slane %v2208, 7
        %v2284 = vsel %vm362, %v2282, %v2283
        %v2285 = vrot.slane %v2209, 7
        %v2286 = vrot.slane %v2210, 7
        %v2287 = vsel %vm362, %v2285, %v2286
        %v2288 = vrot.slane %v2211, 7
        %v2289 = vrot.slane %v2212, 7
        %v2290 = vsel %vm362, %v2288, %v2289
        %v2291 = vrot.slane %v2213, 7
        %v2292 = vrot.slane %v2214, 7
        %v2293 = vsel %vm362, %v2291, %v2292
        %v2294 = vrot.slane %v2215, 7
        %v2295 = vrot.slane %v2216, 7
        %v2296 = vsel %vm362, %v2294, %v2295
        %v2329 = vsel %vm362, 0.0, %v2249
        %v2330 = vsel %vm362, 0.0, %v2252
        %v2331 = vsel %vm362, 0.0, %v2255
        %v2332 = vsel %vm362, 0.0, %v2258
        %v2333 = vsel %vm362, 0.0, %v2261
        %v2334 = vsel %vm362, 0.0, %v2264
        %v2335 = vsel %vm362, 0.0, %v2267
        %v2336 = vsel %vm362, 0.0, %v2270
        %v2337 = vsel %vm362, 0.0, %v2273
        %v2338 = vsel %vm362, 0.0, %v2276
        %v2339 = vsel %vm362, 0.0, %v2279
        %v2340 = vsel %vm362, 0.0, %v2282
        %v2341 = vsel %vm362, 0.0, %v2285
        %v2342 = vsel %vm362, 0.0, %v2288
        %v2343 = vsel %vm362, 0.0, %v2291
        %v2344 = vsel %vm362, 0.0, %v2294
        %v2345 = vrot.slane %v2185, 1
        %v2346 = vrot.slane %v2186, 1
        %v2347 = vsel %vm459, %v2345, %v2346
        %v2348 = vrot.slane %v2187, 1
        %v2349 = vrot.slane %v2188, 1
        %v2350 = vsel %vm459, %v2348, %v2349
        %v2351 = vrot.slane %v2189, 1
        %v2352 = vrot.slane %v2190, 1
        %v2353 = vsel %vm459, %v2351, %v2352
        %v2354 = vrot.slane %v2191, 1
        %v2355 = vrot.slane %v2192, 1
        %v2356 = vsel %vm459, %v2354, %v2355
        %v2357 = vrot.slane %v2193, 1
        %v2358 = vrot.slane %v2194, 1
        %v2359 = vsel %vm459, %v2357, %v2358
        %v2360 = vrot.slane %v2195, 1
        %v2361 = vrot.slane %v2196, 1
        %v2362 = vsel %vm459, %v2360, %v2361
        %v2363 = vrot.slane %v2197, 1
        %v2364 = vrot.slane %v2198, 1
        %v2365 = vsel %vm459, %v2363, %v2364
        %v2366 = vrot.slane %v2199, 1
        %v2367 = vrot.slane %v2200, 1
        %v2368 = vsel %vm459, %v2366, %v2367
        %v2369 = vrot.slane %v2201, 1
        %v2370 = vrot.slane %v2202, 1
        %v2371 = vsel %vm459, %v2369, %v2370
        %v2372 = vrot.slane %v2203, 1
        %v2373 = vrot.slane %v2204, 1
        %v2374 = vsel %vm459, %v2372, %v2373
        %v2375 = vrot.slane %v2205, 1
        %v2376 = vrot.slane %v2206, 1
        %v2377 = vsel %vm459, %v2375, %v2376
        %v2378 = vrot.slane %v2207, 1
        %v2379 = vrot.slane %v2208, 1
        %v2380 = vsel %vm459, %v2378, %v2379
        %v2381 = vrot.slane %v2209, 1
        %v2382 = vrot.slane %v2210, 1
        %v2383 = vsel %vm459, %v2381, %v2382
        %v2384 = vrot.slane %v2211, 1
        %v2385 = vrot.slane %v2212, 1
        %v2386 = vsel %vm459, %v2384, %v2385
        %v2387 = vrot.slane %v2213, 1
        %v2388 = vrot.slane %v2214, 1
        %v2389 = vsel %vm459, %v2387, %v2388
        %v2390 = vrot.slane %v2215, 1
        %v2391 = vrot.slane %v2216, 1
        %v2392 = vsel %vm459, %v2390, %v2391
        %v2425 = vsel %vm459, %v2346, 0.0
        %v2426 = vsel %vm459, %v2349, 0.0
        %v2427 = vsel %vm459, %v2352, 0.0
        %v2428 = vsel %vm459, %v2355, 0.0
        %v2429 = vsel %vm459, %v2358, 0.0
        %v2430 = vsel %vm459, %v2361, 0.0
        %v2431 = vsel %vm459, %v2364, 0.0
        %v2432 = vsel %vm459, %v2367, 0.0
        %v2433 = vsel %vm459, %v2370, 0.0
        %v2434 = vsel %vm459, %v2373, 0.0
        %v2435 = vsel %vm459, %v2376, 0.0
        %v2436 = vsel %vm459, %v2379, 0.0
        %v2437 = vsel %vm459, %v2382, 0.0
        %v2438 = vsel %vm459, %v2385, 0.0
        %v2439 = vsel %vm459, %v2388, 0.0
        %v2440 = vsel %vm459, %v2391, 0.0
        %v2441 = vpack.c.bf16 %v2251, %v2329
        %v2442 = vpack.c.bf16 %v2254, %v2330
        %v2443 = vpack.c.bf16 %v2257, %v2331
        %v2444 = vpack.c.bf16 %v2260, %v2332
        %v2445 = vpack.c.bf16 %v2263, %v2333
        %v2446 = vpack.c.bf16 %v2266, %v2334
        %v2447 = vpack.c.bf16 %v2269, %v2335
        %v2448 = vpack.c.bf16 %v2272, %v2336
        %v2449 = vpack.c.bf16 %v2275, %v2337
        %v2450 = vpack.c.bf16 %v2278, %v2338
        %v2451 = vpack.c.bf16 %v2281, %v2339
        %v2452 = vpack.c.bf16 %v2284, %v2340
        %v2453 = vpack.c.bf16 %v2287, %v2341
        %v2454 = vpack.c.bf16 %v2290, %v2342
        %v2455 = vpack.c.bf16 %v2293, %v2343
        %v2456 = vpack.c.bf16 %v2296, %v2344
        %v2457 = vpack.c.bf16 %v2186, %v2185
        %v2458 = vpack.c.bf16 %v2188, %v2187
        %v2459 = vpack.c.bf16 %v2190, %v2189
        %v2460 = vpack.c.bf16 %v2192, %v2191
        %v2461 = vpack.c.bf16 %v2194, %v2193
        %v2462 = vpack.c.bf16 %v2196, %v2195
        %v2463 = vpack.c.bf16 %v2198, %v2197
        %v2464 = vpack.c.bf16 %v2200, %v2199
        %v2465 = vpack.c.bf16 %v2202, %v2201
        %v2466 = vpack.c.bf16 %v2204, %v2203
        %v2467 = vpack.c.bf16 %v2206, %v2205
        %v2468 = vpack.c.bf16 %v2208, %v2207
        %v2469 = vpack.c.bf16 %v2210, %v2209
        %v2470 = vpack.c.bf16 %v2212, %v2211
        %v2471 = vpack.c.bf16 %v2214, %v2213
        %v2472 = vpack.c.bf16 %v2216, %v2215
        %v2473 = vpack.c.bf16 %v2425, %v2347
        %v2474 = vpack.c.bf16 %v2426, %v2350
        %v2475 = vpack.c.bf16 %v2427, %v2353
        %v2476 = vpack.c.bf16 %v2428, %v2356
        %v2477 = vpack.c.bf16 %v2429, %v2359
        %v2478 = vpack.c.bf16 %v2430, %v2362
        %v2479 = vpack.c.bf16 %v2431, %v2365
        %v2480 = vpack.c.bf16 %v2432, %v2368
        %v2481 = vpack.c.bf16 %v2433, %v2371
        %v2482 = vpack.c.bf16 %v2434, %v2374
        %v2483 = vpack.c.bf16 %v2435, %v2377
        %v2484 = vpack.c.bf16 %v2436, %v2380
        %v2485 = vpack.c.bf16 %v2437, %v2383
        %v2486 = vpack.c.bf16 %v2438, %v2386
        %v2487 = vpack.c.bf16 %v2439, %v2389
        %v2488 = vpack.c.bf16 %v2440, %v2392
        %v2489 = vld [vmem:[#allocation8] sm:$0xf]
        %v2490 = vld [vmem:[#allocation8 + $0x4] sm:$0xf]
        %v2491 = vld [vmem:[#allocation8 + $0x8] sm:$0xf]
        %v2492 = vld [vmem:[#allocation8 + $0xc] sm:$0xf]
        %v2493 = vld [vmem:[#allocation8 + $0x10] sm:$0xf]
        %v2494 = vld [vmem:[#allocation8 + $0x14] sm:$0xf]
        %v2495 = vld [vmem:[#allocation8 + $0x18] sm:$0xf]
        %v2496 = vld [vmem:[#allocation8 + $0x1c] sm:$0xf]
        %v2497 = vld [vmem:[#allocation8 + $0x20] sm:$0xf]
        %v2498 = vld [vmem:[#allocation8 + $0x24] sm:$0xf]
        %v2499 = vld [vmem:[#allocation8 + $0x28] sm:$0xf]
        %v2500 = vld [vmem:[#allocation8 + $0x2c] sm:$0xf]
        %v2501 = vld [vmem:[#allocation8 + $0x30] sm:$0xf]
        %v2502 = vld [vmem:[#allocation8 + $0x34] sm:$0xf]
        %v2503 = vld [vmem:[#allocation8 + $0x38] sm:$0xf]
        %v2504 = vld [vmem:[#allocation8 + $0x3c] sm:$0xf]
        %v2505 = vld [vmem:[#allocation8 + $0x40] sm:$0xf]
        %v2506 = vld [vmem:[#allocation8 + $0x44] sm:$0xf]
        %v2507 = vld [vmem:[#allocation8 + $0x48] sm:$0xf]
        %v2508 = vld [vmem:[#allocation8 + $0x4c] sm:$0xf]
        %v2509 = vld [vmem:[#allocation8 + $0x50] sm:$0xf]
        %v2510 = vld [vmem:[#allocation8 + $0x54] sm:$0xf]
        %v2511 = vld [vmem:[#allocation8 + $0x58] sm:$0xf]
        %v2512 = vld [vmem:[#allocation8 + $0x5c] sm:$0xf]
        %v2513 = vld [vmem:[#allocation8 + $0x60] sm:$0xf]
        %v2514 = vld [vmem:[#allocation8 + $0x64] sm:$0xf]
        %v2515 = vld [vmem:[#allocation8 + $0x68] sm:$0xf]
        %v2516 = vld [vmem:[#allocation8 + $0x6c] sm:$0xf]
        %v2517 = vld [vmem:[#allocation8 + $0x70] sm:$0xf]
        %v2518 = vld [vmem:[#allocation8 + $0x74] sm:$0xf]
        %v2519 = vld [vmem:[#allocation8 + $0x78] sm:$0xf]
        %v2520 = vld [vmem:[#allocation8 + $0x7c] sm:$0xf]
        %v2521 = vld [vmem:[#allocation8 + $0x80] sm:$0xf]
        %v2522 = vld [vmem:[#allocation8 + $0x84] sm:$0xf]
        %v2523 = vld [vmem:[#allocation8 + $0x88] sm:$0xf]
        %v2524 = vld [vmem:[#allocation8 + $0x8c] sm:$0xf]
        %v2525 = vld [vmem:[#allocation8 + $0x90] sm:$0xf]
        %v2526 = vld [vmem:[#allocation8 + $0x94] sm:$0xf]
        %v2527 = vld [vmem:[#allocation8 + $0x98] sm:$0xf]
        %v2528 = vld [vmem:[#allocation8 + $0x9c] sm:$0xf]
        %v2529 = vld [vmem:[#allocation8 + $0xa0] sm:$0xf]
        %v2530 = vld [vmem:[#allocation8 + $0xa4] sm:$0xf]
        %v2531 = vld [vmem:[#allocation8 + $0xa8] sm:$0xf]
        %v2532 = vld [vmem:[#allocation8 + $0xac] sm:$0xf]
        %v2533 = vld [vmem:[#allocation8 + $0xb0] sm:$0xf]
        %v2534 = vld [vmem:[#allocation8 + $0xb4] sm:$0xf]
        %v2535 = vld [vmem:[#allocation8 + $0xb8] sm:$0xf]
        %v2536 = vld [vmem:[#allocation8 + $0xbc] sm:$0xf]
        %v2537 = vld [vmem:[#allocation8 + $0xc0] sm:$0xf]
        %v2538 = vld [vmem:[#allocation8 + $0xc4] sm:$0xf]
        %v2539 = vld [vmem:[#allocation8 + $0xc8] sm:$0xf]
        %v2540 = vld [vmem:[#allocation8 + $0xcc] sm:$0xf]
        %v2541 = vld [vmem:[#allocation8 + $0xd0] sm:$0xf]
        %v2542 = vld [vmem:[#allocation8 + $0xd4] sm:$0xf]
        %v2543 = vld [vmem:[#allocation8 + $0xd8] sm:$0xf]
        %v2544 = vld [vmem:[#allocation8 + $0xdc] sm:$0xf]
        %v2545 = vld [vmem:[#allocation8 + $0xe0] sm:$0xf]
        %v2546 = vld [vmem:[#allocation8 + $0xe4] sm:$0xf]
        %v2547 = vld [vmem:[#allocation8 + $0xe8] sm:$0xf]
        %v2548 = vld [vmem:[#allocation8 + $0xec] sm:$0xf]
        %v2549 = vld [vmem:[#allocation8 + $0xf0] sm:$0xf]
        %v2550 = vld [vmem:[#allocation8 + $0xf4] sm:$0xf]
        %v2551 = vld [vmem:[#allocation8 + $0xf8] sm:$0xf]
        %v2552 = vld [vmem:[#allocation8 + $0xfc] sm:$0xf]
        %v2553 = vld [vmem:[#allocation8 + $0x100] sm:$0xf]
        %v2554 = vld [vmem:[#allocation8 + $0x104] sm:$0xf]
        %v2555 = vld [vmem:[#allocation8 + $0x108] sm:$0xf]
        %v2556 = vld [vmem:[#allocation8 + $0x10c] sm:$0xf]
        %v2557 = vld [vmem:[#allocation8 + $0x110] sm:$0xf]
        %v2558 = vld [vmem:[#allocation8 + $0x114] sm:$0xf]
        %v2559 = vld [vmem:[#allocation8 + $0x118] sm:$0xf]
        %v2560 = vld [vmem:[#allocation8 + $0x11c] sm:$0xf]
        %v2561 = vld [vmem:[#allocation8 + $0x120] sm:$0xf]
        %v2562 = vld [vmem:[#allocation8 + $0x124] sm:$0xf]
        %v2563 = vld [vmem:[#allocation8 + $0x128] sm:$0xf]
        %v2564 = vld [vmem:[#allocation8 + $0x12c] sm:$0xf]
        %v2565 = vld [vmem:[#allocation8 + $0x130] sm:$0xf]
        %v2566 = vld [vmem:[#allocation8 + $0x134] sm:$0xf]
        %v2567 = vld [vmem:[#allocation8 + $0x138] sm:$0xf]
        %v2568 = vld [vmem:[#allocation8 + $0x13c] sm:$0xf]
        %v2569 = vld [vmem:[#allocation8 + $0x140] sm:$0xf]
        %v2570 = vld [vmem:[#allocation8 + $0x144] sm:$0xf]
        %v2571 = vld [vmem:[#allocation8 + $0x148] sm:$0xf]
        %v2572 = vld [vmem:[#allocation8 + $0x14c] sm:$0xf]
        %v2573 = vld [vmem:[#allocation8 + $0x150] sm:$0xf]
        %v2574 = vld [vmem:[#allocation8 + $0x154] sm:$0xf]
        %v2575 = vld [vmem:[#allocation8 + $0x158] sm:$0xf]
        %v2576 = vld [vmem:[#allocation8 + $0x15c] sm:$0xf]
        %v2577 = vld [vmem:[#allocation8 + $0x160] sm:$0xf]
        %v2578 = vld [vmem:[#allocation8 + $0x164] sm:$0xf]
        %v2579 = vld [vmem:[#allocation8 + $0x168] sm:$0xf]
        %v2580 = vld [vmem:[#allocation8 + $0x16c] sm:$0xf]
        %v2581 = vld [vmem:[#allocation8 + $0x170] sm:$0xf]
        %v2582 = vld [vmem:[#allocation8 + $0x174] sm:$0xf]
        %v2583 = vld [vmem:[#allocation8 + $0x178] sm:$0xf]
        %v2584 = vld [vmem:[#allocation8 + $0x17c] sm:$0xf]
        %v2585 = vld [vmem:[#allocation8 + $0x180] sm:$0xf]
        %v2586 = vld [vmem:[#allocation8 + $0x184] sm:$0xf]
        %v2587 = vld [vmem:[#allocation8 + $0x188] sm:$0xf]
        %v2588 = vld [vmem:[#allocation8 + $0x18c] sm:$0xf]
        %v2589 = vld [vmem:[#allocation8 + $0x190] sm:$0xf]
        %v2590 = vld [vmem:[#allocation8 + $0x194] sm:$0xf]
        %v2591 = vld [vmem:[#allocation8 + $0x198] sm:$0xf]
        %v2592 = vld [vmem:[#allocation8 + $0x19c] sm:$0xf]
        %v2593 = vld [vmem:[#allocation8 + $0x1a0] sm:$0xf]
        %v2594 = vld [vmem:[#allocation8 + $0x1a4] sm:$0xf]
        %v2595 = vld [vmem:[#allocation8 + $0x1a8] sm:$0xf]
        %v2596 = vld [vmem:[#allocation8 + $0x1ac] sm:$0xf]
        %v2597 = vld [vmem:[#allocation8 + $0x1b0] sm:$0xf]
        %v2598 = vld [vmem:[#allocation8 + $0x1b4] sm:$0xf]
        %v2599 = vld [vmem:[#allocation8 + $0x1b8] sm:$0xf]
        %v2600 = vld [vmem:[#allocation8 + $0x1bc] sm:$0xf]
        %v2601 = vld [vmem:[#allocation8 + $0x1c0] sm:$0xf]
        %v2602 = vld [vmem:[#allocation8 + $0x1c4] sm:$0xf]
        %v2603 = vld [vmem:[#allocation8 + $0x1c8] sm:$0xf]
        %v2604 = vld [vmem:[#allocation8 + $0x1cc] sm:$0xf]
        %v2605 = vld [vmem:[#allocation8 + $0x1d0] sm:$0xf]
        %v2606 = vld [vmem:[#allocation8 + $0x1d4] sm:$0xf]
        %v2607 = vld [vmem:[#allocation8 + $0x1d8] sm:$0xf]
        %v2608 = vld [vmem:[#allocation8 + $0x1dc] sm:$0xf]
        %v2609 = vld [vmem:[#allocation8 + $0x1e0] sm:$0xf]
        %v2610 = vld [vmem:[#allocation8 + $0x1e4] sm:$0xf]
        %v2611 = vld [vmem:[#allocation8 + $0x1e8] sm:$0xf]
        %v2612 = vld [vmem:[#allocation8 + $0x1ec] sm:$0xf]
        %v2613 = vld [vmem:[#allocation8 + $0x1f0] sm:$0xf]
        %v2614 = vld [vmem:[#allocation8 + $0x1f4] sm:$0xf]
        %v2615 = vld [vmem:[#allocation8 + $0x1f8] sm:$0xf]
        %v2616 = vld [vmem:[#allocation8 + $0x1fc] sm:$0xf]
        %v2617 = vld [vmem:[#allocation8 + $0x200] sm:$0xf]
        %v2618 = vld [vmem:[#allocation8 + $0x204] sm:$0xf]
        %v2619 = vld [vmem:[#allocation8 + $0x208] sm:$0xf]
        %v2620 = vld [vmem:[#allocation8 + $0x20c] sm:$0xf]
        %v2621 = vld [vmem:[#allocation8 + $0x210] sm:$0xf]
        %v2622 = vld [vmem:[#allocation8 + $0x214] sm:$0xf]
        %v2623 = vld [vmem:[#allocation8 + $0x218] sm:$0xf]
        %v2624 = vld [vmem:[#allocation8 + $0x21c] sm:$0xf]
        %v2625 = vld [vmem:[#allocation8 + $0x220] sm:$0xf]
        %v2626 = vld [vmem:[#allocation8 + $0x224] sm:$0xf]
        %v2627 = vld [vmem:[#allocation8 + $0x228] sm:$0xf]
        %v2628 = vld [vmem:[#allocation8 + $0x22c] sm:$0xf]
        %v2629 = vld [vmem:[#allocation8 + $0x230] sm:$0xf]
        %v2630 = vld [vmem:[#allocation8 + $0x234] sm:$0xf]
        %v2631 = vld [vmem:[#allocation8 + $0x238] sm:$0xf]
        %v2632 = vld [vmem:[#allocation8 + $0x23c] sm:$0xf]
        %v2681 = vunpack.c.l.b16 %v2489
        %v2682 = vunpack.c.l.b16 %v2490
        %v2683 = vunpack.c.l.b16 %v2491
        %v2684 = vunpack.c.l.b16 %v2492
        %v2685 = vunpack.c.l.b16 %v2493
        %v2686 = vunpack.c.l.b16 %v2494
        %v2687 = vunpack.c.l.b16 %v2495
        %v2688 = vunpack.c.l.b16 %v2496
        %v2689 = vunpack.c.l.b16 %v2497
        %v2690 = vunpack.c.l.b16 %v2498
        %v2691 = vunpack.c.l.b16 %v2499
        %v2692 = vunpack.c.l.b16 %v2500
        %v2693 = vunpack.c.l.b16 %v2501
        %v2694 = vunpack.c.l.b16 %v2502
        %v2695 = vunpack.c.l.b16 %v2503
        %v2696 = vunpack.c.l.b16 %v2504
        %v2697 = vunpack.c.l.b16 %v2505
        %v2698 = vunpack.c.l.b16 %v2506
        %v2699 = vunpack.c.l.b16 %v2507
        %v2700 = vunpack.c.l.b16 %v2508
        %v2701 = vunpack.c.l.b16 %v2509
        %v2702 = vunpack.c.l.b16 %v2510
        %v2703 = vunpack.c.l.b16 %v2511
        %v2704 = vunpack.c.l.b16 %v2512
        %v2705 = vunpack.c.l.b16 %v2513
        %v2706 = vunpack.c.l.b16 %v2514
        %v2707 = vunpack.c.l.b16 %v2515
        %v2708 = vunpack.c.l.b16 %v2516
        %v2709 = vunpack.c.l.b16 %v2517
        %v2710 = vunpack.c.l.b16 %v2518
        %v2711 = vunpack.c.l.b16 %v2519
        %v2712 = vunpack.c.l.b16 %v2520
        %v2713 = vunpack.c.l.b16 %v2521
        %v2714 = vunpack.c.l.b16 %v2522
        %v2715 = vunpack.c.l.b16 %v2523
        %v2716 = vunpack.c.l.b16 %v2524
        %v2717 = vunpack.c.l.b16 %v2525
        %v2718 = vunpack.c.l.b16 %v2526
        %v2719 = vunpack.c.l.b16 %v2527
        %v2720 = vunpack.c.l.b16 %v2528
        %v2721 = vunpack.c.l.b16 %v2529
        %v2722 = vunpack.c.l.b16 %v2530
        %v2723 = vunpack.c.l.b16 %v2531
        %v2724 = vunpack.c.l.b16 %v2532
        %v2725 = vunpack.c.l.b16 %v2533
        %v2726 = vunpack.c.l.b16 %v2534
        %v2727 = vunpack.c.l.b16 %v2535
        %v2728 = vunpack.c.l.b16 %v2536
        %v2729 = vpack.c.b16 %v2682, %v2681
        %v2730 = vpack.c.b16 %v2684, %v2683
        %v2731 = vpack.c.b16 %v2686, %v2685
        %v2732 = vpack.c.b16 %v2688, %v2687
        %v2733 = vpack.c.b16 %v2690, %v2689
        %v2734 = vpack.c.b16 %v2692, %v2691
        %v2735 = vpack.c.b16 %v2694, %v2693
        %v2736 = vpack.c.b16 %v2696, %v2695
        %v2737 = vpack.c.b16 %v2698, %v2697
        %v2738 = vpack.c.b16 %v2700, %v2699
        %v2739 = vpack.c.b16 %v2702, %v2701
        %v2740 = vpack.c.b16 %v2704, %v2703
        %v2741 = vpack.c.b16 %v2706, %v2705
        %v2742 = vpack.c.b16 %v2708, %v2707
        %v2743 = vpack.c.b16 %v2710, %v2709
        %v2744 = vpack.c.b16 %v2712, %v2711
        %v2745 = vpack.c.b16 %v2714, %v2713
        %v2746 = vpack.c.b16 %v2716, %v2715
        %v2747 = vpack.c.b16 %v2718, %v2717
        %v2748 = vpack.c.b16 %v2720, %v2719
        %v2749 = vpack.c.b16 %v2722, %v2721
        %v2750 = vpack.c.b16 %v2724, %v2723
        %v2751 = vpack.c.b16 %v2726, %v2725
        %v2752 = vpack.c.b16 %v2728, %v2727
        %2777 = vmatprep.subr.bf16.mxu0 0
        %2778 = vmatpush1.bf16.msra.mxu0 %v2729
        %2779 = vmatprep.subr.bf16.mxu0 0
        %2780 = vmatpush1.bf16.msra.mxu0 %v2730
        %2781 = vmatprep.subr.bf16.mxu0 0
        %2782 = vmatpush1.bf16.msra.mxu0 %v2731
        %2783 = vmatprep.subr.bf16.mxu0 0
        %2784 = vmatpush1.bf16.msra.mxu0 %v2732
        %2785 = vmatprep.subr.bf16.mxu0 0
        %2786 = vmatpush1.bf16.msra.mxu0 %v2733
        %2787 = vmatprep.subr.bf16.mxu0 0
        %2788 = vmatpush1.bf16.msra.mxu0 %v2734
        %2789 = vmatprep.subr.bf16.mxu0 0
        %2790 = vmatpush1.bf16.msra.mxu0 %v2735
        %2791 = vmatprep.subr.bf16.mxu0 0
        %2792 = vmatpush1.bf16.msra.mxu0 %v2736
        %2793 = vmatprep.subr.bf16.mxu0 0
        %2794 = vmatpush1.bf16.msra.mxu0 %v2737
        %2795 = vmatprep.subr.bf16.mxu0 0
        %2796 = vmatpush1.bf16.msra.mxu0 %v2738
        %2797 = vmatprep.subr.bf16.mxu0 0
        %2798 = vmatpush1.bf16.msra.mxu0 %v2739
        %2799 = vmatprep.subr.bf16.mxu0 0
        %2800 = vmatpush1.bf16.msra.mxu0 %v2740
        %2801 = vmatprep.subr.bf16.mxu0 0
        %2802 = vmatpush1.bf16.msra.mxu0 %v2741
        %2803 = vmatprep.subr.bf16.mxu0 0
        %2804 = vmatpush1.bf16.msra.mxu0 %v2742
        %2805 = vmatprep.subr.bf16.mxu0 0
        %2806 = vmatpush1.bf16.msra.mxu0 %v2743
        %2807 = vmatprep.subr.bf16.mxu0 0
        %2808 = vmatpush1.bf16.msra.mxu0 %v2744
        %2809 = vmatprep.mubr.bf16.mxu0 %v2457
        %2810 = vmatmul.mubr.bf16.gmra.mrb[0].mxu0 %v2441
        %v2811 = vpop.f32.mrb[0].mxu0
        %v2812 = vadd.f32 0.0, %v2811
        %v2813 = vpop.f32.mrb[0].mxu0
        %v2814 = vpop.f32.mrb[0].mxu0
        %v2815 = vadd.f32 0.0, %v2814
        %v2816 = vpop.f32.mrb[0].mxu0
        %2817 = vmatprep.mubr.bf16.mxu0 %v2458
        %2818 = vmatmul.mubr.bf16.gmra.mrb[0].mxu0 %v2442
        %v2819 = vpop.f32.mrb[0].mxu0
        %v2820 = vadd.f32 0.0, %v2819
        %v2821 = vpop.f32.mrb[0].mxu0
        %v2822 = vpop.f32.mrb[0].mxu0
        %v2823 = vadd.f32 0.0, %v2822
        %v2824 = vpop.f32.mrb[0].mxu0
        %2825 = vmatprep.mubr.bf16.mxu0 %v2459
        %2826 = vmatmul.mubr.bf16.gmra.mrb[0].mxu0 %v2443
        %v2827 = vpop.f32.mrb[0].mxu0
        %v2828 = vadd.f32 0.0, %v2827
        %v2829 = vpop.f32.mrb[0].mxu0
        %v2830 = vpop.f32.mrb[0].mxu0
        %v2831 = vadd.f32 0.0, %v2830
        %v2832 = vpop.f32.mrb[0].mxu0
        %2833 = vmatprep.mubr.bf16.mxu0 %v2460
        %2834 = vmatmul.mubr.bf16.gmra.mrb[0].mxu0 %v2444
        %v2835 = vpop.f32.mrb[0].mxu0
        %v2836 = vadd.f32 0.0, %v2835
        %v2837 = vpop.f32.mrb[0].mxu0
        %v2838 = vpop.f32.mrb[0].mxu0
        %v2839 = vadd.f32 0.0, %v2838
        %v2840 = vpop.f32.mrb[0].mxu0
        %2841 = vmatprep.mubr.bf16.mxu0 %v2461
        %2842 = vmatmul.mubr.bf16.gmra.mrb[0].mxu0 %v2445
        %v2843 = vpop.f32.mrb[0].mxu0
        %v2844 = vadd.f32 0.0, %v2843
        %v2845 = vpop.f32.mrb[0].mxu0
        %v2846 = vpop.f32.mrb[0].mxu0
        %v2847 = vadd.f32 0.0, %v2846
        %v2848 = vpop.f32.mrb[0].mxu0
        %2849 = vmatprep.mubr.bf16.mxu0 %v2462
        %2850 = vmatmul.mubr.bf16.gmra.mrb[0].mxu0 %v2446
        %v2851 = vpop.f32.mrb[0].mxu0
        %v2852 = vadd.f32 0.0, %v2851
        %v2853 = vpop.f32.mrb[0].mxu0
        %v2854 = vpop.f32.mrb[0].mxu0
        %v2855 = vadd.f32 0.0, %v2854
        %v2856 = vpop.f32.mrb[0].mxu0
        %2857 = vmatprep.mubr.bf16.mxu0 %v2463
        %2858 = vmatmul.mubr.bf16.gmra.mrb[0].mxu0 %v2447
        %v2859 = vpop.f32.mrb[0].mxu0
        %v2860 = vadd.f32 0.0, %v2859
        %v2861 = vpop.f32.mrb[0].mxu0
        %v2862 = vpop.f32.mrb[0].mxu0
        %v2863 = vadd.f32 0.0, %v2862
        %v2864 = vpop.f32.mrb[0].mxu0
        %2865 = vmatprep.mubr.bf16.mxu0 %v2464
        %2866 = vmatmul.mubr.bf16.gmra.mrb[0].mxu0 %v2448
        %v2867 = vpop.f32.mrb[0].mxu0
        %v2868 = vadd.f32 0.0, %v2867
        %v2869 = vpop.f32.mrb[0].mxu0
        %v2870 = vpop.f32.mrb[0].mxu0
        %v2871 = vadd.f32 0.0, %v2870
        %v2872 = vpop.f32.mrb[0].mxu0
        %2873 = vmatprep.mubr.bf16.mxu0 %v2465
        %2874 = vmatmul.mubr.bf16.gmra.mrb[0].mxu0 %v2449
        %v2875 = vpop.f32.mrb[0].mxu0
        %v2876 = vadd.f32 0.0, %v2875
        %v2877 = vpop.f32.mrb[0].mxu0
        %v2878 = vpop.f32.mrb[0].mxu0
        %v2879 = vadd.f32 0.0, %v2878
        %v2880 = vpop.f32.mrb[0].mxu0
        %2881 = vmatprep.mubr.bf16.mxu0 %v2466
        %2882 = vmatmul.mubr.bf16.gmra.mrb[0].mxu0 %v2450
        %v2883 = vpop.f32.mrb[0].mxu0
        %v2884 = vadd.f32 0.0, %v2883
        %v2885 = vpop.f32.mrb[0].mxu0
        %v2886 = vpop.f32.mrb[0].mxu0
        %v2887 = vadd.f32 0.0, %v2886
        %v2888 = vpop.f32.mrb[0].mxu0
        %2889 = vmatprep.mubr.bf16.mxu0 %v2467
        %2890 = vmatmul.mubr.bf16.gmra.mrb[0].mxu0 %v2451
        %v2891 = vpop.f32.mrb[0].mxu0
        %v2892 = vadd.f32 0.0, %v2891
        %v2893 = vpop.f32.mrb[0].mxu0
        %v2894 = vpop.f32.mrb[0].mxu0
        %v2895 = vadd.f32 0.0, %v2894
        %v2896 = vpop.f32.mrb[0].mxu0
        %2897 = vmatprep.mubr.bf16.mxu0 %v2468
        %2898 = vmatmul.mubr.bf16.gmra.mrb[0].mxu0 %v2452
        %v2899 = vpop.f32.mrb[0].mxu0
        %v2900 = vadd.f32 0.0, %v2899
        %v2901 = vpop.f32.mrb[0].mxu0
        %v2902 = vpop.f32.mrb[0].mxu0
        %v2903 = vadd.f32 0.0, %v2902
        %v2904 = vpop.f32.mrb[0].mxu0
        %2905 = vmatprep.mubr.bf16.mxu0 %v2469
        %2906 = vmatmul.mubr.bf16.gmra.mrb[0].mxu0 %v2453
        %v2907 = vpop.f32.mrb[0].mxu0
        %v2908 = vadd.f32 0.0, %v2907
        %v2909 = vpop.f32.mrb[0].mxu0
        %v2910 = vpop.f32.mrb[0].mxu0
        %v2911 = vadd.f32 0.0, %v2910
        %v2912 = vpop.f32.mrb[0].mxu0
        %2913 = vmatprep.mubr.bf16.mxu0 %v2470
        %2914 = vmatmul.mubr.bf16.gmra.mrb[0].mxu0 %v2454
        %v2915 = vpop.f32.mrb[0].mxu0
        %v2916 = vadd.f32 0.0, %v2915
        %v2917 = vpop.f32.mrb[0].mxu0
        %v2918 = vpop.f32.mrb[0].mxu0
        %v2919 = vadd.f32 0.0, %v2918
        %v2920 = vpop.f32.mrb[0].mxu0
        %2921 = vmatprep.mubr.bf16.mxu0 %v2471
        %2922 = vmatmul.mubr.bf16.gmra.mrb[0].mxu0 %v2455
        %v2923 = vpop.f32.mrb[0].mxu0
        %v2924 = vadd.f32 0.0, %v2923
        %v2925 = vpop.f32.mrb[0].mxu0
        %v2926 = vpop.f32.mrb[0].mxu0
        %v2927 = vadd.f32 0.0, %v2926
        %v2928 = vpop.f32.mrb[0].mxu0
        %2929 = vdwg.mxu0
        %2930 = vmatprep.subr.bf16.mxu0 0
        %2931 = vmatpush1.bf16.msra.mxu0 %v2745
        %2932 = vmatprep.subr.bf16.mxu0 0
        %2933 = vmatpush1.bf16.msra.mxu0 %v2746
        %2934 = vmatprep.subr.bf16.mxu0 0
        %2935 = vmatpush1.bf16.msra.mxu0 %v2747
        %2936 = vmatprep.subr.bf16.mxu0 0
        %2937 = vmatpush1.bf16.msra.mxu0 %v2748
        %2938 = vmatprep.subr.bf16.mxu0 0
        %2939 = vmatpush1.bf16.msra.mxu0 %v2749
        %2940 = vmatprep.subr.bf16.mxu0 0
        %2941 = vmatpush1.bf16.msra.mxu0 %v2750
        %2942 = vmatprep.subr.bf16.mxu0 0
        %2943 = vmatpush1.bf16.msra.mxu0 %v2751
        %2944 = vmatprep.subr.bf16.mxu0 0
        %2945 = vmatpush1.bf16.msra.mxu0 %v2752
        %2946 = vmatprep.subr.bf16.mxu0 0
        %2947 = vmatpush1.bf16.msra.mxu0 0
        %2948 = vmatprep.subr.bf16.mxu0 0
        %2949 = vmatpush1.bf16.msra.mxu0 0
        %2950 = vmatprep.subr.bf16.mxu0 0
        %2951 = vmatpush1.bf16.msra.mxu0 0
        %2952 = vmatprep.subr.bf16.mxu0 0
        %2953 = vmatpush1.bf16.msra.mxu0 0
        %2954 = vmatprep.subr.bf16.mxu0 0
        %2955 = vmatpush1.bf16.msra.mxu0 0
        %2956 = vmatprep.subr.bf16.mxu0 0
        %2957 = vmatpush1.bf16.msra.mxu0 0
        %2958 = vmatprep.subr.bf16.mxu0 0
        %2959 = vmatpush1.bf16.msra.mxu0 0
        %2960 = vmatprep.subr.bf16.mxu0 0
        %2961 = vmatpush1.bf16.msra.mxu0 0
        %2962 = vmatprep.mubr.bf16.mxu0 0
        %2963 = vmatmul.mubr.bf16.gmra.mrb[0].mxu0 %v2473
        %v2964 = vpop.f32.mrb[0].mxu0
        %v2965 = vadd.f32 %v2812, %v2964
        %v2966 = vpop.f32.mrb[0].mxu0
        %v2967 = vpop.f32.mrb[0].mxu0
        %v2968 = vadd.f32 %v2815, %v2967
        %v2969 = vpop.f32.mrb[0].mxu0
        %2970 = vmatprep.mubr.bf16.mxu0 0
        %2971 = vmatmul.mubr.bf16.gmra.mrb[0].mxu0 %v2474
        %v2972 = vpop.f32.mrb[0].mxu0
        %v2973 = vadd.f32 %v2820, %v2972
        %v2974 = vpop.f32.mrb[0].mxu0
        %v2975 = vpop.f32.mrb[0].mxu0
        %v2976 = vadd.f32 %v2823, %v2975
        %v2977 = vpop.f32.mrb[0].mxu0
        %2978 = vmatprep.mubr.bf16.mxu0 0
        %2979 = vmatmul.mubr.bf16.gmra.mrb[0].mxu0 %v2475
        %v2980 = vpop.f32.mrb[0].mxu0
        %v2981 = vadd.f32 %v2828, %v2980
        %v2982 = vpop.f32.mrb[0].mxu0
        %v2983 = vpop.f32.mrb[0].mxu0
        %v2984 = vadd.f32 %v2831, %v2983
        %v2985 = vpop.f32.mrb[0].mxu0
        %2986 = vmatprep.mubr.bf16.mxu0 0
        %2987 = vmatmul.mubr.bf16.gmra.mrb[0].mxu0 %v2476
        %v2988 = vpop.f32.mrb[0].mxu0
        %v2989 = vadd.f32 %v2836, %v2988
        %v2990 = vpop.f32.mrb[0].mxu0
        %v2991 = vpop.f32.mrb[0].mxu0
        %v2992 = vadd.f32 %v2839, %v2991
        %v2993 = vpop.f32.mrb[0].mxu0
        %2994 = vmatprep.mubr.bf16.mxu0 0
        %2995 = vmatmul.mubr.bf16.gmra.mrb[0].mxu0 %v2477
        %v2996 = vpop.f32.mrb[0].mxu0
        %v2997 = vadd.f32 %v2844, %v2996
        %v2998 = vpop.f32.mrb[0].mxu0
        %v2999 = vpop.f32.mrb[0].mxu0
        %v3000 = vadd.f32 %v2847, %v2999
        %v3001 = vpop.f32.mrb[0].mxu0
        %3002 = vmatprep.mubr.bf16.mxu0 0
        %3003 = vmatmul.mubr.bf16.gmra.mrb[0].mxu0 %v2478
        %v3004 = vpop.f32.mrb[0].mxu0
        %v3005 = vadd.f32 %v2852, %v3004
        %v3006 = vpop.f32.mrb[0].mxu0
        %v3007 = vpop.f32.mrb[0].mxu0
        %v3008 = vadd.f32 %v2855, %v3007
        %v3009 = vpop.f32.mrb[0].mxu0
        %3010 = vmatprep.mubr.bf16.mxu0 0
        %3011 = vmatmul.mubr.bf16.gmra.mrb[0].mxu0 %v2479
        %v3012 = vpop.f32.mrb[0].mxu0
        %v3013 = vadd.f32 %v2860, %v3012
        %v3014 = vpop.f32.mrb[0].mxu0
        %v3015 = vpop.f32.mrb[0].mxu0
        %v3016 = vadd.f32 %v2863, %v3015
        %v3017 = vpop.f32.mrb[0].mxu0
        %3018 = vmatprep.mubr.bf16.mxu0 0
        %3019 = vmatmul.mubr.bf16.gmra.mrb[0].mxu0 %v2480
        %v3020 = vpop.f32.mrb[0].mxu0
        %v3021 = vadd.f32 %v2868, %v3020
        %v3022 = vpop.f32.mrb[0].mxu0
        %v3023 = vpop.f32.mrb[0].mxu0
        %v3024 = vadd.f32 %v2871, %v3023
        %v3025 = vpop.f32.mrb[0].mxu0
        %3026 = vmatprep.mubr.bf16.mxu0 0
        %3027 = vmatmul.mubr.bf16.gmra.mrb[0].mxu0 %v2481
        %v3028 = vpop.f32.mrb[0].mxu0
        %v3029 = vadd.f32 %v2876, %v3028
        %v3030 = vpop.f32.mrb[0].mxu0
        %v3031 = vpop.f32.mrb[0].mxu0
        %v3032 = vadd.f32 %v2879, %v3031
        %v3033 = vpop.f32.mrb[0].mxu0
        %3034 = vmatprep.mubr.bf16.mxu0 0
        %3035 = vmatmul.mubr.bf16.gmra.mrb[0].mxu0 %v2482
        %v3036 = vpop.f32.mrb[0].mxu0
        %v3037 = vadd.f32 %v2884, %v3036
        %v3038 = vpop.f32.mrb[0].mxu0
        %v3039 = vpop.f32.mrb[0].mxu0
        %v3040 = vadd.f32 %v2887, %v3039
        %v3041 = vpop.f32.mrb[0].mxu0
        %3042 = vmatprep.mubr.bf16.mxu0 0
        %3043 = vmatmul.mubr.bf16.gmra.mrb[0].mxu0 %v2483
        %v3044 = vpop.f32.mrb[0].mxu0
        %v3045 = vadd.f32 %v2892, %v3044
        %v3046 = vpop.f32.mrb[0].mxu0
        %v3047 = vpop.f32.mrb[0].mxu0
        %v3048 = vadd.f32 %v2895, %v3047
        %v3049 = vpop.f32.mrb[0].mxu0
        %3050 = vmatprep.mubr.bf16.mxu0 0
        %3051 = vmatmul.mubr.bf16.gmra.mrb[0].mxu0 %v2484
        %v3052 = vpop.f32.mrb[0].mxu0
        %v3053 = vadd.f32 %v2900, %v3052
        %v3054 = vpop.f32.mrb[0].mxu0
        %v3055 = vpop.f32.mrb[0].mxu0
        %v3056 = vadd.f32 %v2903, %v3055
        %v3057 = vpop.f32.mrb[0].mxu0
        %3058 = vmatprep.mubr.bf16.mxu0 0
        %3059 = vmatmul.mubr.bf16.gmra.mrb[0].mxu0 %v2485
        %v3060 = vpop.f32.mrb[0].mxu0
        %v3061 = vadd.f32 %v2908, %v3060
        %v3062 = vpop.f32.mrb[0].mxu0
        %v3063 = vpop.f32.mrb[0].mxu0
        %v3064 = vadd.f32 %v2911, %v3063
        %v3065 = vpop.f32.mrb[0].mxu0
        %3066 = vmatprep.mubr.bf16.mxu0 0
        %3067 = vmatmul.mubr.bf16.gmra.mrb[0].mxu0 %v2486
        %v3068 = vpop.f32.mrb[0].mxu0
        %v3069 = vadd.f32 %v2916, %v3068
        %v3070 = vpop.f32.mrb[0].mxu0
        %v3071 = vpop.f32.mrb[0].mxu0
        %v3072 = vadd.f32 %v2919, %v3071
        %v3073 = vpop.f32.mrb[0].mxu0
        %3074 = vmatprep.mubr.bf16.mxu0 0
        %3075 = vmatmul.mubr.bf16.gmra.mrb[0].mxu0 %v2487
        %v3076 = vpop.f32.mrb[0].mxu0
        %v3077 = vadd.f32 %v2924, %v3076
        %v3078 = vpop.f32.mrb[0].mxu0
        %v3079 = vpop.f32.mrb[0].mxu0
        %v3080 = vadd.f32 %v2927, %v3079
        %v3081 = vpop.f32.mrb[0].mxu0
        %3082 = vdwg.mxu0
        %v3131 = vunpack.c.l.b16 %v2585
        %v3132 = vunpack.c.l.b16 %v2586
        %v3133 = vunpack.c.l.b16 %v2587
        %v3134 = vunpack.c.l.b16 %v2588
        %v3135 = vunpack.c.l.b16 %v2589
        %v3136 = vunpack.c.l.b16 %v2590
        %v3137 = vunpack.c.l.b16 %v2591
        %v3138 = vunpack.c.l.b16 %v2592
        %v3139 = vunpack.c.l.b16 %v2593
        %v3140 = vunpack.c.l.b16 %v2594
        %v3141 = vunpack.c.l.b16 %v2595
        %v3142 = vunpack.c.l.b16 %v2596
        %v3143 = vunpack.c.l.b16 %v2597
        %v3144 = vunpack.c.l.b16 %v2598
        %v3145 = vunpack.c.l.b16 %v2599
        %v3146 = vunpack.c.l.b16 %v2600
        %v3147 = vunpack.c.l.b16 %v2601
        %v3148 = vunpack.c.l.b16 %v2602
        %v3149 = vunpack.c.l.b16 %v2603
        %v3150 = vunpack.c.l.b16 %v2604
        %v3151 = vunpack.c.l.b16 %v2605
        %v3152 = vunpack.c.l.b16 %v2606
        %v3153 = vunpack.c.l.b16 %v2607
        %v3154 = vunpack.c.l.b16 %v2608
        %v3155 = vunpack.c.l.b16 %v2609
        %v3156 = vunpack.c.l.b16 %v2610
        %v3157 = vunpack.c.l.b16 %v2611
        %v3158 = vunpack.c.l.b16 %v2612
        %v3159 = vunpack.c.l.b16 %v2613
        %v3160 = vunpack.c.l.b16 %v2614
        %v3161 = vunpack.c.l.b16 %v2615
        %v3162 = vunpack.c.l.b16 %v2616
        %v3163 = vunpack.c.l.b16 %v2617
        %v3164 = vunpack.c.l.b16 %v2618
        %v3165 = vunpack.c.l.b16 %v2619
        %v3166 = vunpack.c.l.b16 %v2620
        %v3167 = vunpack.c.l.b16 %v2621
        %v3168 = vunpack.c.l.b16 %v2622
        %v3169 = vunpack.c.l.b16 %v2623
        %v3170 = vunpack.c.l.b16 %v2624
        %v3171 = vunpack.c.l.b16 %v2625
        %v3172 = vunpack.c.l.b16 %v2626
        %v3173 = vunpack.c.l.b16 %v2627
        %v3174 = vunpack.c.l.b16 %v2628
        %v3175 = vunpack.c.l.b16 %v2629
        %v3176 = vunpack.c.l.b16 %v2630
        %v3177 = vunpack.c.l.b16 %v2631
        %v3178 = vunpack.c.l.b16 %v2632
        %v3179 = vpack.c.b16 %v3132, %v3131
        %v3180 = vpack.c.b16 %v3134, %v3133
        %v3181 = vpack.c.b16 %v3136, %v3135
        %v3182 = vpack.c.b16 %v3138, %v3137
        %v3183 = vpack.c.b16 %v3140, %v3139
        %v3184 = vpack.c.b16 %v3142, %v3141
        %v3185 = vpack.c.b16 %v3144, %v3143
        %v3186 = vpack.c.b16 %v3146, %v3145
        %v3187 = vpack.c.b16 %v3148, %v3147
        %v3188 = vpack.c.b16 %v3150, %v3149
        %v3189 = vpack.c.b16 %v3152, %v3151
        %v3190 = vpack.c.b16 %v3154, %v3153
        %v3191 = vpack.c.b16 %v3156, %v3155
        %v3192 = vpack.c.b16 %v3158, %v3157
        %v3193 = vpack.c.b16 %v3160, %v3159
        %v3194 = vpack.c.b16 %v3162, %v3161
        %v3195 = vpack.c.b16 %v3164, %v3163
        %v3196 = vpack.c.b16 %v3166, %v3165
        %v3197 = vpack.c.b16 %v3168, %v3167
        %v3198 = vpack.c.b16 %v3170, %v3169
        %v3199 = vpack.c.b16 %v3172, %v3171
        %v3200 = vpack.c.b16 %v3174, %v3173
        %v3201 = vpack.c.b16 %v3176, %v3175
        %v3202 = vpack.c.b16 %v3178, %v3177
        %3227 = vmatprep.subr.bf16.mxu0 0
        %3228 = vmatpush1.bf16.msra.mxu0 %v3179
        %3229 = vmatprep.subr.bf16.mxu0 0
        %3230 = vmatpush1.bf16.msra.mxu0 %v3180
        %3231 = vmatprep.subr.bf16.mxu0 0
        %3232 = vmatpush1.bf16.msra.mxu0 %v3181
        %3233 = vmatprep.subr.bf16.mxu0 0
        %3234 = vmatpush1.bf16.msra.mxu0 %v3182
        %3235 = vmatprep.subr.bf16.mxu0 0
        %3236 = vmatpush1.bf16.msra.mxu0 %v3183
        %3237 = vmatprep.subr.bf16.mxu0 0
        %3238 = vmatpush1.bf16.msra.mxu0 %v3184
        %3239 = vmatprep.subr.bf16.mxu0 0
        %3240 = vmatpush1.bf16.msra.mxu0 %v3185
        %3241 = vmatprep.subr.bf16.mxu0 0
        %3242 = vmatpush1.bf16.msra.mxu0 %v3186
        %3243 = vmatprep.subr.bf16.mxu0 0
        %3244 = vmatpush1.bf16.msra.mxu0 %v3187
        %3245 = vmatprep.subr.bf16.mxu0 0
        %3246 = vmatpush1.bf16.msra.mxu0 %v3188
        %3247 = vmatprep.subr.bf16.mxu0 0
        %3248 = vmatpush1.bf16.msra.mxu0 %v3189
        %3249 = vmatprep.subr.bf16.mxu0 0
        %3250 = vmatpush1.bf16.msra.mxu0 %v3190
        %3251 = vmatprep.subr.bf16.mxu0 0
        %3252 = vmatpush1.bf16.msra.mxu0 %v3191
        %3253 = vmatprep.subr.bf16.mxu0 0
        %3254 = vmatpush1.bf16.msra.mxu0 %v3192
        %3255 = vmatprep.subr.bf16.mxu0 0
        %3256 = vmatpush1.bf16.msra.mxu0 %v3193
        %3257 = vmatprep.subr.bf16.mxu0 0
        %3258 = vmatpush1.bf16.msra.mxu0 %v3194
        %3259 = vmatprep.mubr.bf16.mxu0 %v2458
        %3260 = vmatmul.mubr.bf16.gmra.mrb[0].mxu0 %v2442
        %v3261 = vpop.f32.mrb[0].mxu0
        %v3262 = vadd.f32 0.0, %v3261
        %v3263 = vpop.f32.mrb[0].mxu0
        %v3264 = vpop.f32.mrb[0].mxu0
        %v3265 = vadd.f32 0.0, %v3264
        %v3266 = vpop.f32.mrb[0].mxu0
        %3267 = vmatprep.mubr.bf16.mxu0 %v2459
        %3268 = vmatmul.mubr.bf16.gmra.mrb[0].mxu0 %v2443
        %v3269 = vpop.f32.mrb[0].mxu0
        %v3270 = vadd.f32 0.0, %v3269
        %v3271 = vpop.f32.mrb[0].mxu0
        %v3272 = vpop.f32.mrb[0].mxu0
        %v3273 = vadd.f32 0.0, %v3272
        %v3274 = vpop.f32.mrb[0].mxu0
        %3275 = vmatprep.mubr.bf16.mxu0 %v2460
        %3276 = vmatmul.mubr.bf16.gmra.mrb[0].mxu0 %v2444
        %v3277 = vpop.f32.mrb[0].mxu0
        %v3278 = vadd.f32 0.0, %v3277
        %v3279 = vpop.f32.mrb[0].mxu0
        %v3280 = vpop.f32.mrb[0].mxu0
        %v3281 = vadd.f32 0.0, %v3280
        %v3282 = vpop.f32.mrb[0].mxu0
        %3283 = vmatprep.mubr.bf16.mxu0 %v2461
        %3284 = vmatmul.mubr.bf16.gmra.mrb[0].mxu0 %v2445
        %v3285 = vpop.f32.mrb[0].mxu0
        %v3286 = vadd.f32 0.0, %v3285
        %v3287 = vpop.f32.mrb[0].mxu0
        %v3288 = vpop.f32.mrb[0].mxu0
        %v3289 = vadd.f32 0.0, %v3288
        %v3290 = vpop.f32.mrb[0].mxu0
        %3291 = vmatprep.mubr.bf16.mxu0 %v2462
        %3292 = vmatmul.mubr.bf16.gmra.mrb[0].mxu0 %v2446
        %v3293 = vpop.f32.mrb[0].mxu0
        %v3294 = vadd.f32 0.0, %v3293
        %v3295 = vpop.f32.mrb[0].mxu0
        %v3296 = vpop.f32.mrb[0].mxu0
        %v3297 = vadd.f32 0.0, %v3296
        %v3298 = vpop.f32.mrb[0].mxu0
        %3299 = vmatprep.mubr.bf16.mxu0 %v2463
        %3300 = vmatmul.mubr.bf16.gmra.mrb[0].mxu0 %v2447
        %v3301 = vpop.f32.mrb[0].mxu0
        %v3302 = vadd.f32 0.0, %v3301
        %v3303 = vpop.f32.mrb[0].mxu0
        %v3304 = vpop.f32.mrb[0].mxu0
        %v3305 = vadd.f32 0.0, %v3304
        %v3306 = vpop.f32.mrb[0].mxu0
        %3307 = vmatprep.mubr.bf16.mxu0 %v2464
        %3308 = vmatmul.mubr.bf16.gmra.mrb[0].mxu0 %v2448
        %v3309 = vpop.f32.mrb[0].mxu0
        %v3310 = vadd.f32 0.0, %v3309
        %v3311 = vpop.f32.mrb[0].mxu0
        %v3312 = vpop.f32.mrb[0].mxu0
        %v3313 = vadd.f32 0.0, %v3312
        %v3314 = vpop.f32.mrb[0].mxu0
        %3315 = vmatprep.mubr.bf16.mxu0 %v2465
        %3316 = vmatmul.mubr.bf16.gmra.mrb[0].mxu0 %v2449
        %v3317 = vpop.f32.mrb[0].mxu0
        %v3318 = vadd.f32 0.0, %v3317
        %v3319 = vpop.f32.mrb[0].mxu0
        %v3320 = vpop.f32.mrb[0].mxu0
        %v3321 = vadd.f32 0.0, %v3320
        %v3322 = vpop.f32.mrb[0].mxu0
        %3323 = vmatprep.mubr.bf16.mxu0 %v2466
        %3324 = vmatmul.mubr.bf16.gmra.mrb[0].mxu0 %v2450
        %v3325 = vpop.f32.mrb[0].mxu0
        %v3326 = vadd.f32 0.0, %v3325
        %v3327 = vpop.f32.mrb[0].mxu0
        %v3328 = vpop.f32.mrb[0].mxu0
        %v3329 = vadd.f32 0.0, %v3328
        %v3330 = vpop.f32.mrb[0].mxu0
        %3331 = vmatprep.mubr.bf16.mxu0 %v2467
        %3332 = vmatmul.mubr.bf16.gmra.mrb[0].mxu0 %v2451
        %v3333 = vpop.f32.mrb[0].mxu0
        %v3334 = vadd.f32 0.0, %v3333
        %v3335 = vpop.f32.mrb[0].mxu0
        %v3336 = vpop.f32.mrb[0].mxu0
        %v3337 = vadd.f32 0.0, %v3336
        %v3338 = vpop.f32.mrb[0].mxu0
        %3339 = vmatprep.mubr.bf16.mxu0 %v2468
        %3340 = vmatmul.mubr.bf16.gmra.mrb[0].mxu0 %v2452
        %v3341 = vpop.f32.mrb[0].mxu0
        %v3342 = vadd.f32 0.0, %v3341
        %v3343 = vpop.f32.mrb[0].mxu0
        %v3344 = vpop.f32.mrb[0].mxu0
        %v3345 = vadd.f32 0.0, %v3344
        %v3346 = vpop.f32.mrb[0].mxu0
        %3347 = vmatprep.mubr.bf16.mxu0 %v2469
        %3348 = vmatmul.mubr.bf16.gmra.mrb[0].mxu0 %v2453
        %v3349 = vpop.f32.mrb[0].mxu0
        %v3350 = vadd.f32 0.0, %v3349
        %v3351 = vpop.f32.mrb[0].mxu0
        %v3352 = vpop.f32.mrb[0].mxu0
        %v3353 = vadd.f32 0.0, %v3352
        %v3354 = vpop.f32.mrb[0].mxu0
        %3355 = vmatprep.mubr.bf16.mxu0 %v2470
        %3356 = vmatmul.mubr.bf16.gmra.mrb[0].mxu0 %v2454
        %v3357 = vpop.f32.mrb[0].mxu0
        %v3358 = vadd.f32 0.0, %v3357
        %v3359 = vpop.f32.mrb[0].mxu0
        %v3360 = vpop.f32.mrb[0].mxu0
        %v3361 = vadd.f32 0.0, %v3360
        %v3362 = vpop.f32.mrb[0].mxu0
        %3363 = vmatprep.mubr.bf16.mxu0 %v2471
        %3364 = vmatmul.mubr.bf16.gmra.mrb[0].mxu0 %v2455
        %v3365 = vpop.f32.mrb[0].mxu0
        %v3366 = vadd.f32 0.0, %v3365
        %v3367 = vpop.f32.mrb[0].mxu0
        %v3368 = vpop.f32.mrb[0].mxu0
        %v3369 = vadd.f32 0.0, %v3368
        %v3370 = vpop.f32.mrb[0].mxu0
        %3371 = vmatprep.mubr.bf16.mxu0 %v2472
        %3372 = vmatmul.mubr.bf16.gmra.mrb[0].mxu0 %v2456
        %v3373 = vpop.f32.mrb[0].mxu0
        %v3374 = vadd.f32 0.0, %v3373
        %v3375 = vpop.f32.mrb[0].mxu0
        %v3376 = vpop.f32.mrb[0].mxu0
        %v3377 = vadd.f32 0.0, %v3376
        %v3378 = vpop.f32.mrb[0].mxu0
        %3379 = vdwg.mxu0
        %3380 = vmatprep.subr.bf16.mxu0 0
        %3381 = vmatpush1.bf16.msra.mxu0 %v3195
        %3382 = vmatprep.subr.bf16.mxu0 0
        %3383 = vmatpush1.bf16.msra.mxu0 %v3196
        %3384 = vmatprep.subr.bf16.mxu0 0
        %3385 = vmatpush1.bf16.msra.mxu0 %v3197
        %3386 = vmatprep.subr.bf16.mxu0 0
        %3387 = vmatpush1.bf16.msra.mxu0 %v3198
        %3388 = vmatprep.subr.bf16.mxu0 0
        %3389 = vmatpush1.bf16.msra.mxu0 %v3199
        %3390 = vmatprep.subr.bf16.mxu0 0
        %3391 = vmatpush1.bf16.msra.mxu0 %v3200
        %3392 = vmatprep.subr.bf16.mxu0 0
        %3393 = vmatpush1.bf16.msra.mxu0 %v3201
        %3394 = vmatprep.subr.bf16.mxu0 0
        %3395 = vmatpush1.bf16.msra.mxu0 %v3202
        %3396 = vmatprep.subr.bf16.mxu0 0
        %3397 = vmatpush1.bf16.msra.mxu0 0
        %3398 = vmatprep.subr.bf16.mxu0 0
        %3399 = vmatpush1.bf16.msra.mxu0 0
        %3400 = vmatprep.subr.bf16.mxu0 0
        %3401 = vmatpush1.bf16.msra.mxu0 0
        %3402 = vmatprep.subr.bf16.mxu0 0
        %3403 = vmatpush1.bf16.msra.mxu0 0
        %3404 = vmatprep.subr.bf16.mxu0 0
        %3405 = vmatpush1.bf16.msra.mxu0 0
        %3406 = vmatprep.subr.bf16.mxu0 0
        %3407 = vmatpush1.bf16.msra.mxu0 0
        %3408 = vmatprep.subr.bf16.mxu0 0
        %3409 = vmatpush1.bf16.msra.mxu0 0
        %3410 = vmatprep.subr.bf16.mxu0 0
        %3411 = vmatpush1.bf16.msra.mxu0 0
        %3412 = vmatprep.mubr.bf16.mxu0 0
        %3413 = vmatmul.mubr.bf16.gmra.mrb[0].mxu0 %v2474
        %v3414 = vpop.f32.mrb[0].mxu0
        %v3415 = vadd.f32 %v3262, %v3414
        %v3416 = vpop.f32.mrb[0].mxu0
        %v3417 = vpop.f32.mrb[0].mxu0
        %v3418 = vadd.f32 %v3265, %v3417
        %v3419 = vpop.f32.mrb[0].mxu0
        %3420 = vmatprep.mubr.bf16.mxu0 0
        %3421 = vmatmul.mubr.bf16.gmra.mrb[0].mxu0 %v2475
        %v3422 = vpop.f32.mrb[0].mxu0
        %v3423 = vadd.f32 %v3270, %v3422
        %v3424 = vpop.f32.mrb[0].mxu0
        %v3425 = vpop.f32.mrb[0].mxu0
        %v3426 = vadd.f32 %v3273, %v3425
        %v3427 = vpop.f32.mrb[0].mxu0
        %3428 = vmatprep.mubr.bf16.mxu0 0
        %3429 = vmatmul.mubr.bf16.gmra.mrb[0].mxu0 %v2476
        %v3430 = vpop.f32.mrb[0].mxu0
        %v3431 = vadd.f32 %v3278, %v3430
        %v3432 = vpop.f32.mrb[0].mxu0
        %v3433 = vpop.f32.mrb[0].mxu0
        %v3434 = vadd.f32 %v3281, %v3433
        %v3435 = vpop.f32.mrb[0].mxu0
        %3436 = vmatprep.mubr.bf16.mxu0 0
        %3437 = vmatmul.mubr.bf16.gmra.mrb[0].mxu0 %v2477
        %v3438 = vpop.f32.mrb[0].mxu0
        %v3439 = vadd.f32 %v3286, %v3438
        %v3440 = vpop.f32.mrb[0].mxu0
        %v3441 = vpop.f32.mrb[0].mxu0
        %v3442 = vadd.f32 %v3289, %v3441
        %v3443 = vpop.f32.mrb[0].mxu0
        %3444 = vmatprep.mubr.bf16.mxu0 0
        %3445 = vmatmul.mubr.bf16.gmra.mrb[0].mxu0 %v2478
        %v3446 = vpop.f32.mrb[0].mxu0
        %v3447 = vadd.f32 %v3294, %v3446
        %v3448 = vpop.f32.mrb[0].mxu0
        %v3449 = vpop.f32.mrb[0].mxu0
        %v3450 = vadd.f32 %v3297, %v3449
        %v3451 = vpop.f32.mrb[0].mxu0
        %3452 = vmatprep.mubr.bf16.mxu0 0
        %3453 = vmatmul.mubr.bf16.gmra.mrb[0].mxu0 %v2479
        %v3454 = vpop.f32.mrb[0].mxu0
        %v3455 = vadd.f32 %v3302, %v3454
        %v3456 = vpop.f32.mrb[0].mxu0
        %v3457 = vpop.f32.mrb[0].mxu0
        %v3458 = vadd.f32 %v3305, %v3457
        %v3459 = vpop.f32.mrb[0].mxu0
        %3460 = vmatprep.mubr.bf16.mxu0 0
        %3461 = vmatmul.mubr.bf16.gmra.mrb[0].mxu0 %v2480
        %v3462 = vpop.f32.mrb[0].mxu0
        %v3463 = vadd.f32 %v3310, %v3462
        %v3464 = vpop.f32.mrb[0].mxu0
        %v3465 = vpop.f32.mrb[0].mxu0
        %v3466 = vadd.f32 %v3313, %v3465
        %v3467 = vpop.f32.mrb[0].mxu0
        %3468 = vmatprep.mubr.bf16.mxu0 0
        %3469 = vmatmul.mubr.bf16.gmra.mrb[0].mxu0 %v2481
        %v3470 = vpop.f32.mrb[0].mxu0
        %v3471 = vadd.f32 %v3318, %v3470
        %v3472 = vpop.f32.mrb[0].mxu0
        %v3473 = vpop.f32.mrb[0].mxu0
        %v3474 = vadd.f32 %v3321, %v3473
        %v3475 = vpop.f32.mrb[0].mxu0
        %3476 = vmatprep.mubr.bf16.mxu0 0
        %3477 = vmatmul.mubr.bf16.gmra.mrb[0].mxu0 %v2482
        %v3478 = vpop.f32.mrb[0].mxu0
        %v3479 = vadd.f32 %v3326, %v3478
        %v3480 = vpop.f32.mrb[0].mxu0
        %v3481 = vpop.f32.mrb[0].mxu0
        %v3482 = vadd.f32 %v3329, %v3481
        %v3483 = vpop.f32.mrb[0].mxu0
        %3484 = vmatprep.mubr.bf16.mxu0 0
        %3485 = vmatmul.mubr.bf16.gmra.mrb[0].mxu0 %v2483
        %v3486 = vpop.f32.mrb[0].mxu0
        %v3487 = vadd.f32 %v3334, %v3486
        %v3488 = vpop.f32.mrb[0].mxu0
        %v3489 = vpop.f32.mrb[0].mxu0
        %v3490 = vadd.f32 %v3337, %v3489
        %v3491 = vpop.f32.mrb[0].mxu0
        %3492 = vmatprep.mubr.bf16.mxu0 0
        %3493 = vmatmul.mubr.bf16.gmra.mrb[0].mxu0 %v2484
        %v3494 = vpop.f32.mrb[0].mxu0
        %v3495 = vadd.f32 %v3342, %v3494
        %v3496 = vpop.f32.mrb[0].mxu0
        %v3497 = vpop.f32.mrb[0].mxu0
        %v3498 = vadd.f32 %v3345, %v3497
        %v3499 = vpop.f32.mrb[0].mxu0
        %3500 = vmatprep.mubr.bf16.mxu0 0
        %3501 = vmatmul.mubr.bf16.gmra.mrb[0].mxu0 %v2485
        %v3502 = vpop.f32.mrb[0].mxu0
        %v3503 = vadd.f32 %v3350, %v3502
        %v3504 = vpop.f32.mrb[0].mxu0
        %v3505 = vpop.f32.mrb[0].mxu0
        %v3506 = vadd.f32 %v3353, %v3505
        %v3507 = vpop.f32.mrb[0].mxu0
        %3508 = vmatprep.mubr.bf16.mxu0 0
        %3509 = vmatmul.mubr.bf16.gmra.mrb[0].mxu0 %v2486
        %v3510 = vpop.f32.mrb[0].mxu0
        %v3511 = vadd.f32 %v3358, %v3510
        %v3512 = vpop.f32.mrb[0].mxu0
        %v3513 = vpop.f32.mrb[0].mxu0
        %v3514 = vadd.f32 %v3361, %v3513
        %v3515 = vpop.f32.mrb[0].mxu0
        %3516 = vmatprep.mubr.bf16.mxu0 0
        %3517 = vmatmul.mubr.bf16.gmra.mrb[0].mxu0 %v2487
        %v3518 = vpop.f32.mrb[0].mxu0
        %v3519 = vadd.f32 %v3366, %v3518
        %v3520 = vpop.f32.mrb[0].mxu0
        %v3521 = vpop.f32.mrb[0].mxu0
        %v3522 = vadd.f32 %v3369, %v3521
        %v3523 = vpop.f32.mrb[0].mxu0
        %3524 = vmatprep.mubr.bf16.mxu0 0
        %3525 = vmatmul.mubr.bf16.gmra.mrb[0].mxu0 %v2488
        %v3526 = vpop.f32.mrb[0].mxu0
        %v3527 = vadd.f32 %v3374, %v3526
        %v3528 = vpop.f32.mrb[0].mxu0
        %v3529 = vpop.f32.mrb[0].mxu0
        %v3530 = vadd.f32 %v3377, %v3529
        %v3531 = vpop.f32.mrb[0].mxu0
        %3532 = vdwg.mxu0
        %v3581 = vunpack.c.l.b16 %v2537
        %v3582 = vunpack.c.l.b16 %v2538
        %v3583 = vunpack.c.l.b16 %v2539
        %v3584 = vunpack.c.l.b16 %v2540
        %v3585 = vunpack.c.l.b16 %v2541
        %v3586 = vunpack.c.l.b16 %v2542
        %v3587 = vunpack.c.l.b16 %v2543
        %v3588 = vunpack.c.l.b16 %v2544
        %v3589 = vunpack.c.l.b16 %v2545
        %v3590 = vunpack.c.l.b16 %v2546
        %v3591 = vunpack.c.l.b16 %v2547
        %v3592 = vunpack.c.l.b16 %v2548
        %v3593 = vunpack.c.l.b16 %v2549
        %v3594 = vunpack.c.l.b16 %v2550
        %v3595 = vunpack.c.l.b16 %v2551
        %v3596 = vunpack.c.l.b16 %v2552
        %v3597 = vunpack.c.l.b16 %v2553
        %v3598 = vunpack.c.l.b16 %v2554
        %v3599 = vunpack.c.l.b16 %v2555
        %v3600 = vunpack.c.l.b16 %v2556
        %v3601 = vunpack.c.l.b16 %v2557
        %v3602 = vunpack.c.l.b16 %v2558
        %v3603 = vunpack.c.l.b16 %v2559
        %v3604 = vunpack.c.l.b16 %v2560
        %v3605 = vunpack.c.l.b16 %v2561
        %v3606 = vunpack.c.l.b16 %v2562
        %v3607 = vunpack.c.l.b16 %v2563
        %v3608 = vunpack.c.l.b16 %v2564
        %v3609 = vunpack.c.l.b16 %v2565
        %v3610 = vunpack.c.l.b16 %v2566
        %v3611 = vunpack.c.l.b16 %v2567
        %v3612 = vunpack.c.l.b16 %v2568
        %v3613 = vunpack.c.l.b16 %v2569
        %v3614 = vunpack.c.l.b16 %v2570
        %v3615 = vunpack.c.l.b16 %v2571
        %v3616 = vunpack.c.l.b16 %v2572
        %v3617 = vunpack.c.l.b16 %v2573
        %v3618 = vunpack.c.l.b16 %v2574
        %v3619 = vunpack.c.l.b16 %v2575
        %v3620 = vunpack.c.l.b16 %v2576
        %v3621 = vunpack.c.l.b16 %v2577
        %v3622 = vunpack.c.l.b16 %v2578
        %v3623 = vunpack.c.l.b16 %v2579
        %v3624 = vunpack.c.l.b16 %v2580
        %v3625 = vunpack.c.l.b16 %v2581
        %v3626 = vunpack.c.l.b16 %v2582
        %v3627 = vunpack.c.l.b16 %v2583
        %v3628 = vunpack.c.l.b16 %v2584
        %v3629 = vpack.c.b16 %v3582, %v3581
        %v3630 = vpack.c.b16 %v3584, %v3583
        %v3631 = vpack.c.b16 %v3586, %v3585
        %v3632 = vpack.c.b16 %v3588, %v3587
        %v3633 = vpack.c.b16 %v3590, %v3589
        %v3634 = vpack.c.b16 %v3592, %v3591
        %v3635 = vpack.c.b16 %v3594, %v3593
        %v3636 = vpack.c.b16 %v3596, %v3595
        %v3637 = vpack.c.b16 %v3598, %v3597
        %v3638 = vpack.c.b16 %v3600, %v3599
        %v3639 = vpack.c.b16 %v3602, %v3601
        %v3640 = vpack.c.b16 %v3604, %v3603
        %v3641 = vpack.c.b16 %v3606, %v3605
        %v3642 = vpack.c.b16 %v3608, %v3607
        %v3643 = vpack.c.b16 %v3610, %v3609
        %v3644 = vpack.c.b16 %v3612, %v3611
        %v3645 = vpack.c.b16 %v3614, %v3613
        %v3646 = vpack.c.b16 %v3616, %v3615
        %v3647 = vpack.c.b16 %v3618, %v3617
        %v3648 = vpack.c.b16 %v3620, %v3619
        %v3649 = vpack.c.b16 %v3622, %v3621
        %v3650 = vpack.c.b16 %v3624, %v3623
        %v3651 = vpack.c.b16 %v3626, %v3625
        %v3652 = vpack.c.b16 %v3628, %v3627
        %3677 = vmatprep.subr.bf16.mxu0 0
        %3678 = vmatpush1.bf16.msra.mxu0 %v3629
        %3679 = vmatprep.subr.bf16.mxu0 0
        %3680 = vmatpush1.bf16.msra.mxu0 %v3630
        %3681 = vmatprep.subr.bf16.mxu0 0
        %3682 = vmatpush1.bf16.msra.mxu0 %v3631
        %3683 = vmatprep.subr.bf16.mxu0 0
        %3684 = vmatpush1.bf16.msra.mxu0 %v3632
        %3685 = vmatprep.subr.bf16.mxu0 0
        %3686 = vmatpush1.bf16.msra.mxu0 %v3633
        %3687 = vmatprep.subr.bf16.mxu0 0
        %3688 = vmatpush1.bf16.msra.mxu0 %v3634
        %3689 = vmatprep.subr.bf16.mxu0 0
        %3690 = vmatpush1.bf16.msra.mxu0 %v3635
        %3691 = vmatprep.subr.bf16.mxu0 0
        %3692 = vmatpush1.bf16.msra.mxu0 %v3636
        %3693 = vmatprep.subr.bf16.mxu0 0
        %3694 = vmatpush1.bf16.msra.mxu0 %v3637
        %3695 = vmatprep.subr.bf16.mxu0 0
        %3696 = vmatpush1.bf16.msra.mxu0 %v3638
        %3697 = vmatprep.subr.bf16.mxu0 0
        %3698 = vmatpush1.bf16.msra.mxu0 %v3639
        %3699 = vmatprep.subr.bf16.mxu0 0
        %3700 = vmatpush1.bf16.msra.mxu0 %v3640
        %3701 = vmatprep.subr.bf16.mxu0 0
        %3702 = vmatpush1.bf16.msra.mxu0 %v3641
        %3703 = vmatprep.subr.bf16.mxu0 0
        %3704 = vmatpush1.bf16.msra.mxu0 %v3642
        %3705 = vmatprep.subr.bf16.mxu0 0
        %3706 = vmatpush1.bf16.msra.mxu0 %v3643
        %3707 = vmatprep.subr.bf16.mxu0 0
        %3708 = vmatpush1.bf16.msra.mxu0 %v3644
        %3709 = vmatprep.mubr.bf16.mxu0 %v2457
        %3710 = vmatmul.mubr.bf16.gmra.mrb[0].mxu0 %v2441
        %v3711 = vpop.f32.mrb[0].mxu0
        %v3712 = vadd.f32 0.0, %v3711
        %v3713 = vpop.f32.mrb[0].mxu0
        %v3714 = vpop.f32.mrb[0].mxu0
        %v3715 = vadd.f32 0.0, %v3714
        %v3716 = vpop.f32.mrb[0].mxu0
        %3717 = vmatprep.mubr.bf16.mxu0 %v2458
        %3718 = vmatmul.mubr.bf16.gmra.mrb[0].mxu0 %v2442
        %v3719 = vpop.f32.mrb[0].mxu0
        %v3720 = vadd.f32 %v2965, %v3719
        %v3721 = vpop.f32.mrb[0].mxu0
        %v3722 = vpop.f32.mrb[0].mxu0
        %v3723 = vadd.f32 %v2968, %v3722
        %v3724 = vpop.f32.mrb[0].mxu0
        %3725 = vmatprep.mubr.bf16.mxu0 %v2459
        %3726 = vmatmul.mubr.bf16.gmra.mrb[0].mxu0 %v2443
        %v3727 = vpop.f32.mrb[0].mxu0
        %v3728 = vadd.f32 %v2973, %v3727
        %v3729 = vpop.f32.mrb[0].mxu0
        %v3730 = vpop.f32.mrb[0].mxu0
        %v3731 = vadd.f32 %v2976, %v3730
        %v3732 = vpop.f32.mrb[0].mxu0
        %3733 = vmatprep.mubr.bf16.mxu0 %v2460
        %3734 = vmatmul.mubr.bf16.gmra.mrb[0].mxu0 %v2444
        %v3735 = vpop.f32.mrb[0].mxu0
        %v3736 = vadd.f32 %v2981, %v3735
        %v3737 = vpop.f32.mrb[0].mxu0
        %v3738 = vpop.f32.mrb[0].mxu0
        %v3739 = vadd.f32 %v2984, %v3738
        %v3740 = vpop.f32.mrb[0].mxu0
        %3741 = vmatprep.mubr.bf16.mxu0 %v2461
        %3742 = vmatmul.mubr.bf16.gmra.mrb[0].mxu0 %v2445
        %v3743 = vpop.f32.mrb[0].mxu0
        %v3744 = vadd.f32 %v2989, %v3743
        %v3745 = vpop.f32.mrb[0].mxu0
        %v3746 = vpop.f32.mrb[0].mxu0
        %v3747 = vadd.f32 %v2992, %v3746
        %v3748 = vpop.f32.mrb[0].mxu0
        %3749 = vmatprep.mubr.bf16.mxu0 %v2462
        %3750 = vmatmul.mubr.bf16.gmra.mrb[0].mxu0 %v2446
        %v3751 = vpop.f32.mrb[0].mxu0
        %v3752 = vadd.f32 %v2997, %v3751
        %v3753 = vpop.f32.mrb[0].mxu0
        %v3754 = vpop.f32.mrb[0].mxu0
        %v3755 = vadd.f32 %v3000, %v3754
        %v3756 = vpop.f32.mrb[0].mxu0
        %3757 = vmatprep.mubr.bf16.mxu0 %v2463
        %3758 = vmatmul.mubr.bf16.gmra.mrb[0].mxu0 %v2447
        %v3759 = vpop.f32.mrb[0].mxu0
        %v3760 = vadd.f32 %v3005, %v3759
        %v3761 = vpop.f32.mrb[0].mxu0
        %v3762 = vpop.f32.mrb[0].mxu0
        %v3763 = vadd.f32 %v3008, %v3762
        %v3764 = vpop.f32.mrb[0].mxu0
        %3765 = vmatprep.mubr.bf16.mxu0 %v2464
        %3766 = vmatmul.mubr.bf16.gmra.mrb[0].mxu0 %v2448
        %v3767 = vpop.f32.mrb[0].mxu0
        %v3768 = vadd.f32 %v3013, %v3767
        %v3769 = vpop.f32.mrb[0].mxu0
        %v3770 = vpop.f32.mrb[0].mxu0
        %v3771 = vadd.f32 %v3016, %v3770
        %v3772 = vpop.f32.mrb[0].mxu0
        %3773 = vmatprep.mubr.bf16.mxu0 %v2465
        %3774 = vmatmul.mubr.bf16.gmra.mrb[0].mxu0 %v2449
        %v3775 = vpop.f32.mrb[0].mxu0
        %v3776 = vadd.f32 %v3021, %v3775
        %v3777 = vpop.f32.mrb[0].mxu0
        %v3778 = vpop.f32.mrb[0].mxu0
        %v3779 = vadd.f32 %v3024, %v3778
        %v3780 = vpop.f32.mrb[0].mxu0
        %3781 = vmatprep.mubr.bf16.mxu0 %v2466
        %3782 = vmatmul.mubr.bf16.gmra.mrb[0].mxu0 %v2450
        %v3783 = vpop.f32.mrb[0].mxu0
        %v3784 = vadd.f32 %v3029, %v3783
        %v3785 = vpop.f32.mrb[0].mxu0
        %v3786 = vpop.f32.mrb[0].mxu0
        %v3787 = vadd.f32 %v3032, %v3786
        %v3788 = vpop.f32.mrb[0].mxu0
        %3789 = vmatprep.mubr.bf16.mxu0 %v2467
        %3790 = vmatmul.mubr.bf16.gmra.mrb[0].mxu0 %v2451
        %v3791 = vpop.f32.mrb[0].mxu0
        %v3792 = vadd.f32 %v3037, %v3791
        %v3793 = vpop.f32.mrb[0].mxu0
        %v3794 = vpop.f32.mrb[0].mxu0
        %v3795 = vadd.f32 %v3040, %v3794
        %v3796 = vpop.f32.mrb[0].mxu0
        %3797 = vmatprep.mubr.bf16.mxu0 %v2468
        %3798 = vmatmul.mubr.bf16.gmra.mrb[0].mxu0 %v2452
        %v3799 = vpop.f32.mrb[0].mxu0
        %v3800 = vadd.f32 %v3045, %v3799
        %v3801 = vpop.f32.mrb[0].mxu0
        %v3802 = vpop.f32.mrb[0].mxu0
        %v3803 = vadd.f32 %v3048, %v3802
        %v3804 = vpop.f32.mrb[0].mxu0
        %3805 = vmatprep.mubr.bf16.mxu0 %v2469
        %3806 = vmatmul.mubr.bf16.gmra.mrb[0].mxu0 %v2453
        %v3807 = vpop.f32.mrb[0].mxu0
        %v3808 = vadd.f32 %v3053, %v3807
        %v3809 = vpop.f32.mrb[0].mxu0
        %v3810 = vpop.f32.mrb[0].mxu0
        %v3811 = vadd.f32 %v3056, %v3810
        %v3812 = vpop.f32.mrb[0].mxu0
        %3813 = vmatprep.mubr.bf16.mxu0 %v2470
        %3814 = vmatmul.mubr.bf16.gmra.mrb[0].mxu0 %v2454
        %v3815 = vpop.f32.mrb[0].mxu0
        %v3816 = vadd.f32 %v3061, %v3815
        %v3817 = vpop.f32.mrb[0].mxu0
        %v3818 = vpop.f32.mrb[0].mxu0
        %v3819 = vadd.f32 %v3064, %v3818
        %v3820 = vpop.f32.mrb[0].mxu0
        %3821 = vmatprep.mubr.bf16.mxu0 %v2471
        %3822 = vmatmul.mubr.bf16.gmra.mrb[0].mxu0 %v2455
        %v3823 = vpop.f32.mrb[0].mxu0
        %v3824 = vadd.f32 %v3069, %v3823
        %v3825 = vpop.f32.mrb[0].mxu0
        %v3826 = vpop.f32.mrb[0].mxu0
        %v3827 = vadd.f32 %v3072, %v3826
        %v3828 = vpop.f32.mrb[0].mxu0
        %3829 = vmatprep.mubr.bf16.mxu0 %v2472
        %3830 = vmatmul.mubr.bf16.gmra.mrb[0].mxu0 %v2456
        %v3831 = vpop.f32.mrb[0].mxu0
        %v3832 = vadd.f32 %v3077, %v3831
        %v3833 = vpop.f32.mrb[0].mxu0
        %v3834 = vpop.f32.mrb[0].mxu0
        %v3835 = vadd.f32 %v3080, %v3834
        %v3836 = vpop.f32.mrb[0].mxu0
        %3837 = vdwg.mxu0
        %3838 = vmatprep.subr.bf16.mxu0 0
        %3839 = vmatpush1.bf16.msra.mxu0 %v3645
        %3840 = vmatprep.subr.bf16.mxu0 0
        %3841 = vmatpush1.bf16.msra.mxu0 %v3646
        %3842 = vmatprep.subr.bf16.mxu0 0
        %3843 = vmatpush1.bf16.msra.mxu0 %v3647
        %3844 = vmatprep.subr.bf16.mxu0 0
        %3845 = vmatpush1.bf16.msra.mxu0 %v3648
        %3846 = vmatprep.subr.bf16.mxu0 0
        %3847 = vmatpush1.bf16.msra.mxu0 %v3649
        %3848 = vmatprep.subr.bf16.mxu0 0
        %3849 = vmatpush1.bf16.msra.mxu0 %v3650
        %3850 = vmatprep.subr.bf16.mxu0 0
        %3851 = vmatpush1.bf16.msra.mxu0 %v3651
        %3852 = vmatprep.subr.bf16.mxu0 0
        %3853 = vmatpush1.bf16.msra.mxu0 %v3652
        %3854 = vmatprep.subr.bf16.mxu0 0
        %3855 = vmatpush1.bf16.msra.mxu0 0
        %3856 = vmatprep.subr.bf16.mxu0 0
        %3857 = vmatpush1.bf16.msra.mxu0 0
        %3858 = vmatprep.subr.bf16.mxu0 0
        %3859 = vmatpush1.bf16.msra.mxu0 0
        %3860 = vmatprep.subr.bf16.mxu0 0
        %3861 = vmatpush1.bf16.msra.mxu0 0
        %3862 = vmatprep.subr.bf16.mxu0 0
        %3863 = vmatpush1.bf16.msra.mxu0 0
        %3864 = vmatprep.subr.bf16.mxu0 0
        %3865 = vmatpush1.bf16.msra.mxu0 0
        %3866 = vmatprep.subr.bf16.mxu0 0
        %3867 = vmatpush1.bf16.msra.mxu0 0
        %3868 = vmatprep.subr.bf16.mxu0 0
        %3869 = vmatpush1.bf16.msra.mxu0 0
        %3870 = vmatprep.mubr.bf16.mxu0 0
        %3871 = vmatmul.mubr.bf16.gmra.mrb[0].mxu0 %v2473
        %v3872 = vpop.f32.mrb[0].mxu0
        %v3873 = vadd.f32 %v3712, %v3872
        %v3874 = vpop.f32.mrb[0].mxu0
        %v3875 = vpop.f32.mrb[0].mxu0
        %v3876 = vadd.f32 %v3715, %v3875
        %v3877 = vpop.f32.mrb[0].mxu0
        %3878 = vmatprep.mubr.bf16.mxu0 0
        %3879 = vmatmul.mubr.bf16.gmra.mrb[0].mxu0 %v2474
        %v3880 = vpop.f32.mrb[0].mxu0
        %v3881 = vadd.f32 %v3720, %v3880
        %v3882 = vpop.f32.mrb[0].mxu0
        %v3883 = vpop.f32.mrb[0].mxu0
        %v3884 = vadd.f32 %v3723, %v3883
        %v3885 = vpop.f32.mrb[0].mxu0
        %3886 = vmatprep.mubr.bf16.mxu0 0
        %3887 = vmatmul.mubr.bf16.gmra.mrb[0].mxu0 %v2475
        %v3888 = vpop.f32.mrb[0].mxu0
        %v3889 = vadd.f32 %v3728, %v3888
        %v3890 = vpop.f32.mrb[0].mxu0
        %v3891 = vpop.f32.mrb[0].mxu0
        %v3892 = vadd.f32 %v3731, %v3891
        %v3893 = vpop.f32.mrb[0].mxu0
        %3894 = vmatprep.mubr.bf16.mxu0 0
        %3895 = vmatmul.mubr.bf16.gmra.mrb[0].mxu0 %v2476
        %v3896 = vpop.f32.mrb[0].mxu0
        %v3897 = vadd.f32 %v3736, %v3896
        %v3898 = vpop.f32.mrb[0].mxu0
        %v3899 = vpop.f32.mrb[0].mxu0
        %v3900 = vadd.f32 %v3739, %v3899
        %v3901 = vpop.f32.mrb[0].mxu0
        %3902 = vmatprep.mubr.bf16.mxu0 0
        %3903 = vmatmul.mubr.bf16.gmra.mrb[0].mxu0 %v2477
        %v3904 = vpop.f32.mrb[0].mxu0
        %v3905 = vadd.f32 %v3744, %v3904
        %v3906 = vpop.f32.mrb[0].mxu0
        %v3907 = vpop.f32.mrb[0].mxu0
        %v3908 = vadd.f32 %v3747, %v3907
        %v3909 = vpop.f32.mrb[0].mxu0
        %3910 = vmatprep.mubr.bf16.mxu0 0
        %3911 = vmatmul.mubr.bf16.gmra.mrb[0].mxu0 %v2478
        %v3912 = vpop.f32.mrb[0].mxu0
        %v3913 = vadd.f32 %v3752, %v3912
        %v3914 = vpop.f32.mrb[0].mxu0
        %v3915 = vpop.f32.mrb[0].mxu0
        %v3916 = vadd.f32 %v3755, %v3915
        %v3917 = vpop.f32.mrb[0].mxu0
        %3918 = vmatprep.mubr.bf16.mxu0 0
        %3919 = vmatmul.mubr.bf16.gmra.mrb[0].mxu0 %v2479
        %v3920 = vpop.f32.mrb[0].mxu0
        %v3921 = vadd.f32 %v3760, %v3920
        %v3922 = vpop.f32.mrb[0].mxu0
        %v3923 = vpop.f32.mrb[0].mxu0
        %v3924 = vadd.f32 %v3763, %v3923
        %v3925 = vpop.f32.mrb[0].mxu0
        %3926 = vmatprep.mubr.bf16.mxu0 0
        %3927 = vmatmul.mubr.bf16.gmra.mrb[0].mxu0 %v2480
        %v3928 = vpop.f32.mrb[0].mxu0
        %v3929 = vadd.f32 %v3768, %v3928
        %v3930 = vpop.f32.mrb[0].mxu0
        %v3931 = vpop.f32.mrb[0].mxu0
        %v3932 = vadd.f32 %v3771, %v3931
        %v3933 = vpop.f32.mrb[0].mxu0
        %3934 = vmatprep.mubr.bf16.mxu0 0
        %3935 = vmatmul.mubr.bf16.gmra.mrb[0].mxu0 %v2481
        %v3936 = vpop.f32.mrb[0].mxu0
        %v3937 = vadd.f32 %v3776, %v3936
        %v3938 = vpop.f32.mrb[0].mxu0
        %v3939 = vpop.f32.mrb[0].mxu0
        %v3940 = vadd.f32 %v3779, %v3939
        %v3941 = vpop.f32.mrb[0].mxu0
        %3942 = vmatprep.mubr.bf16.mxu0 0
        %3943 = vmatmul.mubr.bf16.gmra.mrb[0].mxu0 %v2482
        %v3944 = vpop.f32.mrb[0].mxu0
        %v3945 = vadd.f32 %v3784, %v3944
        %v3946 = vpop.f32.mrb[0].mxu0
        %v3947 = vpop.f32.mrb[0].mxu0
        %v3948 = vadd.f32 %v3787, %v3947
        %v3949 = vpop.f32.mrb[0].mxu0
        %3950 = vmatprep.mubr.bf16.mxu0 0
        %3951 = vmatmul.mubr.bf16.gmra.mrb[0].mxu0 %v2483
        %v3952 = vpop.f32.mrb[0].mxu0
        %v3953 = vadd.f32 %v3792, %v3952
        %v3954 = vpop.f32.mrb[0].mxu0
        %v3955 = vpop.f32.mrb[0].mxu0
        %v3956 = vadd.f32 %v3795, %v3955
        %v3957 = vpop.f32.mrb[0].mxu0
        %3958 = vmatprep.mubr.bf16.mxu0 0
        %3959 = vmatmul.mubr.bf16.gmra.mrb[0].mxu0 %v2484
        %v3960 = vpop.f32.mrb[0].mxu0
        %v3961 = vadd.f32 %v3800, %v3960
        %v3962 = vpop.f32.mrb[0].mxu0
        %v3963 = vpop.f32.mrb[0].mxu0
        %v3964 = vadd.f32 %v3803, %v3963
        %v3965 = vpop.f32.mrb[0].mxu0
        %3966 = vmatprep.mubr.bf16.mxu0 0
        %3967 = vmatmul.mubr.bf16.gmra.mrb[0].mxu0 %v2485
        %v3968 = vpop.f32.mrb[0].mxu0
        %v3969 = vadd.f32 %v3808, %v3968
        %v3970 = vpop.f32.mrb[0].mxu0
        %v3971 = vpop.f32.mrb[0].mxu0
        %v3972 = vadd.f32 %v3811, %v3971
        %v3973 = vpop.f32.mrb[0].mxu0
        %3974 = vmatprep.mubr.bf16.mxu0 0
        %3975 = vmatmul.mubr.bf16.gmra.mrb[0].mxu0 %v2486
        %v3976 = vpop.f32.mrb[0].mxu0
        %v3977 = vadd.f32 %v3816, %v3976
        %v3978 = vpop.f32.mrb[0].mxu0
        %v3979 = vpop.f32.mrb[0].mxu0
        %v3980 = vadd.f32 %v3819, %v3979
        %v3981 = vpop.f32.mrb[0].mxu0
        %3982 = vmatprep.mubr.bf16.mxu0 0
        %3983 = vmatmul.mubr.bf16.gmra.mrb[0].mxu0 %v2487
        %v3984 = vpop.f32.mrb[0].mxu0
        %v3985 = vadd.f32 %v3824, %v3984
        %v3986 = vpop.f32.mrb[0].mxu0
        %v3987 = vpop.f32.mrb[0].mxu0
        %v3988 = vadd.f32 %v3827, %v3987
        %v3989 = vpop.f32.mrb[0].mxu0
        %3990 = vmatprep.mubr.bf16.mxu0 0
        %3991 = vmatmul.mubr.bf16.gmra.mrb[0].mxu0 %v2488
        %v3992 = vpop.f32.mrb[0].mxu0
        %v3993 = vadd.f32 %v3832, %v3992
        %v3994 = vpop.f32.mrb[0].mxu0
        %v3995 = vpop.f32.mrb[0].mxu0
        %v3996 = vadd.f32 %v3835, %v3995
        %v3997 = vpop.f32.mrb[0].mxu0
        %3998 = vdwg.mxu0
        %v3999 = vadd.f32 %v3873, %v3415
        %v4000 = vadd.f32 %v3876, %v3418
        %v4001 = vadd.f32 %v3881, %v3423
        %v4002 = vadd.f32 %v3884, %v3426
        %v4003 = vadd.f32 %v3889, %v3431
        %v4004 = vadd.f32 %v3892, %v3434
        %v4005 = vadd.f32 %v3897, %v3439
        %v4006 = vadd.f32 %v3900, %v3442
        %v4007 = vadd.f32 %v3905, %v3447
        %v4008 = vadd.f32 %v3908, %v3450
        %v4009 = vadd.f32 %v3913, %v3455
        %v4010 = vadd.f32 %v3916, %v3458
        %v4011 = vadd.f32 %v3921, %v3463
        %v4012 = vadd.f32 %v3924, %v3466
        %v4013 = vadd.f32 %v3929, %v3471
        %v4014 = vadd.f32 %v3932, %v3474
        %v4015 = vadd.f32 %v3937, %v3479
        %v4016 = vadd.f32 %v3940, %v3482
        %v4017 = vadd.f32 %v3945, %v3487
        %v4018 = vadd.f32 %v3948, %v3490
        %v4019 = vadd.f32 %v3953, %v3495
        %v4020 = vadd.f32 %v3956, %v3498
        %v4021 = vadd.f32 %v3961, %v3503
        %v4022 = vadd.f32 %v3964, %v3506
        %v4023 = vadd.f32 %v3969, %v3511
        %v4024 = vadd.f32 %v3972, %v3514
        %v4025 = vadd.f32 %v3977, %v3519
        %v4026 = vadd.f32 %v3980, %v3522
        %v4027 = vadd.f32 %v3985, %v3527
        %v4028 = vadd.f32 %v3988, %v3530
        %v4029 = vadd.f32 %v3993, 0.0
        %v4030 = vadd.f32 %v3996, 0.0
        %v4031 = vld [vmem:[#allocation10] sm:$0x1]
        %v4033 = vlaneseq
        %v4034 = vshrl.u32 %v4033, 7
        %v4035 = vsub.s32 0, %v4034
        %v4036 = vrot.slane %v4031, %v4035
        %v4038 = vadd.f32 %v3999, %v4036
        %v4039 = vadd.f32 %v4000, %v4036
        %v4040 = vadd.f32 %v4001, %v4036
        %v4041 = vadd.f32 %v4002, %v4036
        %v4042 = vadd.f32 %v4003, %v4036
        %v4043 = vadd.f32 %v4004, %v4036
        %v4044 = vadd.f32 %v4005, %v4036
        %v4045 = vadd.f32 %v4006, %v4036
        %v4046 = vadd.f32 %v4007, %v4036
        %v4047 = vadd.f32 %v4008, %v4036
        %v4048 = vadd.f32 %v4009, %v4036
        %v4049 = vadd.f32 %v4010, %v4036
        %v4050 = vadd.f32 %v4011, %v4036
        %v4051 = vadd.f32 %v4012, %v4036
        %v4052 = vadd.f32 %v4013, %v4036
        %v4053 = vadd.f32 %v4014, %v4036
        %v4054 = vadd.f32 %v4015, %v4036
        %v4055 = vadd.f32 %v4016, %v4036
        %v4056 = vadd.f32 %v4017, %v4036
        %v4057 = vadd.f32 %v4018, %v4036
        %v4058 = vadd.f32 %v4019, %v4036
        %v4059 = vadd.f32 %v4020, %v4036
        %v4060 = vadd.f32 %v4021, %v4036
        %v4061 = vadd.f32 %v4022, %v4036
        %v4062 = vadd.f32 %v4023, %v4036
        %v4063 = vadd.f32 %v4024, %v4036
        %v4064 = vadd.f32 %v4025, %v4036
        %v4065 = vadd.f32 %v4026, %v4036
        %v4066 = vadd.f32 %v4027, %v4036
        %v4067 = vadd.f32 %v4028, %v4036
        %v4068 = vadd.f32 %v4029, %v4036
        %v4069 = vadd.f32 %v4030, %v4036
        %v4070 = vadd.f32 %v4038, %v298
        %v4071 = vadd.f32 %v4039, %v299
        %v4072 = vadd.f32 %v4040, %v300
        %v4073 = vadd.f32 %v4041, %v301
        %v4074 = vadd.f32 %v4042, %v302
        %v4075 = vadd.f32 %v4043, %v303
        %v4076 = vadd.f32 %v4044, %v304
        %v4077 = vadd.f32 %v4045, %v305
        %v4078 = vadd.f32 %v4046, %v306
        %v4079 = vadd.f32 %v4047, %v307
        %v4080 = vadd.f32 %v4048, %v308
        %v4081 = vadd.f32 %v4049, %v309
        %v4082 = vadd.f32 %v4050, %v310
        %v4083 = vadd.f32 %v4051, %v311
        %v4084 = vadd.f32 %v4052, %v312
        %v4085 = vadd.f32 %v4053, %v313
        %v4086 = vadd.f32 %v4054, %v314
        %v4087 = vadd.f32 %v4055, %v315
        %v4088 = vadd.f32 %v4056, %v316
        %v4089 = vadd.f32 %v4057, %v317
        %v4090 = vadd.f32 %v4058, %v318
        %v4091 = vadd.f32 %v4059, %v319
        %v4092 = vadd.f32 %v4060, %v320
        %v4093 = vadd.f32 %v4061, %v321
        %v4094 = vadd.f32 %v4062, %v322
        %v4095 = vadd.f32 %v4063, %v323
        %v4096 = vadd.f32 %v4064, %v324
        %v4097 = vadd.f32 %v4065, %v325
        %v4098 = vadd.f32 %v4066, %v326
        %v4099 = vadd.f32 %v4067, %v327
        %v4100 = vadd.f32 %v4068, %v328
        %v4101 = vadd.f32 %v4069, %v329
        %4102 = vst [vmem:[%s296] sm:$0xff] %v4070
        %4103 = vst [vmem:[%s296 + $0x8] sm:$0xff] %v4071
        %4104 = vst [vmem:[%s296 + $0x10] sm:$0xff] %v4072
        %4105 = vst [vmem:[%s296 + $0x18] sm:$0xff] %v4073
        %4106 = vst [vmem:[%s296 + $0x20] sm:$0xff] %v4074
        %4107 = vst [vmem:[%s296 + $0x28] sm:$0xff] %v4075
        %4108 = vst [vmem:[%s296 + $0x30] sm:$0xff] %v4076
        %4109 = vst [vmem:[%s296 + $0x38] sm:$0xff] %v4077
        %4110 = vst [vmem:[%s296 + $0x40] sm:$0xff] %v4078
        %4111 = vst [vmem:[%s296 + $0x48] sm:$0xff] %v4079
        %4112 = vst [vmem:[%s296 + $0x50] sm:$0xff] %v4080
        %4113 = vst [vmem:[%s296 + $0x58] sm:$0xff] %v4081
        %4114 = vst [vmem:[%s296 + $0x60] sm:$0xff] %v4082
        %4115 = vst [vmem:[%s296 + $0x68] sm:$0xff] %v4083
        %4116 = vst [vmem:[%s296 + $0x70] sm:$0xff] %v4084
        %4117 = vst [vmem:[%s296 + $0x78] sm:$0xff] %v4085
        %4118 = vst [vmem:[%s296 + $0x80] sm:$0xff] %v4086
        %4119 = vst [vmem:[%s296 + $0x88] sm:$0xff] %v4087
        %4120 = vst [vmem:[%s296 + $0x90] sm:$0xff] %v4088
        %4121 = vst [vmem:[%s296 + $0x98] sm:$0xff] %v4089
        %4122 = vst [vmem:[%s296 + $0xa0] sm:$0xff] %v4090
        %4123 = vst [vmem:[%s296 + $0xa8] sm:$0xff] %v4091
        %4124 = vst [vmem:[%s296 + $0xb0] sm:$0xff] %v4092
        %4125 = vst [vmem:[%s296 + $0xb8] sm:$0xff] %v4093
        %4126 = vst [vmem:[%s296 + $0xc0] sm:$0xff] %v4094
        %4127 = vst [vmem:[%s296 + $0xc8] sm:$0xff] %v4095
        %4128 = vst [vmem:[%s296 + $0xd0] sm:$0xff] %v4096
        %4129 = vst [vmem:[%s296 + $0xd8] sm:$0xff] %v4097
        %4130 = vst [vmem:[%s296 + $0xe0] sm:$0xff] %v4098
        %4131 = vst [vmem:[%s296 + $0xe8] sm:$0xff] %v4099
        %4132 = vst [vmem:[%s296 + $0xf0] sm:$0xff] %v4100
        %4133 = vst [vmem:[%s296 + $0xf8] sm:$0xff] %v4101
        %s4134 = sand.u32 %s142, 1
        %s4135 = scalar_lea.sflag [#allocation4], %s4134
        %s4136 = sand.u32 %s142, 1
        %s4137 = smul.addr %s4136, 256
        %s4138 = scalar_lea.vmem [#allocation11], %s4137
        // Predicated region
        $region61: #{tpu_custom_call.1} parent=39 // pred_check
          %p4139 = pneg %p152
        $region62: #{tpu_custom_call.1} parent=39 // pred_check_branch
          %4141 = sbr.rel (%p4139) target = $region64
        $region63: #{tpu_custom_call.1} parent=39 // pred_region
          %s4143 = ssub.s32 4096, 4096
          %4144 = vsyncadd %s4135, %s4143
          %s4145 = smul.addr %s24, 32
          %s4146 = smul.addr %s4145, 128
          %s4147 = scalar_lea.hbm %s5, %s4146
          %s4148 = sshll.u32 %s4138, 4
          %s4149 = int_to_ptr.vmem [resolvable:$true] %s4148
          %4154 = dma.vmem_to_hbm [thread:$0]  %s4149, 4096, %s4147, %s4135, 128, 128, 8
        $region64: #{tpu_custom_call.1} parent=39 // pred_fallthru
          _
      $region40: #{tpu_custom_call.1} parent=5 // pred_fallthru
        _
      %p4155 = scmp.le.s32.totalorder 2, %s19
      // Predicated region
      $region65: #{tpu_custom_call.1} parent=5 // pred_check
        %p4156 = pneg %p4155
      $region66: #{tpu_custom_call.1} parent=5 // pred_check_branch
        %4158 = sbr.rel (%p4156) target = $region68
      $region67: #{tpu_custom_call.1} parent=5 // pred_region
        %s4159 = ssub.s32 %s19, 2
        // Predicated region
        $region69: #{tpu_custom_call.1} parent=67 // pred_check
          %p4160 = pneg %p158
        $region70: #{tpu_custom_call.1} parent=67 // pred_check_branch
          %4162 = sbr.rel (%p4160) target = $region72
        $region71: #{tpu_custom_call.1} parent=67 // pred_region
          %s4163 = sand.u32 %s143, 1
          %s4164 = scalar_lea.sflag [#allocation4], %s4163
          %s4165 = sand.u32 %s143, 1
          %s4166 = smul.addr %s4165, 256
          %s4167 = scalar_lea.vmem [#allocation11], %s4166
          %4168 = dma.done %s4164, 4096
        $region72: #{tpu_custom_call.1} parent=67 // pred_fallthru
          _
      $region68: #{tpu_custom_call.1} parent=5 // pred_fallthru
        _
    $region6: #{tpu_custom_call.1} parent=1 // loop_footer
      %s23 = sadd.s32 1, %s19
    $region7: #{tpu_custom_call.1} parent=1 // loop_footer_branch
      %18 = sbr.rel target = $region3
    $region8: #{tpu_custom_call.1} parent=1 // loop_exit
      _
    %4169 = vsyncpa [#allocation3], 1
    %s4170 = scalar_lea.sflag [#allocation3], 1
    %4171 = vsyncpa %s4170, 1
    %4172 = vsyncpa [#allocation6], 1
    %4173 = vsyncpa [#allocation9], 1
    %4174 = vsyncpa [#allocation4], 1
    %s4175 = scalar_lea.sflag [#allocation4], 1
    %4176 = vsyncpa %s4175, 1

</llo_original>
